<compile_context>
chip_gen: v7x
topology: tpu7x:2x2x1
jax: 0.10.0
libtpu: 0.0.40
codegen_flags: <defaults>
</compile_context>

<pallas_src>
import functools

import jax
import jax.numpy as jnp
import numpy as np
from jax import lax
from jax.experimental import pallas as pl
from jax.experimental.pallas import tpu as pltpu

KSP = 7            # spatial kernel size of CBAM
PAD = KSP // 2     # = 3


def _sigmoid(z):
    # exp -> EUP; approx reciprocal -> EUP; one Newton-Raphson step restores
    # full f32 accuracy.  Clamp keeps exp finite for very negative logits.
    d = 1.0 + jnp.exp(-jnp.maximum(z, -60.0))
    r = pl.reciprocal(d, approx=True)
    return r * (2.0 - d * r)


def _maybe_loop(n, body, init):
    """fori_loop for n > 1 (bounds live ranges); straight-line when n == 1."""
    if n == 1:
        return body(0, init)
    return lax.fori_loop(0, n, body, init, unroll=(n <= 8))


def _row_start(b, hb):
    if isinstance(b, int):                 # single-band / unrolled static case
        return b * hb
    return pl.multiple_of(b * hb, hb)      # keep sublane slices provably aligned


def _zero_pad_hw(t, pad):
    """Zero-pad a (Nb, H, W) value by `pad` on both spatial sides (in registers)."""
    nb, h, w = t.shape
    zr = jnp.zeros((nb, pad, w), t.dtype)
    t = jnp.concatenate([zr, t, zr], axis=1)
    zc = jnp.zeros((nb, h + 2 * pad, pad), t.dtype)
    return jnp.concatenate([zc, t, zc], axis=2)


def cbam_kernel(x_ref, w1_ref, w2_ref, ws_ref, out_ref, ma_ref, sp_ref, *, hb):
    Nb, H, W, C = x_ref.shape
    n_bands = H // hb
    inv_hw = 1.0 / float(H * W)
    inv_c = 1.0 / float(C)

    # ---------- pass 1: global per-channel max / sum (band by band) ----------
    def p1(b, carry):
        cmax, csum = carry
        row = _row_start(b, hb)
        xb = x_ref[:, pl.ds(row, hb), :, :].astype(jnp.float32)     # (Nb,hb,W,C)
        xf = xb.reshape(Nb, hb * W, C)
        return (jnp.maximum(cmax, jnp.max(xf, axis=1)),
                csum + jnp.sum(xf, axis=1))

    cmax, csum = _maybe_loop(
        n_bands, p1,
        (jnp.full((Nb, C), -jnp.inf, jnp.float32),
         jnp.zeros((Nb, C), jnp.float32)))

    # ---------- shared MLP on the stacked (2*Nb, C) pooled matrix ----------
    # NOTE: at small Nb this matmul badly underfills the MXU, but it is a few
    # hundred FLOPs off the critical path; raise batch_block to fill it.
    pooled = jnp.concatenate([cmax, csum * inv_hw], axis=0)         # (2*Nb, C)
    hmid = jnp.maximum(
        jnp.dot(pooled, w1_ref[...], preferred_element_type=jnp.float32), 0.0)
    att = jnp.dot(hmid, w2_ref[...], preferred_element_type=jnp.float32)
    ch_att = _sigmoid(att[:Nb] + att[Nb:])                          # (Nb, C)

    # ---------- pass 2: channel-wise max / mean of x1 = ch_att * x ----------
    # ma_ref is fully rewritten every grid step (no cross-iteration state).
    def p2(b, _):
        row = _row_start(b, hb)
        xb = x_ref[:, pl.ds(row, hb), :, :].astype(jnp.float32)
        x1 = xb * ch_att[:, None, None, :]
        ma_ref[0, :, pl.ds(row, hb), :] = jnp.max(x1, axis=3)
        ma_ref[1, :, pl.ds(row, hb), :] = jnp.sum(x1, axis=3) * inv_c
        return 0

    _maybe_loop(n_bands, p2, 0)

    # ---------- 7x7 spatial conv, entirely on register values ----------
    mxp = _zero_pad_hw(ma_ref[0], PAD)                              # (Nb,H+6,W+6)
    avp = _zero_pad_hw(ma_ref[1], PAD)
    acc = jnp.zeros((Nb, H, W), jnp.float32)
    for dy in range(KSP):                                           # 49x2 static taps
        pm = mxp[:, dy:dy + H, :]          # row band sliced once per dy
        pa = avp[:, dy:dy + H, :]
        for dx in range(KSP):
            w_m = ws_ref[0 * KSP * KSP + dy * KSP + dx]             # SMEM scalar
            w_a = ws_ref[1 * KSP * KSP + dy * KSP + dx]
            acc = acc + w_m * pm[:, :, dx:dx + W] + w_a * pa[:, :, dx:dx + W]
    sp_ref[...] = _sigmoid(acc)                                     # (Nb,H,W)

    # ---------- pass 3: out = x * (1 + sp_att * ch_att) ----------
    def p3(b, _):
        row = _row_start(b, hb)
        xb = x_ref[:, pl.ds(row, hb), :, :].astype(jnp.float32)
        sp = sp_ref[:, pl.ds(row, hb), :]
        scale = 1.0 + sp[:, :, :, None] * ch_att[:, None, None, :]
        out_ref[:, pl.ds(row, hb), :, :] = (xb * scale).astype(out_ref.dtype)
        return 0

    _maybe_loop(n_bands, p3, 0)


def cbam_pallas(x_nhwc, params, *, batch_block=1):
    N, H, W, C = x_nhwc.shape
    Cr = params["w1"].shape[1]
    Nb = max(1, min(batch_block, N))
    assert N % Nb == 0, "batch_block must divide N"

    # Row-band height for the in-kernel chunked passes: 8 keeps the sublane
    # slices of the (Nb,H,W) scratches aligned; otherwise use a single band.
    hb = 8 if H % 8 == 0 else H
    # TODO(synk): large H that is not a multiple of 8 falls back to a single
    # band (whole-image live set); not exercised by typical CBAM shapes.

    kernel = functools.partial(cbam_kernel, hb=hb)

    itemsize = jnp.dtype(x_nhwc.dtype).itemsize
    blk_bytes = Nb * H * W * C * itemsize
    scratch_bytes = 3 * Nb * H * W * 4
    # in + out blocks double-buffered + scratch + slack; capped for v7x 64 MiB.
    vmem_limit = int(min(56 * 2**20,
                         max(16 * 2**20, 4 * blk_bytes + scratch_bytes + (2 << 20))))

    flops = N * H * W * (8 * C + 4 * KSP * KSP) + 8 * N * C * Cr
    bytes_accessed = 2 * N * H * W * C * itemsize + (2 * C * Cr + 2 * KSP * KSP) * 4
    transcendentals = N * (C + H * W)

    grid_spec = pltpu.PrefetchScalarGridSpec(
        num_scalar_prefetch=0,
        grid=(N // Nb,),
        in_specs=[
            pl.BlockSpec((Nb, H, W, C), lambda n: (n, 0, 0, 0)),        # x
            pl.BlockSpec((C, Cr), lambda n: (0, 0)),                    # MLP w1 (Cin, Cr)
            pl.BlockSpec((Cr, C), lambda n: (0, 0)),                    # MLP w2 (Cr, Cout)
            pl.BlockSpec(memory_space=pltpu.MemorySpace.SMEM),          # spatial conv w (98,)
        ],
        out_specs=pl.BlockSpec((Nb, H, W, C), lambda n: (n, 0, 0, 0)),
        scratch_shapes=[
            pltpu.VMEM((2, Nb, H, W), jnp.float32),   # channel max / mean maps
            pltpu.VMEM((Nb, H, W), jnp.float32),      # spatial attention map
        ],
    )
    return pl.pallas_call(
        kernel,
        out_shape=jax.ShapeDtypeStruct((N, H, W, C), x_nhwc.dtype),
        grid_spec=grid_spec,
        compiler_params=pltpu.CompilerParams(
            dimension_semantics=("parallel",),
            vmem_limit_bytes=vmem_limit),
        cost_estimate=pl.CostEstimate(
            flops=flops, transcendentals=transcendentals,
            bytes_accessed=bytes_accessed),
    )(x_nhwc, params["w1"], params["w2"], params["ws"])


# ------------------ pure-JAX reference (PyTorch NCHW semantics) ------------------

def cbam_ref_nchw(x, w1_oihw, w2_oihw, ws_oihw):
    dn = ("NCHW", "OIHW", "NCHW")

    def mlp(t):
        t = lax.conv_general_dilated(t, w1_oihw, (1, 1), "VALID", dimension_numbers=dn)
        t = jax.nn.relu(t)
        return lax.conv_general_dilated(t, w2_oihw, (1, 1), "VALID", dimension_numbers=dn)

    mx = jnp.max(x, axis=(2, 3), keepdims=True)
    av = jnp.mean(x, axis=(2, 3), keepdims=True)
    channel_out = jax.nn.sigmoid(mlp(mx) + mlp(av))
    x1 = channel_out * x
    mo = jnp.max(x1, axis=1, keepdims=True)
    ao = jnp.mean(x1, axis=1, keepdims=True)
    sp = lax.conv_general_dilated(
        jnp.concatenate([mo, ao], axis=1), ws_oihw, (1, 1),
        ((PAD, PAD), (PAD, PAD)), dimension_numbers=dn)
    spatial_out = jax.nn.sigmoid(sp)
    return x + spatial_out * x1


if __name__ == "__main__":
    key = jax.random.PRNGKey(0)
    kx, k1, k2, k3 = jax.random.split(key, 4)

    N, C, H, W = 2, 128, 16, 16          # C=128 -> full lane width, reduction=16 -> Cr=8
    reduction = 16
    Cr = C // reduction

    x_nchw = jax.random.normal(kx, (N, C, H, W), jnp.float32)
    w1_oihw = jax.random.normal(k1, (Cr, C, 1, 1), jnp.float32) / np.sqrt(C)
    w2_oihw = jax.random.normal(k2, (C, Cr, 1, 1), jnp.float32) / np.sqrt(Cr)
    ws_oihw = jax.random.normal(k3, (1, 2, KSP, KSP), jnp.float32) / np.sqrt(2 * KSP * KSP)

    params = dict(
        w1=w1_oihw[:, :, 0, 0].T,            # (Cin=C, Cout=Cr)
        w2=w2_oihw[:, :, 0, 0].T,            # (Cin=Cr, Cout=C)
        ws=ws_oihw[0].reshape(-1),           # (2*7*7,), ordering c*49 + dy*7 + dx
    )

    x_nhwc = jnp.transpose(x_nchw, (0, 2, 3, 1))
    out_nhwc = jax.block_until_ready(cbam_pallas(x_nhwc, params))

    ref_nchw = cbam_ref_nchw(x_nchw, w1_oihw, w2_oihw, ws_oihw)
    ref_nhwc = jnp.transpose(ref_nchw, (0, 2, 3, 1))

    np.testing.assert_allclose(np.asarray(out_nhwc), np.asarray(ref_nhwc),
                               rtol=1e-3, atol=1e-3)
    print("KERNEL_OK")
</pallas_src>

<mosaic_0001>
module attributes {stable_mosaic.version = 11 : i64} {
  func.func @cbam_kernel(%arg0: i32, %arg1: memref<1x16x16x128xf32, #tpu.memory_space<vmem>>, %arg2: memref<128x8xf32, #tpu.memory_space<vmem>>, %arg3: memref<8x128xf32, #tpu.memory_space<vmem>>, %arg4: memref<98xf32, #tpu.memory_space<smem>>, %arg5: memref<1x16x16x128xf32, #tpu.memory_space<vmem>>, %arg6: memref<2x1x16x16xf32, #tpu.memory_space<vmem>>, %arg7: memref<1x16x16xf32, #tpu.memory_space<vmem>>) attributes {dimension_semantics = [#tpu.dimension_semantics<parallel>], iteration_bounds = array<i64: 2>, scalar_prefetch = 0 : i64, scratch_operands = 2 : i64, tpu.core_type = #tpu.core_type<tc>, window_params = [{transform_indices = @transform_0, window_bounds = array<i64: 1, 16, 16, 128>}, {pipeline_mode = #tpu.pipeline_mode<synchronous>, transform_indices = @transform_1, window_bounds = array<i64: 128, 8>}, {pipeline_mode = #tpu.pipeline_mode<synchronous>, transform_indices = @transform_2, window_bounds = array<i64: 8, 128>}, {transform_indices = @transform_3, window_bounds = array<i64: 98>}, {transform_indices = @transform_4, window_bounds = array<i64: 1, 16, 16, 128>}]} {
    %cst = arith.constant 0xFF800000 : f32
    %0 = vector.broadcast %cst : f32 to vector<1x128xf32>
    %cst_0 = arith.constant 0.000000e+00 : f32
    %1 = vector.broadcast %cst_0 : f32 to vector<1x128xf32>
    %c0_i32 = arith.constant 0 : i32
    %c8_i32 = arith.constant 8 : i32
    %2 = arith.muli %c0_i32, %c8_i32 : i32
    %3 = tpu.assume_multiple %2, 8 : i32
    %c0 = arith.constant 0 : index
    %4 = arith.index_cast %3 : i32 to index
    %c0_1 = arith.constant 0 : index
    %c0_2 = arith.constant 0 : index
    %5 = vector.load %arg1[%c0, %4, %c0_1, %c0_2] : memref<1x16x16x128xf32, #tpu.memory_space<vmem>>, vector<1x8x16x128xf32>
    %6 = vector.shape_cast %5 : vector<1x8x16x128xf32> to vector<1x128x128xf32>
    %cst_3 = arith.constant dense<0xFF800000> : vector<1x128xf32>
    %7 = vector.multi_reduction <maximumf>, %6, %cst_3 [1] : vector<1x128x128xf32> to vector<1x128xf32>
    %8 = arith.maximumf %0, %7 : vector<1x128xf32>
    %cst_4 = arith.constant dense<0.000000e+00> : vector<1x128xf32>
    %9 = vector.multi_reduction <add>, %6, %cst_4 [1] : vector<1x128x128xf32> to vector<1x128xf32>
    %10 = arith.addf %1, %9 : vector<1x128xf32>
    %c1_i32 = arith.constant 1 : i32
    %c8_i32_5 = arith.constant 8 : i32
    %11 = arith.muli %c1_i32, %c8_i32_5 : i32
    %12 = tpu.assume_multiple %11, 8 : i32
    %c0_6 = arith.constant 0 : index
    %13 = arith.index_cast %12 : i32 to index
    %c0_7 = arith.constant 0 : index
    %c0_8 = arith.constant 0 : index
    %14 = vector.load %arg1[%c0_6, %13, %c0_7, %c0_8] : memref<1x16x16x128xf32, #tpu.memory_space<vmem>>, vector<1x8x16x128xf32>
    %15 = vector.shape_cast %14 : vector<1x8x16x128xf32> to vector<1x128x128xf32>
    %cst_9 = arith.constant dense<0xFF800000> : vector<1x128xf32>
    %16 = vector.multi_reduction <maximumf>, %15, %cst_9 [1] : vector<1x128x128xf32> to vector<1x128xf32>
    %17 = arith.maximumf %8, %16 : vector<1x128xf32>
    %cst_10 = arith.constant dense<0.000000e+00> : vector<1x128xf32>
    %18 = vector.multi_reduction <add>, %15, %cst_10 [1] : vector<1x128x128xf32> to vector<1x128xf32>
    %19 = arith.addf %10, %18 : vector<1x128xf32>
    %c2_i32 = arith.constant 2 : i32
    %cst_11 = arith.constant 3.906250e-03 : f32
    %20 = vector.broadcast %cst_11 : f32 to vector<1x128xf32>
    %21 = arith.mulf %19, %20 : vector<1x128xf32>
    %22 = tpu.concatenate %17, %21 in 0 : vector<1x128xf32>, vector<1x128xf32> -> vector<2x128xf32>
    %c0_12 = arith.constant 0 : index
    %c0_13 = arith.constant 0 : index
    %23 = vector.load %arg2[%c0_12, %c0_13] : memref<128x8xf32, #tpu.memory_space<vmem>>, vector<128x8xf32>
    %cst_14 = arith.constant dense<0.000000e+00> : vector<2x8xf32>
    %24 = tpu.matmul %22, %23, %cst_14 {dimension_numbers = #tpu.dot_dimension_numbers<[1], [0], [0], [1], [0, 0, 1, 1], [], []>} : vector<2x128xf32>, vector<128x8xf32>, vector<2x8xf32> -> vector<2x8xf32>
    %cst_15 = arith.constant 0.000000e+00 : f32
    %25 = vector.broadcast %cst_15 : f32 to vector<2x8xf32>
    %26 = arith.maximumf %24, %25 : vector<2x8xf32>
    %c0_16 = arith.constant 0 : index
    %c0_17 = arith.constant 0 : index
    %27 = vector.load %arg3[%c0_16, %c0_17] : memref<8x128xf32, #tpu.memory_space<vmem>>, vector<8x128xf32>
    %cst_18 = arith.constant dense<0.000000e+00> : vector<2x128xf32>
    %28 = tpu.matmul %26, %27, %cst_18 {dimension_numbers = #tpu.dot_dimension_numbers<[1], [0], [0], [1], [0, 0, 1, 1], [], []>} : vector<2x8xf32>, vector<8x128xf32>, vector<2x128xf32> -> vector<2x128xf32>
    %29 = vector.extract_strided_slice %28 {offsets = [0, 0], sizes = [1, 128], strides = [1, 1]} : vector<2x128xf32> to vector<1x128xf32>
    %30 = vector.extract_strided_slice %28 {offsets = [1, 0], sizes = [1, 128], strides = [1, 1]} : vector<2x128xf32> to vector<1x128xf32>
    %31 = arith.addf %29, %30 : vector<1x128xf32>
    %cst_19 = arith.constant -6.000000e+01 : f32
    %32 = vector.broadcast %cst_19 : f32 to vector<1x128xf32>
    %33 = arith.maximumf %31, %32 : vector<1x128xf32>
    %cst_20 = arith.constant 0.000000e+00 : f32
    %34 = vector.broadcast %cst_20 : f32 to vector<1x128xf32>
    %35 = arith.subf %34, %33 : vector<1x128xf32>
    %36 = math.exp %35 : vector<1x128xf32>
    %cst_21 = arith.constant 1.000000e+00 : f32
    %37 = vector.broadcast %cst_21 : f32 to vector<1x128xf32>
    %38 = arith.addf %37, %36 : vector<1x128xf32>
    %39 = tpu.reciprocal %38 {approx = true} : vector<1x128xf32> -> vector<1x128xf32>
    %40 = arith.mulf %38, %39 : vector<1x128xf32>
    %cst_22 = arith.constant 2.000000e+00 : f32
    %41 = vector.broadcast %cst_22 : f32 to vector<1x128xf32>
    %42 = arith.subf %41, %40 : vector<1x128xf32>
    %43 = arith.mulf %39, %42 : vector<1x128xf32>
    %c0_i32_23 = arith.constant 0 : i32
    %c8_i32_24 = arith.constant 8 : i32
    %44 = arith.muli %c0_i32_23, %c8_i32_24 : i32
    %45 = tpu.assume_multiple %44, 8 : i32
    %c0_25 = arith.constant 0 : index
    %46 = arith.index_cast %45 : i32 to index
    %c0_26 = arith.constant 0 : index
    %c0_27 = arith.constant 0 : index
    %47 = vector.load %arg1[%c0_25, %46, %c0_26, %c0_27] : memref<1x16x16x128xf32, #tpu.memory_space<vmem>>, vector<1x8x16x128xf32>
    %48 = vector.shape_cast %43 : vector<1x128xf32> to vector<1x1x1x128xf32>
    %49 = vector.broadcast %48 : vector<1x1x1x128xf32> to vector<1x8x16x128xf32>
    %50 = arith.mulf %47, %49 : vector<1x8x16x128xf32>
    %cst_28 = arith.constant dense<0xFF800000> : vector<1x8x16xf32>
    %51 = vector.multi_reduction <maximumf>, %50, %cst_28 [3] : vector<1x8x16x128xf32> to vector<1x8x16xf32>
    %c0_29 = arith.constant 0 : index
    %c0_30 = arith.constant 0 : index
    %52 = arith.index_cast %45 : i32 to index
    %c0_31 = arith.constant 0 : index
    %53 = vector.load %arg6[%c0_29, %c0_30, %52, %c0_31] : memref<2x1x16x16xf32, #tpu.memory_space<vmem>>, vector<1x1x8x16xf32>
    %54 = vector.shape_cast %53 : vector<1x1x8x16xf32> to vector<1x8x16xf32>
    %55 = vector.shape_cast %51 : vector<1x8x16xf32> to vector<1x1x8x16xf32>
    tpu.vector_store %arg6[%c0_29, %c0_30, %52, %c0_31], %55 {strides = array<i32>} : memref<2x1x16x16xf32, #tpu.memory_space<vmem>>, vector<1x1x8x16xf32>,
    %cst_32 = arith.constant dense<0.000000e+00> : vector<1x8x16xf32>
    %56 = vector.multi_reduction <add>, %50, %cst_32 [3] : vector<1x8x16x128xf32> to vector<1x8x16xf32>
    %cst_33 = arith.constant 7.812500e-03 : f32
    %57 = vector.broadcast %cst_33 : f32 to vector<1x8x16xf32>
    %58 = arith.mulf %56, %57 : vector<1x8x16xf32>
    %c1 = arith.constant 1 : index
    %c0_34 = arith.constant 0 : index
    %59 = arith.index_cast %45 : i32 to index
    %c0_35 = arith.constant 0 : index
    %60 = vector.load %arg6[%c1, %c0_34, %59, %c0_35] : memref<2x1x16x16xf32, #tpu.memory_space<vmem>>, vector<1x1x8x16xf32>
    %61 = vector.shape_cast %60 : vector<1x1x8x16xf32> to vector<1x8x16xf32>
    %62 = vector.shape_cast %58 : vector<1x8x16xf32> to vector<1x1x8x16xf32>
    tpu.vector_store %arg6[%c1, %c0_34, %59, %c0_35], %62 {strides = array<i32>} : memref<2x1x16x16xf32, #tpu.memory_space<vmem>>, vector<1x1x8x16xf32>,
    %c1_i32_36 = arith.constant 1 : i32
    %c8_i32_37 = arith.constant 8 : i32
    %63 = arith.muli %c1_i32_36, %c8_i32_37 : i32
    %64 = tpu.assume_multiple %63, 8 : i32
    %c0_38 = arith.constant 0 : index
    %65 = arith.index_cast %64 : i32 to index
    %c0_39 = arith.constant 0 : index
    %c0_40 = arith.constant 0 : index
    %66 = vector.load %arg1[%c0_38, %65, %c0_39, %c0_40] : memref<1x16x16x128xf32, #tpu.memory_space<vmem>>, vector<1x8x16x128xf32>
    %67 = vector.shape_cast %43 : vector<1x128xf32> to vector<1x1x1x128xf32>
    %68 = vector.broadcast %67 : vector<1x1x1x128xf32> to vector<1x8x16x128xf32>
    %69 = arith.mulf %66, %68 : vector<1x8x16x128xf32>
    %cst_41 = arith.constant dense<0xFF800000> : vector<1x8x16xf32>
    %70 = vector.multi_reduction <maximumf>, %69, %cst_41 [3] : vector<1x8x16x128xf32> to vector<1x8x16xf32>
    %c0_42 = arith.constant 0 : index
    %c0_43 = arith.constant 0 : index
    %71 = arith.index_cast %64 : i32 to index
    %c0_44 = arith.constant 0 : index
    %72 = vector.load %arg6[%c0_42, %c0_43, %71, %c0_44] : memref<2x1x16x16xf32, #tpu.memory_space<vmem>>, vector<1x1x8x16xf32>
    %73 = vector.shape_cast %72 : vector<1x1x8x16xf32> to vector<1x8x16xf32>
    %74 = vector.shape_cast %70 : vector<1x8x16xf32> to vector<1x1x8x16xf32>
    tpu.vector_store %arg6[%c0_42, %c0_43, %71, %c0_44], %74 {strides = array<i32>} : memref<2x1x16x16xf32, #tpu.memory_space<vmem>>, vector<1x1x8x16xf32>,
    %cst_45 = arith.constant dense<0.000000e+00> : vector<1x8x16xf32>
    %75 = vector.multi_reduction <add>, %69, %cst_45 [3] : vector<1x8x16x128xf32> to vector<1x8x16xf32>
    %cst_46 = arith.constant 7.812500e-03 : f32
    %76 = vector.broadcast %cst_46 : f32 to vector<1x8x16xf32>
    %77 = arith.mulf %75, %76 : vector<1x8x16xf32>
    %c1_47 = arith.constant 1 : index
    %c0_48 = arith.constant 0 : index
    %78 = arith.index_cast %64 : i32 to index
    %c0_49 = arith.constant 0 : index
    %79 = vector.load %arg6[%c1_47, %c0_48, %78, %c0_49] : memref<2x1x16x16xf32, #tpu.memory_space<vmem>>, vector<1x1x8x16xf32>
    %80 = vector.shape_cast %79 : vector<1x1x8x16xf32> to vector<1x8x16xf32>
    %81 = vector.shape_cast %77 : vector<1x8x16xf32> to vector<1x1x8x16xf32>
    tpu.vector_store %arg6[%c1_47, %c0_48, %78, %c0_49], %81 {strides = array<i32>} : memref<2x1x16x16xf32, #tpu.memory_space<vmem>>, vector<1x1x8x16xf32>,
    %c2_i32_50 = arith.constant 2 : i32
    %c0_51 = arith.constant 0 : index
    %c0_52 = arith.constant 0 : index
    %c0_53 = arith.constant 0 : index
    %c0_54 = arith.constant 0 : index
    %82 = vector.load %arg6[%c0_51, %c0_52, %c0_53, %c0_54] : memref<2x1x16x16xf32, #tpu.memory_space<vmem>>, vector<1x1x16x16xf32>
    %83 = vector.shape_cast %82 : vector<1x1x16x16xf32> to vector<1x16x16xf32>
    %cst_55 = arith.constant 0.000000e+00 : f32
    %84 = vector.broadcast %cst_55 : f32 to vector<1x3x16xf32>
    %85 = tpu.concatenate %84, %83, %84 in 1 : vector<1x3x16xf32>, vector<1x16x16xf32>, vector<1x3x16xf32> -> vector<1x22x16xf32>
    %cst_56 = arith.constant 0.000000e+00 : f32
    %86 = vector.broadcast %cst_56 : f32 to vector<1x22x3xf32>
    %87 = tpu.concatenate %86, %85, %86 in 2 : vector<1x22x3xf32>, vector<1x22x16xf32>, vector<1x22x3xf32> -> vector<1x22x22xf32>
    %c1_57 = arith.constant 1 : index
    %c0_58 = arith.constant 0 : index
    %c0_59 = arith.constant 0 : index
    %c0_60 = arith.constant 0 : index
    %88 = vector.load %arg6[%c1_57, %c0_58, %c0_59, %c0_60] : memref<2x1x16x16xf32, #tpu.memory_space<vmem>>, vector<1x1x16x16xf32>
    %89 = vector.shape_cast %88 : vector<1x1x16x16xf32> to vector<1x16x16xf32>
    %cst_61 = arith.constant 0.000000e+00 : f32
    %90 = vector.broadcast %cst_61 : f32 to vector<1x3x16xf32>
    %91 = tpu.concatenate %90, %89, %90 in 1 : vector<1x3x16xf32>, vector<1x16x16xf32>, vector<1x3x16xf32> -> vector<1x22x16xf32>
    %cst_62 = arith.constant 0.000000e+00 : f32
    %92 = vector.broadcast %cst_62 : f32 to vector<1x22x3xf32>
    %93 = tpu.concatenate %92, %91, %92 in 2 : vector<1x22x3xf32>, vector<1x22x16xf32>, vector<1x22x3xf32> -> vector<1x22x22xf32>
    %cst_63 = arith.constant 0.000000e+00 : f32
    %94 = vector.broadcast %cst_63 : f32 to vector<1x16x16xf32>
    %95 = vector.extract_strided_slice %87 {offsets = [0, 0, 0], sizes = [1, 16, 22], strides = [1, 1, 1]} : vector<1x22x22xf32> to vector<1x16x22xf32>
    %96 = vector.extract_strided_slice %93 {offsets = [0, 0, 0], sizes = [1, 16, 22], strides = [1, 1, 1]} : vector<1x22x22xf32> to vector<1x16x22xf32>
    %c0_64 = arith.constant 0 : index
    %97 = memref.load %arg4[%c0_64] : memref<98xf32, #tpu.memory_space<smem>>
    %c49 = arith.constant 49 : index
    %98 = memref.load %arg4[%c49] : memref<98xf32, #tpu.memory_space<smem>>
    %99 = vector.extract_strided_slice %95 {offsets = [0, 0, 0], sizes = [1, 16, 16], strides = [1, 1, 1]} : vector<1x16x22xf32> to vector<1x16x16xf32>
    %100 = vector.broadcast %97 : f32 to vector<1x16x16xf32>
    %101 = arith.mulf %100, %99 : vector<1x16x16xf32>
    %102 = arith.addf %94, %101 : vector<1x16x16xf32>
    %103 = vector.extract_strided_slice %96 {offsets = [0, 0, 0], sizes = [1, 16, 16], strides = [1, 1, 1]} : vector<1x16x22xf32> to vector<1x16x16xf32>
    %104 = vector.broadcast %98 : f32 to vector<1x16x16xf32>
    %105 = arith.mulf %104, %103 : vector<1x16x16xf32>
    %106 = arith.addf %102, %105 : vector<1x16x16xf32>
    %c1_65 = arith.constant 1 : index
    %107 = memref.load %arg4[%c1_65] : memref<98xf32, #tpu.memory_space<smem>>
    %c50 = arith.constant 50 : index
    %108 = memref.load %arg4[%c50] : memref<98xf32, #tpu.memory_space<smem>>
    %109 = vector.extract_strided_slice %95 {offsets = [0, 0, 1], sizes = [1, 16, 16], strides = [1, 1, 1]} : vector<1x16x22xf32> to vector<1x16x16xf32>
    %110 = vector.broadcast %107 : f32 to vector<1x16x16xf32>
    %111 = arith.mulf %110, %109 : vector<1x16x16xf32>
    %112 = arith.addf %106, %111 : vector<1x16x16xf32>
    %113 = vector.extract_strided_slice %96 {offsets = [0, 0, 1], sizes = [1, 16, 16], strides = [1, 1, 1]} : vector<1x16x22xf32> to vector<1x16x16xf32>
    %114 = vector.broadcast %108 : f32 to vector<1x16x16xf32>
    %115 = arith.mulf %114, %113 : vector<1x16x16xf32>
    %116 = arith.addf %112, %115 : vector<1x16x16xf32>
    %c2 = arith.constant 2 : index
    %117 = memref.load %arg4[%c2] : memref<98xf32, #tpu.memory_space<smem>>
    %c51 = arith.constant 51 : index
    %118 = memref.load %arg4[%c51] : memref<98xf32, #tpu.memory_space<smem>>
    %119 = vector.extract_strided_slice %95 {offsets = [0, 0, 2], sizes = [1, 16, 16], strides = [1, 1, 1]} : vector<1x16x22xf32> to vector<1x16x16xf32>
    %120 = vector.broadcast %117 : f32 to vector<1x16x16xf32>
    %121 = arith.mulf %120, %119 : vector<1x16x16xf32>
    %122 = arith.addf %116, %121 : vector<1x16x16xf32>
    %123 = vector.extract_strided_slice %96 {offsets = [0, 0, 2], sizes = [1, 16, 16], strides = [1, 1, 1]} : vector<1x16x22xf32> to vector<1x16x16xf32>
    %124 = vector.broadcast %118 : f32 to vector<1x16x16xf32>
    %125 = arith.mulf %124, %123 : vector<1x16x16xf32>
    %126 = arith.addf %122, %125 : vector<1x16x16xf32>
    %c3 = arith.constant 3 : index
    %127 = memref.load %arg4[%c3] : memref<98xf32, #tpu.memory_space<smem>>
    %c52 = arith.constant 52 : index
    %128 = memref.load %arg4[%c52] : memref<98xf32, #tpu.memory_space<smem>>
    %129 = vector.extract_strided_slice %95 {offsets = [0, 0, 3], sizes = [1, 16, 16], strides = [1, 1, 1]} : vector<1x16x22xf32> to vector<1x16x16xf32>
    %130 = vector.broadcast %127 : f32 to vector<1x16x16xf32>
    %131 = arith.mulf %130, %129 : vector<1x16x16xf32>
    %132 = arith.addf %126, %131 : vector<1x16x16xf32>
    %133 = vector.extract_strided_slice %96 {offsets = [0, 0, 3], sizes = [1, 16, 16], strides = [1, 1, 1]} : vector<1x16x22xf32> to vector<1x16x16xf32>
    %134 = vector.broadcast %128 : f32 to vector<1x16x16xf32>
    %135 = arith.mulf %134, %133 : vector<1x16x16xf32>
    %136 = arith.addf %132, %135 : vector<1x16x16xf32>
    %c4 = arith.constant 4 : index
    %137 = memref.load %arg4[%c4] : memref<98xf32, #tpu.memory_space<smem>>
    %c53 = arith.constant 53 : index
    %138 = memref.load %arg4[%c53] : memref<98xf32, #tpu.memory_space<smem>>
    %139 = vector.extract_strided_slice %95 {offsets = [0, 0, 4], sizes = [1, 16, 16], strides = [1, 1, 1]} : vector<1x16x22xf32> to vector<1x16x16xf32>
    %140 = vector.broadcast %137 : f32 to vector<1x16x16xf32>
    %141 = arith.mulf %140, %139 : vector<1x16x16xf32>
    %142 = arith.addf %136, %141 : vector<1x16x16xf32>
    %143 = vector.extract_strided_slice %96 {offsets = [0, 0, 4], sizes = [1, 16, 16], strides = [1, 1, 1]} : vector<1x16x22xf32> to vector<1x16x16xf32>
    %144 = vector.broadcast %138 : f32 to vector<1x16x16xf32>
    %145 = arith.mulf %144, %143 : vector<1x16x16xf32>
    %146 = arith.addf %142, %145 : vector<1x16x16xf32>
    %c5 = arith.constant 5 : index
    %147 = memref.load %arg4[%c5] : memref<98xf32, #tpu.memory_space<smem>>
    %c54 = arith.constant 54 : index
    %148 = memref.load %arg4[%c54] : memref<98xf32, #tpu.memory_space<smem>>
    %149 = vector.extract_strided_slice %95 {offsets = [0, 0, 5], sizes = [1, 16, 16], strides = [1, 1, 1]} : vector<1x16x22xf32> to vector<1x16x16xf32>
    %150 = vector.broadcast %147 : f32 to vector<1x16x16xf32>
    %151 = arith.mulf %150, %149 : vector<1x16x16xf32>
    %152 = arith.addf %146, %151 : vector<1x16x16xf32>
    %153 = vector.extract_strided_slice %96 {offsets = [0, 0, 5], sizes = [1, 16, 16], strides = [1, 1, 1]} : vector<1x16x22xf32> to vector<1x16x16xf32>
    %154 = vector.broadcast %148 : f32 to vector<1x16x16xf32>
    %155 = arith.mulf %154, %153 : vector<1x16x16xf32>
    %156 = arith.addf %152, %155 : vector<1x16x16xf32>
    %c6 = arith.constant 6 : index
    %157 = memref.load %arg4[%c6] : memref<98xf32, #tpu.memory_space<smem>>
    %c55 = arith.constant 55 : index
    %158 = memref.load %arg4[%c55] : memref<98xf32, #tpu.memory_space<smem>>
    %159 = vector.extract_strided_slice %95 {offsets = [0, 0, 6], sizes = [1, 16, 16], strides = [1, 1, 1]} : vector<1x16x22xf32> to vector<1x16x16xf32>
    %160 = vector.broadcast %157 : f32 to vector<1x16x16xf32>
    %161 = arith.mulf %160, %159 : vector<1x16x16xf32>
    %162 = arith.addf %156, %161 : vector<1x16x16xf32>
    %163 = vector.extract_strided_slice %96 {offsets = [0, 0, 6], sizes = [1, 16, 16], strides = [1, 1, 1]} : vector<1x16x22xf32> to vector<1x16x16xf32>
    %164 = vector.broadcast %158 : f32 to vector<1x16x16xf32>
    %165 = arith.mulf %164, %163 : vector<1x16x16xf32>
    %166 = arith.addf %162, %165 : vector<1x16x16xf32>
    %167 = vector.extract_strided_slice %87 {offsets = [0, 1, 0], sizes = [1, 16, 22], strides = [1, 1, 1]} : vector<1x22x22xf32> to vector<1x16x22xf32>
    %168 = vector.extract_strided_slice %93 {offsets = [0, 1, 0], sizes = [1, 16, 22], strides = [1, 1, 1]} : vector<1x22x22xf32> to vector<1x16x22xf32>
    %c7 = arith.constant 7 : index
    %169 = memref.load %arg4[%c7] : memref<98xf32, #tpu.memory_space<smem>>
    %c56 = arith.constant 56 : index
    %170 = memref.load %arg4[%c56] : memref<98xf32, #tpu.memory_space<smem>>
    %171 = vector.extract_strided_slice %167 {offsets = [0, 0, 0], sizes = [1, 16, 16], strides = [1, 1, 1]} : vector<1x16x22xf32> to vector<1x16x16xf32>
    %172 = vector.broadcast %169 : f32 to vector<1x16x16xf32>
    %173 = arith.mulf %172, %171 : vector<1x16x16xf32>
    %174 = arith.addf %166, %173 : vector<1x16x16xf32>
    %175 = vector.extract_strided_slice %168 {offsets = [0, 0, 0], sizes = [1, 16, 16], strides = [1, 1, 1]} : vector<1x16x22xf32> to vector<1x16x16xf32>
    %176 = vector.broadcast %170 : f32 to vector<1x16x16xf32>
    %177 = arith.mulf %176, %175 : vector<1x16x16xf32>
    %178 = arith.addf %174, %177 : vector<1x16x16xf32>
    %c8 = arith.constant 8 : index
    %179 = memref.load %arg4[%c8] : memref<98xf32, #tpu.memory_space<smem>>
    %c57 = arith.constant 57 : index
    %180 = memref.load %arg4[%c57] : memref<98xf32, #tpu.memory_space<smem>>
    %181 = vector.extract_strided_slice %167 {offsets = [0, 0, 1], sizes = [1, 16, 16], strides = [1, 1, 1]} : vector<1x16x22xf32> to vector<1x16x16xf32>
    %182 = vector.broadcast %179 : f32 to vector<1x16x16xf32>
    %183 = arith.mulf %182, %181 : vector<1x16x16xf32>
    %184 = arith.addf %178, %183 : vector<1x16x16xf32>
    %185 = vector.extract_strided_slice %168 {offsets = [0, 0, 1], sizes = [1, 16, 16], strides = [1, 1, 1]} : vector<1x16x22xf32> to vector<1x16x16xf32>
    %186 = vector.broadcast %180 : f32 to vector<1x16x16xf32>
    %187 = arith.mulf %186, %185 : vector<1x16x16xf32>
    %188 = arith.addf %184, %187 : vector<1x16x16xf32>
    %c9 = arith.constant 9 : index
    %189 = memref.load %arg4[%c9] : memref<98xf32, #tpu.memory_space<smem>>
    %c58 = arith.constant 58 : index
    %190 = memref.load %arg4[%c58] : memref<98xf32, #tpu.memory_space<smem>>
    %191 = vector.extract_strided_slice %167 {offsets = [0, 0, 2], sizes = [1, 16, 16], strides = [1, 1, 1]} : vector<1x16x22xf32> to vector<1x16x16xf32>
    %192 = vector.broadcast %189 : f32 to vector<1x16x16xf32>
    %193 = arith.mulf %192, %191 : vector<1x16x16xf32>
    %194 = arith.addf %188, %193 : vector<1x16x16xf32>
    %195 = vector.extract_strided_slice %168 {offsets = [0, 0, 2], sizes = [1, 16, 16], strides = [1, 1, 1]} : vector<1x16x22xf32> to vector<1x16x16xf32>
    %196 = vector.broadcast %190 : f32 to vector<1x16x16xf32>
    %197 = arith.mulf %196, %195 : vector<1x16x16xf32>
    %198 = arith.addf %194, %197 : vector<1x16x16xf32>
    %c10 = arith.constant 10 : index
    %199 = memref.load %arg4[%c10] : memref<98xf32, #tpu.memory_space<smem>>
    %c59 = arith.constant 59 : index
    %200 = memref.load %arg4[%c59] : memref<98xf32, #tpu.memory_space<smem>>
    %201 = vector.extract_strided_slice %167 {offsets = [0, 0, 3], sizes = [1, 16, 16], strides = [1, 1, 1]} : vector<1x16x22xf32> to vector<1x16x16xf32>
    %202 = vector.broadcast %199 : f32 to vector<1x16x16xf32>
    %203 = arith.mulf %202, %201 : vector<1x16x16xf32>
    %204 = arith.addf %198, %203 : vector<1x16x16xf32>
    %205 = vector.extract_strided_slice %168 {offsets = [0, 0, 3], sizes = [1, 16, 16], strides = [1, 1, 1]} : vector<1x16x22xf32> to vector<1x16x16xf32>
    %206 = vector.broadcast %200 : f32 to vector<1x16x16xf32>
    %207 = arith.mulf %206, %205 : vector<1x16x16xf32>
    %208 = arith.addf %204, %207 : vector<1x16x16xf32>
    %c11 = arith.constant 11 : index
    %209 = memref.load %arg4[%c11] : memref<98xf32, #tpu.memory_space<smem>>
    %c60 = arith.constant 60 : index
    %210 = memref.load %arg4[%c60] : memref<98xf32, #tpu.memory_space<smem>>
    %211 = vector.extract_strided_slice %167 {offsets = [0, 0, 4], sizes = [1, 16, 16], strides = [1, 1, 1]} : vector<1x16x22xf32> to vector<1x16x16xf32>
    %212 = vector.broadcast %209 : f32 to vector<1x16x16xf32>
    %213 = arith.mulf %212, %211 : vector<1x16x16xf32>
    %214 = arith.addf %208, %213 : vector<1x16x16xf32>
    %215 = vector.extract_strided_slice %168 {offsets = [0, 0, 4], sizes = [1, 16, 16], strides = [1, 1, 1]} : vector<1x16x22xf32> to vector<1x16x16xf32>
    %216 = vector.broadcast %210 : f32 to vector<1x16x16xf32>
    %217 = arith.mulf %216, %215 : vector<1x16x16xf32>
    %218 = arith.addf %214, %217 : vector<1x16x16xf32>
    %c12 = arith.constant 12 : index
    %219 = memref.load %arg4[%c12] : memref<98xf32, #tpu.memory_space<smem>>
    %c61 = arith.constant 61 : index
    %220 = memref.load %arg4[%c61] : memref<98xf32, #tpu.memory_space<smem>>
    %221 = vector.extract_strided_slice %167 {offsets = [0, 0, 5], sizes = [1, 16, 16], strides = [1, 1, 1]} : vector<1x16x22xf32> to vector<1x16x16xf32>
    %222 = vector.broadcast %219 : f32 to vector<1x16x16xf32>
    %223 = arith.mulf %222, %221 : vector<1x16x16xf32>
    %224 = arith.addf %218, %223 : vector<1x16x16xf32>
    %225 = vector.extract_strided_slice %168 {offsets = [0, 0, 5], sizes = [1, 16, 16], strides = [1, 1, 1]} : vector<1x16x22xf32> to vector<1x16x16xf32>
    %226 = vector.broadcast %220 : f32 to vector<1x16x16xf32>
    %227 = arith.mulf %226, %225 : vector<1x16x16xf32>
    %228 = arith.addf %224, %227 : vector<1x16x16xf32>
    %c13 = arith.constant 13 : index
    %229 = memref.load %arg4[%c13] : memref<98xf32, #tpu.memory_space<smem>>
    %c62 = arith.constant 62 : index
    %230 = memref.load %arg4[%c62] : memref<98xf32, #tpu.memory_space<smem>>
    %231 = vector.extract_strided_slice %167 {offsets = [0, 0, 6], sizes = [1, 16, 16], strides = [1, 1, 1]} : vector<1x16x22xf32> to vector<1x16x16xf32>
    %232 = vector.broadcast %229 : f32 to vector<1x16x16xf32>
    %233 = arith.mulf %232, %231 : vector<1x16x16xf32>
    %234 = arith.addf %228, %233 : vector<1x16x16xf32>
    %235 = vector.extract_strided_slice %168 {offsets = [0, 0, 6], sizes = [1, 16, 16], strides = [1, 1, 1]} : vector<1x16x22xf32> to vector<1x16x16xf32>
    %236 = vector.broadcast %230 : f32 to vector<1x16x16xf32>
    %237 = arith.mulf %236, %235 : vector<1x16x16xf32>
    %238 = arith.addf %234, %237 : vector<1x16x16xf32>
    %239 = vector.extract_strided_slice %87 {offsets = [0, 2, 0], sizes = [1, 16, 22], strides = [1, 1, 1]} : vector<1x22x22xf32> to vector<1x16x22xf32>
    %240 = vector.extract_strided_slice %93 {offsets = [0, 2, 0], sizes = [1, 16, 22], strides = [1, 1, 1]} : vector<1x22x22xf32> to vector<1x16x22xf32>
    %c14 = arith.constant 14 : index
    %241 = memref.load %arg4[%c14] : memref<98xf32, #tpu.memory_space<smem>>
    %c63 = arith.constant 63 : index
    %242 = memref.load %arg4[%c63] : memref<98xf32, #tpu.memory_space<smem>>
    %243 = vector.extract_strided_slice %239 {offsets = [0, 0, 0], sizes = [1, 16, 16], strides = [1, 1, 1]} : vector<1x16x22xf32> to vector<1x16x16xf32>
    %244 = vector.broadcast %241 : f32 to vector<1x16x16xf32>
    %245 = arith.mulf %244, %243 : vector<1x16x16xf32>
    %246 = arith.addf %238, %245 : vector<1x16x16xf32>
    %247 = vector.extract_strided_slice %240 {offsets = [0, 0, 0], sizes = [1, 16, 16], strides = [1, 1, 1]} : vector<1x16x22xf32> to vector<1x16x16xf32>
    %248 = vector.broadcast %242 : f32 to vector<1x16x16xf32>
    %249 = arith.mulf %248, %247 : vector<1x16x16xf32>
    %250 = arith.addf %246, %249 : vector<1x16x16xf32>
    %c15 = arith.constant 15 : index
    %251 = memref.load %arg4[%c15] : memref<98xf32, #tpu.memory_space<smem>>
    %c64 = arith.constant 64 : index
    %252 = memref.load %arg4[%c64] : memref<98xf32, #tpu.memory_space<smem>>
    %253 = vector.extract_strided_slice %239 {offsets = [0, 0, 1], sizes = [1, 16, 16], strides = [1, 1, 1]} : vector<1x16x22xf32> to vector<1x16x16xf32>
    %254 = vector.broadcast %251 : f32 to vector<1x16x16xf32>
    %255 = arith.mulf %254, %253 : vector<1x16x16xf32>
    %256 = arith.addf %250, %255 : vector<1x16x16xf32>
    %257 = vector.extract_strided_slice %240 {offsets = [0, 0, 1], sizes = [1, 16, 16], strides = [1, 1, 1]} : vector<1x16x22xf32> to vector<1x16x16xf32>
    %258 = vector.broadcast %252 : f32 to vector<1x16x16xf32>
    %259 = arith.mulf %258, %257 : vector<1x16x16xf32>
    %260 = arith.addf %256, %259 : vector<1x16x16xf32>
    %c16 = arith.constant 16 : index
    %261 = memref.load %arg4[%c16] : memref<98xf32, #tpu.memory_space<smem>>
    %c65 = arith.constant 65 : index
    %262 = memref.load %arg4[%c65] : memref<98xf32, #tpu.memory_space<smem>>
    %263 = vector.extract_strided_slice %239 {offsets = [0, 0, 2], sizes = [1, 16, 16], strides = [1, 1, 1]} : vector<1x16x22xf32> to vector<1x16x16xf32>
    %264 = vector.broadcast %261 : f32 to vector<1x16x16xf32>
    %265 = arith.mulf %264, %263 : vector<1x16x16xf32>
    %266 = arith.addf %260, %265 : vector<1x16x16xf32>
    %267 = vector.extract_strided_slice %240 {offsets = [0, 0, 2], sizes = [1, 16, 16], strides = [1, 1, 1]} : vector<1x16x22xf32> to vector<1x16x16xf32>
    %268 = vector.broadcast %262 : f32 to vector<1x16x16xf32>
    %269 = arith.mulf %268, %267 : vector<1x16x16xf32>
    %270 = arith.addf %266, %269 : vector<1x16x16xf32>
    %c17 = arith.constant 17 : index
    %271 = memref.load %arg4[%c17] : memref<98xf32, #tpu.memory_space<smem>>
    %c66 = arith.constant 66 : index
    %272 = memref.load %arg4[%c66] : memref<98xf32, #tpu.memory_space<smem>>
    %273 = vector.extract_strided_slice %239 {offsets = [0, 0, 3], sizes = [1, 16, 16], strides = [1, 1, 1]} : vector<1x16x22xf32> to vector<1x16x16xf32>
    %274 = vector.broadcast %271 : f32 to vector<1x16x16xf32>
    %275 = arith.mulf %274, %273 : vector<1x16x16xf32>
    %276 = arith.addf %270, %275 : vector<1x16x16xf32>
    %277 = vector.extract_strided_slice %240 {offsets = [0, 0, 3], sizes = [1, 16, 16], strides = [1, 1, 1]} : vector<1x16x22xf32> to vector<1x16x16xf32>
    %278 = vector.broadcast %272 : f32 to vector<1x16x16xf32>
    %279 = arith.mulf %278, %277 : vector<1x16x16xf32>
    %280 = arith.addf %276, %279 : vector<1x16x16xf32>
    %c18 = arith.constant 18 : index
    %281 = memref.load %arg4[%c18] : memref<98xf32, #tpu.memory_space<smem>>
    %c67 = arith.constant 67 : index
    %282 = memref.load %arg4[%c67] : memref<98xf32, #tpu.memory_space<smem>>
    %283 = vector.extract_strided_slice %239 {offsets = [0, 0, 4], sizes = [1, 16, 16], strides = [1, 1, 1]} : vector<1x16x22xf32> to vector<1x16x16xf32>
    %284 = vector.broadcast %281 : f32 to vector<1x16x16xf32>
    %285 = arith.mulf %284, %283 : vector<1x16x16xf32>
    %286 = arith.addf %280, %285 : vector<1x16x16xf32>
    %287 = vector.extract_strided_slice %240 {offsets = [0, 0, 4], sizes = [1, 16, 16], strides = [1, 1, 1]} : vector<1x16x22xf32> to vector<1x16x16xf32>
    %288 = vector.broadcast %282 : f32 to vector<1x16x16xf32>
    %289 = arith.mulf %288, %287 : vector<1x16x16xf32>
    %290 = arith.addf %286, %289 : vector<1x16x16xf32>
    %c19 = arith.constant 19 : index
    %291 = memref.load %arg4[%c19] : memref<98xf32, #tpu.memory_space<smem>>
    %c68 = arith.constant 68 : index
    %292 = memref.load %arg4[%c68] : memref<98xf32, #tpu.memory_space<smem>>
    %293 = vector.extract_strided_slice %239 {offsets = [0, 0, 5], sizes = [1, 16, 16], strides = [1, 1, 1]} : vector<1x16x22xf32> to vector<1x16x16xf32>
    %294 = vector.broadcast %291 : f32 to vector<1x16x16xf32>
    %295 = arith.mulf %294, %293 : vector<1x16x16xf32>
    %296 = arith.addf %290, %295 : vector<1x16x16xf32>
    %297 = vector.extract_strided_slice %240 {offsets = [0, 0, 5], sizes = [1, 16, 16], strides = [1, 1, 1]} : vector<1x16x22xf32> to vector<1x16x16xf32>
    %298 = vector.broadcast %292 : f32 to vector<1x16x16xf32>
    %299 = arith.mulf %298, %297 : vector<1x16x16xf32>
    %300 = arith.addf %296, %299 : vector<1x16x16xf32>
    %c20 = arith.constant 20 : index
    %301 = memref.load %arg4[%c20] : memref<98xf32, #tpu.memory_space<smem>>
    %c69 = arith.constant 69 : index
    %302 = memref.load %arg4[%c69] : memref<98xf32, #tpu.memory_space<smem>>
    %303 = vector.extract_strided_slice %239 {offsets = [0, 0, 6], sizes = [1, 16, 16], strides = [1, 1, 1]} : vector<1x16x22xf32> to vector<1x16x16xf32>
    %304 = vector.broadcast %301 : f32 to vector<1x16x16xf32>
    %305 = arith.mulf %304, %303 : vector<1x16x16xf32>
    %306 = arith.addf %300, %305 : vector<1x16x16xf32>
    %307 = vector.extract_strided_slice %240 {offsets = [0, 0, 6], sizes = [1, 16, 16], strides = [1, 1, 1]} : vector<1x16x22xf32> to vector<1x16x16xf32>
    %308 = vector.broadcast %302 : f32 to vector<1x16x16xf32>
    %309 = arith.mulf %308, %307 : vector<1x16x16xf32>
    %310 = arith.addf %306, %309 : vector<1x16x16xf32>
    %311 = vector.extract_strided_slice %87 {offsets = [0, 3, 0], sizes = [1, 16, 22], strides = [1, 1, 1]} : vector<1x22x22xf32> to vector<1x16x22xf32>
    %312 = vector.extract_strided_slice %93 {offsets = [0, 3, 0], sizes = [1, 16, 22], strides = [1, 1, 1]} : vector<1x22x22xf32> to vector<1x16x22xf32>
    %c21 = arith.constant 21 : index
    %313 = memref.load %arg4[%c21] : memref<98xf32, #tpu.memory_space<smem>>
    %c70 = arith.constant 70 : index
    %314 = memref.load %arg4[%c70] : memref<98xf32, #tpu.memory_space<smem>>
    %315 = vector.extract_strided_slice %311 {offsets = [0, 0, 0], sizes = [1, 16, 16], strides = [1, 1, 1]} : vector<1x16x22xf32> to vector<1x16x16xf32>
    %316 = vector.broadcast %313 : f32 to vector<1x16x16xf32>
    %317 = arith.mulf %316, %315 : vector<1x16x16xf32>
    %318 = arith.addf %310, %317 : vector<1x16x16xf32>
    %319 = vector.extract_strided_slice %312 {offsets = [0, 0, 0], sizes = [1, 16, 16], strides = [1, 1, 1]} : vector<1x16x22xf32> to vector<1x16x16xf32>
    %320 = vector.broadcast %314 : f32 to vector<1x16x16xf32>
    %321 = arith.mulf %320, %319 : vector<1x16x16xf32>
    %322 = arith.addf %318, %321 : vector<1x16x16xf32>
    %c22 = arith.constant 22 : index
    %323 = memref.load %arg4[%c22] : memref<98xf32, #tpu.memory_space<smem>>
    %c71 = arith.constant 71 : index
    %324 = memref.load %arg4[%c71] : memref<98xf32, #tpu.memory_space<smem>>
    %325 = vector.extract_strided_slice %311 {offsets = [0, 0, 1], sizes = [1, 16, 16], strides = [1, 1, 1]} : vector<1x16x22xf32> to vector<1x16x16xf32>
    %326 = vector.broadcast %323 : f32 to vector<1x16x16xf32>
    %327 = arith.mulf %326, %325 : vector<1x16x16xf32>
    %328 = arith.addf %322, %327 : vector<1x16x16xf32>
    %329 = vector.extract_strided_slice %312 {offsets = [0, 0, 1], sizes = [1, 16, 16], strides = [1, 1, 1]} : vector<1x16x22xf32> to vector<1x16x16xf32>
    %330 = vector.broadcast %324 : f32 to vector<1x16x16xf32>
    %331 = arith.mulf %330, %329 : vector<1x16x16xf32>
    %332 = arith.addf %328, %331 : vector<1x16x16xf32>
    %c23 = arith.constant 23 : index
    %333 = memref.load %arg4[%c23] : memref<98xf32, #tpu.memory_space<smem>>
    %c72 = arith.constant 72 : index
    %334 = memref.load %arg4[%c72] : memref<98xf32, #tpu.memory_space<smem>>
    %335 = vector.extract_strided_slice %311 {offsets = [0, 0, 2], sizes = [1, 16, 16], strides = [1, 1, 1]} : vector<1x16x22xf32> to vector<1x16x16xf32>
    %336 = vector.broadcast %333 : f32 to vector<1x16x16xf32>
    %337 = arith.mulf %336, %335 : vector<1x16x16xf32>
    %338 = arith.addf %332, %337 : vector<1x16x16xf32>
    %339 = vector.extract_strided_slice %312 {offsets = [0, 0, 2], sizes = [1, 16, 16], strides = [1, 1, 1]} : vector<1x16x22xf32> to vector<1x16x16xf32>
    %340 = vector.broadcast %334 : f32 to vector<1x16x16xf32>
    %341 = arith.mulf %340, %339 : vector<1x16x16xf32>
    %342 = arith.addf %338, %341 : vector<1x16x16xf32>
    %c24 = arith.constant 24 : index
    %343 = memref.load %arg4[%c24] : memref<98xf32, #tpu.memory_space<smem>>
    %c73 = arith.constant 73 : index
    %344 = memref.load %arg4[%c73] : memref<98xf32, #tpu.memory_space<smem>>
    %345 = vector.extract_strided_slice %311 {offsets = [0, 0, 3], sizes = [1, 16, 16], strides = [1, 1, 1]} : vector<1x16x22xf32> to vector<1x16x16xf32>
    %346 = vector.broadcast %343 : f32 to vector<1x16x16xf32>
    %347 = arith.mulf %346, %345 : vector<1x16x16xf32>
    %348 = arith.addf %342, %347 : vector<1x16x16xf32>
    %349 = vector.extract_strided_slice %312 {offsets = [0, 0, 3], sizes = [1, 16, 16], strides = [1, 1, 1]} : vector<1x16x22xf32> to vector<1x16x16xf32>
    %350 = vector.broadcast %344 : f32 to vector<1x16x16xf32>
    %351 = arith.mulf %350, %349 : vector<1x16x16xf32>
    %352 = arith.addf %348, %351 : vector<1x16x16xf32>
    %c25 = arith.constant 25 : index
    %353 = memref.load %arg4[%c25] : memref<98xf32, #tpu.memory_space<smem>>
    %c74 = arith.constant 74 : index
    %354 = memref.load %arg4[%c74] : memref<98xf32, #tpu.memory_space<smem>>
    %355 = vector.extract_strided_slice %311 {offsets = [0, 0, 4], sizes = [1, 16, 16], strides = [1, 1, 1]} : vector<1x16x22xf32> to vector<1x16x16xf32>
    %356 = vector.broadcast %353 : f32 to vector<1x16x16xf32>
    %357 = arith.mulf %356, %355 : vector<1x16x16xf32>
    %358 = arith.addf %352, %357 : vector<1x16x16xf32>
    %359 = vector.extract_strided_slice %312 {offsets = [0, 0, 4], sizes = [1, 16, 16], strides = [1, 1, 1]} : vector<1x16x22xf32> to vector<1x16x16xf32>
    %360 = vector.broadcast %354 : f32 to vector<1x16x16xf32>
    %361 = arith.mulf %360, %359 : vector<1x16x16xf32>
    %362 = arith.addf %358, %361 : vector<1x16x16xf32>
    %c26 = arith.constant 26 : index
    %363 = memref.load %arg4[%c26] : memref<98xf32, #tpu.memory_space<smem>>
    %c75 = arith.constant 75 : index
    %364 = memref.load %arg4[%c75] : memref<98xf32, #tpu.memory_space<smem>>
    %365 = vector.extract_strided_slice %311 {offsets = [0, 0, 5], sizes = [1, 16, 16], strides = [1, 1, 1]} : vector<1x16x22xf32> to vector<1x16x16xf32>
    %366 = vector.broadcast %363 : f32 to vector<1x16x16xf32>
    %367 = arith.mulf %366, %365 : vector<1x16x16xf32>
    %368 = arith.addf %362, %367 : vector<1x16x16xf32>
    %369 = vector.extract_strided_slice %312 {offsets = [0, 0, 5], sizes = [1, 16, 16], strides = [1, 1, 1]} : vector<1x16x22xf32> to vector<1x16x16xf32>
    %370 = vector.broadcast %364 : f32 to vector<1x16x16xf32>
    %371 = arith.mulf %370, %369 : vector<1x16x16xf32>
    %372 = arith.addf %368, %371 : vector<1x16x16xf32>
    %c27 = arith.constant 27 : index
    %373 = memref.load %arg4[%c27] : memref<98xf32, #tpu.memory_space<smem>>
    %c76 = arith.constant 76 : index
    %374 = memref.load %arg4[%c76] : memref<98xf32, #tpu.memory_space<smem>>
    %375 = vector.extract_strided_slice %311 {offsets = [0, 0, 6], sizes = [1, 16, 16], strides = [1, 1, 1]} : vector<1x16x22xf32> to vector<1x16x16xf32>
    %376 = vector.broadcast %373 : f32 to vector<1x16x16xf32>
    %377 = arith.mulf %376, %375 : vector<1x16x16xf32>
    %378 = arith.addf %372, %377 : vector<1x16x16xf32>
    %379 = vector.extract_strided_slice %312 {offsets = [0, 0, 6], sizes = [1, 16, 16], strides = [1, 1, 1]} : vector<1x16x22xf32> to vector<1x16x16xf32>
    %380 = vector.broadcast %374 : f32 to vector<1x16x16xf32>
    %381 = arith.mulf %380, %379 : vector<1x16x16xf32>
    %382 = arith.addf %378, %381 : vector<1x16x16xf32>
    %383 = vector.extract_strided_slice %87 {offsets = [0, 4, 0], sizes = [1, 16, 22], strides = [1, 1, 1]} : vector<1x22x22xf32> to vector<1x16x22xf32>
    %384 = vector.extract_strided_slice %93 {offsets = [0, 4, 0], sizes = [1, 16, 22], strides = [1, 1, 1]} : vector<1x22x22xf32> to vector<1x16x22xf32>
    %c28 = arith.constant 28 : index
    %385 = memref.load %arg4[%c28] : memref<98xf32, #tpu.memory_space<smem>>
    %c77 = arith.constant 77 : index
    %386 = memref.load %arg4[%c77] : memref<98xf32, #tpu.memory_space<smem>>
    %387 = vector.extract_strided_slice %383 {offsets = [0, 0, 0], sizes = [1, 16, 16], strides = [1, 1, 1]} : vector<1x16x22xf32> to vector<1x16x16xf32>
    %388 = vector.broadcast %385 : f32 to vector<1x16x16xf32>
    %389 = arith.mulf %388, %387 : vector<1x16x16xf32>
    %390 = arith.addf %382, %389 : vector<1x16x16xf32>
    %391 = vector.extract_strided_slice %384 {offsets = [0, 0, 0], sizes = [1, 16, 16], strides = [1, 1, 1]} : vector<1x16x22xf32> to vector<1x16x16xf32>
    %392 = vector.broadcast %386 : f32 to vector<1x16x16xf32>
    %393 = arith.mulf %392, %391 : vector<1x16x16xf32>
    %394 = arith.addf %390, %393 : vector<1x16x16xf32>
    %c29 = arith.constant 29 : index
    %395 = memref.load %arg4[%c29] : memref<98xf32, #tpu.memory_space<smem>>
    %c78 = arith.constant 78 : index
    %396 = memref.load %arg4[%c78] : memref<98xf32, #tpu.memory_space<smem>>
    %397 = vector.extract_strided_slice %383 {offsets = [0, 0, 1], sizes = [1, 16, 16], strides = [1, 1, 1]} : vector<1x16x22xf32> to vector<1x16x16xf32>
    %398 = vector.broadcast %395 : f32 to vector<1x16x16xf32>
    %399 = arith.mulf %398, %397 : vector<1x16x16xf32>
    %400 = arith.addf %394, %399 : vector<1x16x16xf32>
    %401 = vector.extract_strided_slice %384 {offsets = [0, 0, 1], sizes = [1, 16, 16], strides = [1, 1, 1]} : vector<1x16x22xf32> to vector<1x16x16xf32>
    %402 = vector.broadcast %396 : f32 to vector<1x16x16xf32>
    %403 = arith.mulf %402, %401 : vector<1x16x16xf32>
    %404 = arith.addf %400, %403 : vector<1x16x16xf32>
    %c30 = arith.constant 30 : index
    %405 = memref.load %arg4[%c30] : memref<98xf32, #tpu.memory_space<smem>>
    %c79 = arith.constant 79 : index
    %406 = memref.load %arg4[%c79] : memref<98xf32, #tpu.memory_space<smem>>
    %407 = vector.extract_strided_slice %383 {offsets = [0, 0, 2], sizes = [1, 16, 16], strides = [1, 1, 1]} : vector<1x16x22xf32> to vector<1x16x16xf32>
    %408 = vector.broadcast %405 : f32 to vector<1x16x16xf32>
    %409 = arith.mulf %408, %407 : vector<1x16x16xf32>
    %410 = arith.addf %404, %409 : vector<1x16x16xf32>
    %411 = vector.extract_strided_slice %384 {offsets = [0, 0, 2], sizes = [1, 16, 16], strides = [1, 1, 1]} : vector<1x16x22xf32> to vector<1x16x16xf32>
    %412 = vector.broadcast %406 : f32 to vector<1x16x16xf32>
    %413 = arith.mulf %412, %411 : vector<1x16x16xf32>
    %414 = arith.addf %410, %413 : vector<1x16x16xf32>
    %c31 = arith.constant 31 : index
    %415 = memref.load %arg4[%c31] : memref<98xf32, #tpu.memory_space<smem>>
    %c80 = arith.constant 80 : index
    %416 = memref.load %arg4[%c80] : memref<98xf32, #tpu.memory_space<smem>>
    %417 = vector.extract_strided_slice %383 {offsets = [0, 0, 3], sizes = [1, 16, 16], strides = [1, 1, 1]} : vector<1x16x22xf32> to vector<1x16x16xf32>
    %418 = vector.broadcast %415 : f32 to vector<1x16x16xf32>
    %419 = arith.mulf %418, %417 : vector<1x16x16xf32>
    %420 = arith.addf %414, %419 : vector<1x16x16xf32>
    %421 = vector.extract_strided_slice %384 {offsets = [0, 0, 3], sizes = [1, 16, 16], strides = [1, 1, 1]} : vector<1x16x22xf32> to vector<1x16x16xf32>
    %422 = vector.broadcast %416 : f32 to vector<1x16x16xf32>
    %423 = arith.mulf %422, %421 : vector<1x16x16xf32>
    %424 = arith.addf %420, %423 : vector<1x16x16xf32>
    %c32 = arith.constant 32 : index
    %425 = memref.load %arg4[%c32] : memref<98xf32, #tpu.memory_space<smem>>
    %c81 = arith.constant 81 : index
    %426 = memref.load %arg4[%c81] : memref<98xf32, #tpu.memory_space<smem>>
    %427 = vector.extract_strided_slice %383 {offsets = [0, 0, 4], sizes = [1, 16, 16], strides = [1, 1, 1]} : vector<1x16x22xf32> to vector<1x16x16xf32>
    %428 = vector.broadcast %425 : f32 to vector<1x16x16xf32>
    %429 = arith.mulf %428, %427 : vector<1x16x16xf32>
    %430 = arith.addf %424, %429 : vector<1x16x16xf32>
    %431 = vector.extract_strided_slice %384 {offsets = [0, 0, 4], sizes = [1, 16, 16], strides = [1, 1, 1]} : vector<1x16x22xf32> to vector<1x16x16xf32>
    %432 = vector.broadcast %426 : f32 to vector<1x16x16xf32>
    %433 = arith.mulf %432, %431 : vector<1x16x16xf32>
    %434 = arith.addf %430, %433 : vector<1x16x16xf32>
    %c33 = arith.constant 33 : index
    %435 = memref.load %arg4[%c33] : memref<98xf32, #tpu.memory_space<smem>>
    %c82 = arith.constant 82 : index
    %436 = memref.load %arg4[%c82] : memref<98xf32, #tpu.memory_space<smem>>
    %437 = vector.extract_strided_slice %383 {offsets = [0, 0, 5], sizes = [1, 16, 16], strides = [1, 1, 1]} : vector<1x16x22xf32> to vector<1x16x16xf32>
    %438 = vector.broadcast %435 : f32 to vector<1x16x16xf32>
    %439 = arith.mulf %438, %437 : vector<1x16x16xf32>
    %440 = arith.addf %434, %439 : vector<1x16x16xf32>
    %441 = vector.extract_strided_slice %384 {offsets = [0, 0, 5], sizes = [1, 16, 16], strides = [1, 1, 1]} : vector<1x16x22xf32> to vector<1x16x16xf32>
    %442 = vector.broadcast %436 : f32 to vector<1x16x16xf32>
    %443 = arith.mulf %442, %441 : vector<1x16x16xf32>
    %444 = arith.addf %440, %443 : vector<1x16x16xf32>
    %c34 = arith.constant 34 : index
    %445 = memref.load %arg4[%c34] : memref<98xf32, #tpu.memory_space<smem>>
    %c83 = arith.constant 83 : index
    %446 = memref.load %arg4[%c83] : memref<98xf32, #tpu.memory_space<smem>>
    %447 = vector.extract_strided_slice %383 {offsets = [0, 0, 6], sizes = [1, 16, 16], strides = [1, 1, 1]} : vector<1x16x22xf32> to vector<1x16x16xf32>
    %448 = vector.broadcast %445 : f32 to vector<1x16x16xf32>
    %449 = arith.mulf %448, %447 : vector<1x16x16xf32>
    %450 = arith.addf %444, %449 : vector<1x16x16xf32>
    %451 = vector.extract_strided_slice %384 {offsets = [0, 0, 6], sizes = [1, 16, 16], strides = [1, 1, 1]} : vector<1x16x22xf32> to vector<1x16x16xf32>
    %452 = vector.broadcast %446 : f32 to vector<1x16x16xf32>
    %453 = arith.mulf %452, %451 : vector<1x16x16xf32>
    %454 = arith.addf %450, %453 : vector<1x16x16xf32>
    %455 = vector.extract_strided_slice %87 {offsets = [0, 5, 0], sizes = [1, 16, 22], strides = [1, 1, 1]} : vector<1x22x22xf32> to vector<1x16x22xf32>
    %456 = vector.extract_strided_slice %93 {offsets = [0, 5, 0], sizes = [1, 16, 22], strides = [1, 1, 1]} : vector<1x22x22xf32> to vector<1x16x22xf32>
    %c35 = arith.constant 35 : index
    %457 = memref.load %arg4[%c35] : memref<98xf32, #tpu.memory_space<smem>>
    %c84 = arith.constant 84 : index
    %458 = memref.load %arg4[%c84] : memref<98xf32, #tpu.memory_space<smem>>
    %459 = vector.extract_strided_slice %455 {offsets = [0, 0, 0], sizes = [1, 16, 16], strides = [1, 1, 1]} : vector<1x16x22xf32> to vector<1x16x16xf32>
    %460 = vector.broadcast %457 : f32 to vector<1x16x16xf32>
    %461 = arith.mulf %460, %459 : vector<1x16x16xf32>
    %462 = arith.addf %454, %461 : vector<1x16x16xf32>
    %463 = vector.extract_strided_slice %456 {offsets = [0, 0, 0], sizes = [1, 16, 16], strides = [1, 1, 1]} : vector<1x16x22xf32> to vector<1x16x16xf32>
    %464 = vector.broadcast %458 : f32 to vector<1x16x16xf32>
    %465 = arith.mulf %464, %463 : vector<1x16x16xf32>
    %466 = arith.addf %462, %465 : vector<1x16x16xf32>
    %c36 = arith.constant 36 : index
    %467 = memref.load %arg4[%c36] : memref<98xf32, #tpu.memory_space<smem>>
    %c85 = arith.constant 85 : index
    %468 = memref.load %arg4[%c85] : memref<98xf32, #tpu.memory_space<smem>>
    %469 = vector.extract_strided_slice %455 {offsets = [0, 0, 1], sizes = [1, 16, 16], strides = [1, 1, 1]} : vector<1x16x22xf32> to vector<1x16x16xf32>
    %470 = vector.broadcast %467 : f32 to vector<1x16x16xf32>
    %471 = arith.mulf %470, %469 : vector<1x16x16xf32>
    %472 = arith.addf %466, %471 : vector<1x16x16xf32>
    %473 = vector.extract_strided_slice %456 {offsets = [0, 0, 1], sizes = [1, 16, 16], strides = [1, 1, 1]} : vector<1x16x22xf32> to vector<1x16x16xf32>
    %474 = vector.broadcast %468 : f32 to vector<1x16x16xf32>
    %475 = arith.mulf %474, %473 : vector<1x16x16xf32>
    %476 = arith.addf %472, %475 : vector<1x16x16xf32>
    %c37 = arith.constant 37 : index
    %477 = memref.load %arg4[%c37] : memref<98xf32, #tpu.memory_space<smem>>
    %c86 = arith.constant 86 : index
    %478 = memref.load %arg4[%c86] : memref<98xf32, #tpu.memory_space<smem>>
    %479 = vector.extract_strided_slice %455 {offsets = [0, 0, 2], sizes = [1, 16, 16], strides = [1, 1, 1]} : vector<1x16x22xf32> to vector<1x16x16xf32>
    %480 = vector.broadcast %477 : f32 to vector<1x16x16xf32>
    %481 = arith.mulf %480, %479 : vector<1x16x16xf32>
    %482 = arith.addf %476, %481 : vector<1x16x16xf32>
    %483 = vector.extract_strided_slice %456 {offsets = [0, 0, 2], sizes = [1, 16, 16], strides = [1, 1, 1]} : vector<1x16x22xf32> to vector<1x16x16xf32>
    %484 = vector.broadcast %478 : f32 to vector<1x16x16xf32>
    %485 = arith.mulf %484, %483 : vector<1x16x16xf32>
    %486 = arith.addf %482, %485 : vector<1x16x16xf32>
    %c38 = arith.constant 38 : index
    %487 = memref.load %arg4[%c38] : memref<98xf32, #tpu.memory_space<smem>>
    %c87 = arith.constant 87 : index
    %488 = memref.load %arg4[%c87] : memref<98xf32, #tpu.memory_space<smem>>
    %489 = vector.extract_strided_slice %455 {offsets = [0, 0, 3], sizes = [1, 16, 16], strides = [1, 1, 1]} : vector<1x16x22xf32> to vector<1x16x16xf32>
    %490 = vector.broadcast %487 : f32 to vector<1x16x16xf32>
    %491 = arith.mulf %490, %489 : vector<1x16x16xf32>
    %492 = arith.addf %486, %491 : vector<1x16x16xf32>
    %493 = vector.extract_strided_slice %456 {offsets = [0, 0, 3], sizes = [1, 16, 16], strides = [1, 1, 1]} : vector<1x16x22xf32> to vector<1x16x16xf32>
    %494 = vector.broadcast %488 : f32 to vector<1x16x16xf32>
    %495 = arith.mulf %494, %493 : vector<1x16x16xf32>
    %496 = arith.addf %492, %495 : vector<1x16x16xf32>
    %c39 = arith.constant 39 : index
    %497 = memref.load %arg4[%c39] : memref<98xf32, #tpu.memory_space<smem>>
    %c88 = arith.constant 88 : index
    %498 = memref.load %arg4[%c88] : memref<98xf32, #tpu.memory_space<smem>>
    %499 = vector.extract_strided_slice %455 {offsets = [0, 0, 4], sizes = [1, 16, 16], strides = [1, 1, 1]} : vector<1x16x22xf32> to vector<1x16x16xf32>
    %500 = vector.broadcast %497 : f32 to vector<1x16x16xf32>
    %501 = arith.mulf %500, %499 : vector<1x16x16xf32>
    %502 = arith.addf %496, %501 : vector<1x16x16xf32>
    %503 = vector.extract_strided_slice %456 {offsets = [0, 0, 4], sizes = [1, 16, 16], strides = [1, 1, 1]} : vector<1x16x22xf32> to vector<1x16x16xf32>
    %504 = vector.broadcast %498 : f32 to vector<1x16x16xf32>
    %505 = arith.mulf %504, %503 : vector<1x16x16xf32>
    %506 = arith.addf %502, %505 : vector<1x16x16xf32>
    %c40 = arith.constant 40 : index
    %507 = memref.load %arg4[%c40] : memref<98xf32, #tpu.memory_space<smem>>
    %c89 = arith.constant 89 : index
    %508 = memref.load %arg4[%c89] : memref<98xf32, #tpu.memory_space<smem>>
    %509 = vector.extract_strided_slice %455 {offsets = [0, 0, 5], sizes = [1, 16, 16], strides = [1, 1, 1]} : vector<1x16x22xf32> to vector<1x16x16xf32>
    %510 = vector.broadcast %507 : f32 to vector<1x16x16xf32>
    %511 = arith.mulf %510, %509 : vector<1x16x16xf32>
    %512 = arith.addf %506, %511 : vector<1x16x16xf32>
    %513 = vector.extract_strided_slice %456 {offsets = [0, 0, 5], sizes = [1, 16, 16], strides = [1, 1, 1]} : vector<1x16x22xf32> to vector<1x16x16xf32>
    %514 = vector.broadcast %508 : f32 to vector<1x16x16xf32>
    %515 = arith.mulf %514, %513 : vector<1x16x16xf32>
    %516 = arith.addf %512, %515 : vector<1x16x16xf32>
    %c41 = arith.constant 41 : index
    %517 = memref.load %arg4[%c41] : memref<98xf32, #tpu.memory_space<smem>>
    %c90 = arith.constant 90 : index
    %518 = memref.load %arg4[%c90] : memref<98xf32, #tpu.memory_space<smem>>
    %519 = vector.extract_strided_slice %455 {offsets = [0, 0, 6], sizes = [1, 16, 16], strides = [1, 1, 1]} : vector<1x16x22xf32> to vector<1x16x16xf32>
    %520 = vector.broadcast %517 : f32 to vector<1x16x16xf32>
    %521 = arith.mulf %520, %519 : vector<1x16x16xf32>
    %522 = arith.addf %516, %521 : vector<1x16x16xf32>
    %523 = vector.extract_strided_slice %456 {offsets = [0, 0, 6], sizes = [1, 16, 16], strides = [1, 1, 1]} : vector<1x16x22xf32> to vector<1x16x16xf32>
    %524 = vector.broadcast %518 : f32 to vector<1x16x16xf32>
    %525 = arith.mulf %524, %523 : vector<1x16x16xf32>
    %526 = arith.addf %522, %525 : vector<1x16x16xf32>
    %527 = vector.extract_strided_slice %87 {offsets = [0, 6, 0], sizes = [1, 16, 22], strides = [1, 1, 1]} : vector<1x22x22xf32> to vector<1x16x22xf32>
    %528 = vector.extract_strided_slice %93 {offsets = [0, 6, 0], sizes = [1, 16, 22], strides = [1, 1, 1]} : vector<1x22x22xf32> to vector<1x16x22xf32>
    %c42 = arith.constant 42 : index
    %529 = memref.load %arg4[%c42] : memref<98xf32, #tpu.memory_space<smem>>
    %c91 = arith.constant 91 : index
    %530 = memref.load %arg4[%c91] : memref<98xf32, #tpu.memory_space<smem>>
    %531 = vector.extract_strided_slice %527 {offsets = [0, 0, 0], sizes = [1, 16, 16], strides = [1, 1, 1]} : vector<1x16x22xf32> to vector<1x16x16xf32>
    %532 = vector.broadcast %529 : f32 to vector<1x16x16xf32>
    %533 = arith.mulf %532, %531 : vector<1x16x16xf32>
    %534 = arith.addf %526, %533 : vector<1x16x16xf32>
    %535 = vector.extract_strided_slice %528 {offsets = [0, 0, 0], sizes = [1, 16, 16], strides = [1, 1, 1]} : vector<1x16x22xf32> to vector<1x16x16xf32>
    %536 = vector.broadcast %530 : f32 to vector<1x16x16xf32>
    %537 = arith.mulf %536, %535 : vector<1x16x16xf32>
    %538 = arith.addf %534, %537 : vector<1x16x16xf32>
    %c43 = arith.constant 43 : index
    %539 = memref.load %arg4[%c43] : memref<98xf32, #tpu.memory_space<smem>>
    %c92 = arith.constant 92 : index
    %540 = memref.load %arg4[%c92] : memref<98xf32, #tpu.memory_space<smem>>
    %541 = vector.extract_strided_slice %527 {offsets = [0, 0, 1], sizes = [1, 16, 16], strides = [1, 1, 1]} : vector<1x16x22xf32> to vector<1x16x16xf32>
    %542 = vector.broadcast %539 : f32 to vector<1x16x16xf32>
    %543 = arith.mulf %542, %541 : vector<1x16x16xf32>
    %544 = arith.addf %538, %543 : vector<1x16x16xf32>
    %545 = vector.extract_strided_slice %528 {offsets = [0, 0, 1], sizes = [1, 16, 16], strides = [1, 1, 1]} : vector<1x16x22xf32> to vector<1x16x16xf32>
    %546 = vector.broadcast %540 : f32 to vector<1x16x16xf32>
    %547 = arith.mulf %546, %545 : vector<1x16x16xf32>
    %548 = arith.addf %544, %547 : vector<1x16x16xf32>
    %c44 = arith.constant 44 : index
    %549 = memref.load %arg4[%c44] : memref<98xf32, #tpu.memory_space<smem>>
    %c93 = arith.constant 93 : index
    %550 = memref.load %arg4[%c93] : memref<98xf32, #tpu.memory_space<smem>>
    %551 = vector.extract_strided_slice %527 {offsets = [0, 0, 2], sizes = [1, 16, 16], strides = [1, 1, 1]} : vector<1x16x22xf32> to vector<1x16x16xf32>
    %552 = vector.broadcast %549 : f32 to vector<1x16x16xf32>
    %553 = arith.mulf %552, %551 : vector<1x16x16xf32>
    %554 = arith.addf %548, %553 : vector<1x16x16xf32>
    %555 = vector.extract_strided_slice %528 {offsets = [0, 0, 2], sizes = [1, 16, 16], strides = [1, 1, 1]} : vector<1x16x22xf32> to vector<1x16x16xf32>
    %556 = vector.broadcast %550 : f32 to vector<1x16x16xf32>
    %557 = arith.mulf %556, %555 : vector<1x16x16xf32>
    %558 = arith.addf %554, %557 : vector<1x16x16xf32>
    %c45 = arith.constant 45 : index
    %559 = memref.load %arg4[%c45] : memref<98xf32, #tpu.memory_space<smem>>
    %c94 = arith.constant 94 : index
    %560 = memref.load %arg4[%c94] : memref<98xf32, #tpu.memory_space<smem>>
    %561 = vector.extract_strided_slice %527 {offsets = [0, 0, 3], sizes = [1, 16, 16], strides = [1, 1, 1]} : vector<1x16x22xf32> to vector<1x16x16xf32>
    %562 = vector.broadcast %559 : f32 to vector<1x16x16xf32>
    %563 = arith.mulf %562, %561 : vector<1x16x16xf32>
    %564 = arith.addf %558, %563 : vector<1x16x16xf32>
    %565 = vector.extract_strided_slice %528 {offsets = [0, 0, 3], sizes = [1, 16, 16], strides = [1, 1, 1]} : vector<1x16x22xf32> to vector<1x16x16xf32>
    %566 = vector.broadcast %560 : f32 to vector<1x16x16xf32>
    %567 = arith.mulf %566, %565 : vector<1x16x16xf32>
    %568 = arith.addf %564, %567 : vector<1x16x16xf32>
    %c46 = arith.constant 46 : index
    %569 = memref.load %arg4[%c46] : memref<98xf32, #tpu.memory_space<smem>>
    %c95 = arith.constant 95 : index
    %570 = memref.load %arg4[%c95] : memref<98xf32, #tpu.memory_space<smem>>
    %571 = vector.extract_strided_slice %527 {offsets = [0, 0, 4], sizes = [1, 16, 16], strides = [1, 1, 1]} : vector<1x16x22xf32> to vector<1x16x16xf32>
    %572 = vector.broadcast %569 : f32 to vector<1x16x16xf32>
    %573 = arith.mulf %572, %571 : vector<1x16x16xf32>
    %574 = arith.addf %568, %573 : vector<1x16x16xf32>
    %575 = vector.extract_strided_slice %528 {offsets = [0, 0, 4], sizes = [1, 16, 16], strides = [1, 1, 1]} : vector<1x16x22xf32> to vector<1x16x16xf32>
    %576 = vector.broadcast %570 : f32 to vector<1x16x16xf32>
    %577 = arith.mulf %576, %575 : vector<1x16x16xf32>
    %578 = arith.addf %574, %577 : vector<1x16x16xf32>
    %c47 = arith.constant 47 : index
    %579 = memref.load %arg4[%c47] : memref<98xf32, #tpu.memory_space<smem>>
    %c96 = arith.constant 96 : index
    %580 = memref.load %arg4[%c96] : memref<98xf32, #tpu.memory_space<smem>>
    %581 = vector.extract_strided_slice %527 {offsets = [0, 0, 5], sizes = [1, 16, 16], strides = [1, 1, 1]} : vector<1x16x22xf32> to vector<1x16x16xf32>
    %582 = vector.broadcast %579 : f32 to vector<1x16x16xf32>
    %583 = arith.mulf %582, %581 : vector<1x16x16xf32>
    %584 = arith.addf %578, %583 : vector<1x16x16xf32>
    %585 = vector.extract_strided_slice %528 {offsets = [0, 0, 5], sizes = [1, 16, 16], strides = [1, 1, 1]} : vector<1x16x22xf32> to vector<1x16x16xf32>
    %586 = vector.broadcast %580 : f32 to vector<1x16x16xf32>
    %587 = arith.mulf %586, %585 : vector<1x16x16xf32>
    %588 = arith.addf %584, %587 : vector<1x16x16xf32>
    %c48 = arith.constant 48 : index
    %589 = memref.load %arg4[%c48] : memref<98xf32, #tpu.memory_space<smem>>
    %c97 = arith.constant 97 : index
    %590 = memref.load %arg4[%c97] : memref<98xf32, #tpu.memory_space<smem>>
    %591 = vector.extract_strided_slice %527 {offsets = [0, 0, 6], sizes = [1, 16, 16], strides = [1, 1, 1]} : vector<1x16x22xf32> to vector<1x16x16xf32>
    %592 = vector.broadcast %589 : f32 to vector<1x16x16xf32>
    %593 = arith.mulf %592, %591 : vector<1x16x16xf32>
    %594 = arith.addf %588, %593 : vector<1x16x16xf32>
    %595 = vector.extract_strided_slice %528 {offsets = [0, 0, 6], sizes = [1, 16, 16], strides = [1, 1, 1]} : vector<1x16x22xf32> to vector<1x16x16xf32>
    %596 = vector.broadcast %590 : f32 to vector<1x16x16xf32>
    %597 = arith.mulf %596, %595 : vector<1x16x16xf32>
    %598 = arith.addf %594, %597 : vector<1x16x16xf32>
    %cst_66 = arith.constant -6.000000e+01 : f32
    %599 = vector.broadcast %cst_66 : f32 to vector<1x16x16xf32>
    %600 = arith.maximumf %598, %599 : vector<1x16x16xf32>
    %cst_67 = arith.constant 0.000000e+00 : f32
    %601 = vector.broadcast %cst_67 : f32 to vector<1x16x16xf32>
    %602 = arith.subf %601, %600 : vector<1x16x16xf32>
    %603 = math.exp %602 : vector<1x16x16xf32>
    %cst_68 = arith.constant 1.000000e+00 : f32
    %604 = vector.broadcast %cst_68 : f32 to vector<1x16x16xf32>
    %605 = arith.addf %604, %603 : vector<1x16x16xf32>
    %606 = tpu.reciprocal %605 {approx = true} : vector<1x16x16xf32> -> vector<1x16x16xf32>
    %607 = arith.mulf %605, %606 : vector<1x16x16xf32>
    %cst_69 = arith.constant 2.000000e+00 : f32
    %608 = vector.broadcast %cst_69 : f32 to vector<1x16x16xf32>
    %609 = arith.subf %608, %607 : vector<1x16x16xf32>
    %610 = arith.mulf %606, %609 : vector<1x16x16xf32>
    %c0_70 = arith.constant 0 : index
    %c0_71 = arith.constant 0 : index
    %c0_72 = arith.constant 0 : index
    %611 = vector.load %arg7[%c0_70, %c0_71, %c0_72] : memref<1x16x16xf32, #tpu.memory_space<vmem>>, vector<1x16x16xf32>
    tpu.vector_store %arg7[%c0_70, %c0_71, %c0_72], %610 {strides = array<i32>} : memref<1x16x16xf32, #tpu.memory_space<vmem>>, vector<1x16x16xf32>,
    %c0_i32_73 = arith.constant 0 : i32
    %c8_i32_74 = arith.constant 8 : i32
    %612 = arith.muli %c0_i32_73, %c8_i32_74 : i32
    %613 = tpu.assume_multiple %612, 8 : i32
    %c0_75 = arith.constant 0 : index
    %614 = arith.index_cast %613 : i32 to index
    %c0_76 = arith.constant 0 : index
    %c0_77 = arith.constant 0 : index
    %615 = vector.load %arg1[%c0_75, %614, %c0_76, %c0_77] : memref<1x16x16x128xf32, #tpu.memory_space<vmem>>, vector<1x8x16x128xf32>
    %c0_78 = arith.constant 0 : index
    %616 = arith.index_cast %613 : i32 to index
    %c0_79 = arith.constant 0 : index
    %617 = vector.load %arg7[%c0_78, %616, %c0_79] : memref<1x16x16xf32, #tpu.memory_space<vmem>>, vector<1x8x16xf32>
    %618 = vector.shape_cast %617 : vector<1x8x16xf32> to vector<1x8x16x1xf32>
    %619 = vector.shape_cast %43 : vector<1x128xf32> to vector<1x1x1x128xf32>
    %620 = vector.broadcast %618 : vector<1x8x16x1xf32> to vector<1x8x16x128xf32>
    %621 = vector.broadcast %619 : vector<1x1x1x128xf32> to vector<1x8x16x128xf32>
    %622 = arith.mulf %620, %621 : vector<1x8x16x128xf32>
    %cst_80 = arith.constant 1.000000e+00 : f32
    %623 = vector.broadcast %cst_80 : f32 to vector<1x8x16x128xf32>
    %624 = arith.addf %623, %622 : vector<1x8x16x128xf32>
    %625 = arith.mulf %615, %624 : vector<1x8x16x128xf32>
    %c0_81 = arith.constant 0 : index
    %626 = arith.index_cast %613 : i32 to index
    %c0_82 = arith.constant 0 : index
    %c0_83 = arith.constant 0 : index
    %627 = vector.load %arg5[%c0_81, %626, %c0_82, %c0_83] : memref<1x16x16x128xf32, #tpu.memory_space<vmem>>, vector<1x8x16x128xf32>
    tpu.vector_store %arg5[%c0_81, %626, %c0_82, %c0_83], %625 {strides = array<i32>} : memref<1x16x16x128xf32, #tpu.memory_space<vmem>>, vector<1x8x16x128xf32>,
    %c1_i32_84 = arith.constant 1 : i32
    %c8_i32_85 = arith.constant 8 : i32
    %628 = arith.muli %c1_i32_84, %c8_i32_85 : i32
    %629 = tpu.assume_multiple %628, 8 : i32
    %c0_86 = arith.constant 0 : index
    %630 = arith.index_cast %629 : i32 to index
    %c0_87 = arith.constant 0 : index
    %c0_88 = arith.constant 0 : index
    %631 = vector.load %arg1[%c0_86, %630, %c0_87, %c0_88] : memref<1x16x16x128xf32, #tpu.memory_space<vmem>>, vector<1x8x16x128xf32>
    %c0_89 = arith.constant 0 : index
    %632 = arith.index_cast %629 : i32 to index
    %c0_90 = arith.constant 0 : index
    %633 = vector.load %arg7[%c0_89, %632, %c0_90] : memref<1x16x16xf32, #tpu.memory_space<vmem>>, vector<1x8x16xf32>
    %634 = vector.shape_cast %633 : vector<1x8x16xf32> to vector<1x8x16x1xf32>
    %635 = vector.shape_cast %43 : vector<1x128xf32> to vector<1x1x1x128xf32>
    %636 = vector.broadcast %634 : vector<1x8x16x1xf32> to vector<1x8x16x128xf32>
    %637 = vector.broadcast %635 : vector<1x1x1x128xf32> to vector<1x8x16x128xf32>
    %638 = arith.mulf %636, %637 : vector<1x8x16x128xf32>
    %cst_91 = arith.constant 1.000000e+00 : f32
    %639 = vector.broadcast %cst_91 : f32 to vector<1x8x16x128xf32>
    %640 = arith.addf %639, %638 : vector<1x8x16x128xf32>
    %641 = arith.mulf %631, %640 : vector<1x8x16x128xf32>
    %c0_92 = arith.constant 0 : index
    %642 = arith.index_cast %629 : i32 to index
    %c0_93 = arith.constant 0 : index
    %c0_94 = arith.constant 0 : index
    %643 = vector.load %arg5[%c0_92, %642, %c0_93, %c0_94] : memref<1x16x16x128xf32, #tpu.memory_space<vmem>>, vector<1x8x16x128xf32>
    tpu.vector_store %arg5[%c0_92, %642, %c0_93, %c0_94], %641 {strides = array<i32>} : memref<1x16x16x128xf32, #tpu.memory_space<vmem>>, vector<1x8x16x128xf32>,
    %c2_i32_95 = arith.constant 2 : i32
    return
  }
  func.func @transform_0(%arg0: i32) -> (i32, i32, i32, i32) {
    %c0_i32 = arith.constant 0 : i32
    %c0_i32_0 = arith.constant 0 : i32
    %c0_i32_1 = arith.constant 0 : i32
    %c0_i32_2 = arith.constant 0 : i32
    return %arg0, %c0_i32, %c0_i32_0, %c0_i32_1 : i32, i32, i32, i32
  }
  func.func @transform_1(%arg0: i32) -> (i32, i32) {
    %c0_i32 = arith.constant 0 : i32
    %c0_i32_0 = arith.constant 0 : i32
    %c0_i32_1 = arith.constant 0 : i32
    return %c0_i32, %c0_i32_0 : i32, i32
  }
  func.func @transform_2(%arg0: i32) -> (i32, i32) {
    %c0_i32 = arith.constant 0 : i32
    %c0_i32_0 = arith.constant 0 : i32
    %c0_i32_1 = arith.constant 0 : i32
    return %c0_i32, %c0_i32_0 : i32, i32
  }
  func.func @transform_3(%arg0: i32) -> i32 {
    %c0_i32 = arith.constant 0 : i32
    %c0_i32_0 = arith.constant 0 : i32
    return %c0_i32 : i32
  }
  func.func @transform_4(%arg0: i32) -> (i32, i32, i32, i32) {
    %c0_i32 = arith.constant 0 : i32
    %c0_i32_0 = arith.constant 0 : i32
    %c0_i32_1 = arith.constant 0 : i32
    %c0_i32_2 = arith.constant 0 : i32
    return %arg0, %c0_i32, %c0_i32_0, %c0_i32_1 : i32, i32, i32, i32
  }
}

</mosaic_0001>

<llo_original>
// kernel: tpu_custom_call.1
$region0: #{tpu_custom_call.1}
  #allocation0 [shape = 'u32[]', space=smem, size = 0x4, offset = 0x4, fixed_abs, tag = 'smem constant byte address 0x4 - core index']
  #allocation1 [shape = 'u32[144,128]{1,0:T(1,128)}', space=vmem, size = 0x12000, scoped, tag = 'internal scratch']
  #allocation2 [shape = 'f32[2,1,16,16]{3,2,1,0:T(8,128)}', space=vmem, size = 0x4000, scoped, tag = 'scratch operand']
  #allocation3 [shape = 'f32[1,16,16]{2,1,0:T(8,128)}', space=vmem, size = 0x2000, scoped, tag = 'scratch operand']
  %s0 = inlined_call_operand.hbm [shape: f32[2,16,16,128], index: 0, kind: input, shape index: {}]
  %s1 = inlined_call_operand.vmem [shape: f32[128,8], index: 1, kind: input, shape index: {}]
  %s2 = inlined_call_operand.vmem [shape: f32[8,128], index: 2, kind: input, shape index: {}]
  %s3 = inlined_call_operand.vmem [shape: f32[98], index: 3, kind: input, shape index: {}]
  %s4 = inlined_call_operand.hbm [shape: f32[2,16,16,128], index: 4, kind: output, shape index: {}]
  %s5 = sld [smem:[#allocation0]]
  $region57: #{tpu_custom_call.1} parent=0
    _
  %s7 = ssub.s32 1, %s5
  %s8 = scalar_select 0, %s7, %s5
  $region1: #{tpu_custom_call.1} parent=0
    #allocation4 [shape = 'u8[262144]{0}', space=vmem, size = 0x40000, scoped, tag = 'input window, operand 0']
    #allocation5 [shape = 's32[2]{0}', space=sflag, size = 0x8, scoped, tag = 'scoped memory for tpu_custom_call.1']
    #allocation6 [shape = 's32[2]{0}', space=sflag, size = 0x8, scoped, tag = 'scoped memory for tpu_custom_call.1']
    #allocation7 [shape = 's32[2]{0}', space=sflag, size = 0x8, scoped, tag = 'scoped memory for tpu_custom_call.1']
    #allocation8 [shape = 'u8[512]{0}', space=smem, size = 0x200, scoped, tag = 'input window, operand 3, single buffered']
    #allocation9 [shape = 'u8[262144]{0}', space=vmem, size = 0x40000, scoped, tag = 'output window, operand 0']
    %9 = vsyncpa [#allocation5], 0
    %s10 = scalar_lea.sflag [#allocation5], 1
    %11 = vsyncpa %s10, 0
    %12 = vsyncpa [#allocation7], 0
    %13 = vsyncpa [#allocation6], 0
    %s14 = scalar_lea.sflag [#allocation6], 1
    %15 = vsyncpa %s14, 0
    loop: start=0, step=1, limit=4
    $region2: #{tpu_custom_call.1} parent=1 // loop_pre_header
      _
    $region3: #{tpu_custom_call.1} parent=1 // loop_header
      %s17 = sphi 0, %s21
      %p18 = scmp.ge.s32.totalorder %s17, 4
      %s27 = sphi 0, %s29
      %s30 = sphi 0, %s27
      %s31 = sphi 0, %s30
      %s47 = sphi 0, %s31
      %s51 = sphi 0, %s51
      %s53 = sphi 0, %s51
      %s54 = sphi 0, %s53
      %s68 = sphi 0, %s54
      %s72 = sphi 0, %s72
      %s74 = sphi 0, %s72
      %s75 = sphi 0, %s74
      %s89 = sphi 0, %s75
      %s93 = sphi 0, %s93
      %s95 = sphi 0, %s93
      %s96 = sphi 0, %s95
      %s110 = sphi 0, %s96
      %s116 = sphi 0, %s118
      %s119 = sphi 0, %s116
      %s120 = sphi 0, %s119
      %s136 = sphi 0, %s120
    $region4: #{tpu_custom_call.1} parent=1 // loop_header_branch
      %20 = sbr.rel (%p18) target = $region8
    $region5: #{tpu_custom_call.1} parent=1 // loop_body
      %s22 = ssub.s32 %s17, 1
      %s23 = ssub.s32 %s17, 2
      %s24 = sadd.s32 %s17, 1
      %s25 = ssub.s32 %s17, %s24
      %p26 = scmp.eq.s32.totalorder %s25, 0
      %s28 = sadd.s32 %s27, 1
      %s29 = scalar_select %p26, %s27, %s28
      %p32 = pneg %p26
      %p33 = scmp.eq.s32.totalorder %s17, 1
      %p34 = por %p32, %p33
      %p35 = scmp.ne.s32.totalorder %s27, %s30
      %p36 = scmp.eq.s32.totalorder %s17, 0
      %p37 = por %p35, %p36
      %p38 = scmp.ne.s32.totalorder %s27, %s30
      %p39 = scmp.eq.s32.totalorder %s22, 1
      %p40 = por %p38, %p39
      %p41 = scmp.ne.s32.totalorder %s30, %s31
      %p42 = scmp.eq.s32.totalorder %s22, 0
      %p43 = por %p41, %p42
      %p44 = scmp.ne.s32.totalorder %s30, %s31
      %p45 = scmp.eq.s32.totalorder %s23, 1
      %p46 = por %p44, %p45
      %p48 = scmp.ne.s32.totalorder %s31, %s47
      %p49 = scmp.eq.s32.totalorder %s23, 0
      %p50 = por %p48, %p49
      %s52 = sadd.s32 %s51, 1
      %p55 = scmp.eq.s32.totalorder %s17, 1
      %p56 = scmp.ne.s32.totalorder %s51, %s53
      %p57 = scmp.eq.s32.totalorder %s17, 0
      %p58 = por %p56, %p57
      %p59 = scmp.ne.s32.totalorder %s51, %s53
      %p60 = scmp.eq.s32.totalorder %s22, 1
      %p61 = por %p59, %p60
      %p62 = scmp.ne.s32.totalorder %s53, %s54
      %p63 = scmp.eq.s32.totalorder %s22, 0
      %p64 = por %p62, %p63
      %p65 = scmp.ne.s32.totalorder %s53, %s54
      %p66 = scmp.eq.s32.totalorder %s23, 1
      %p67 = por %p65, %p66
      %p69 = scmp.ne.s32.totalorder %s54, %s68
      %p70 = scmp.eq.s32.totalorder %s23, 0
      %p71 = por %p69, %p70
      %s73 = sadd.s32 %s72, 1
      %p76 = scmp.eq.s32.totalorder %s17, 1
      %p77 = scmp.ne.s32.totalorder %s72, %s74
      %p78 = scmp.eq.s32.totalorder %s17, 0
      %p79 = por %p77, %p78
      %p80 = scmp.ne.s32.totalorder %s72, %s74
      %p81 = scmp.eq.s32.totalorder %s22, 1
      %p82 = por %p80, %p81
      %p83 = scmp.ne.s32.totalorder %s74, %s75
      %p84 = scmp.eq.s32.totalorder %s22, 0
      %p85 = por %p83, %p84
      %p86 = scmp.ne.s32.totalorder %s74, %s75
      %p87 = scmp.eq.s32.totalorder %s23, 1
      %p88 = por %p86, %p87
      %p90 = scmp.ne.s32.totalorder %s75, %s89
      %p91 = scmp.eq.s32.totalorder %s23, 0
      %p92 = por %p90, %p91
      %s94 = sadd.s32 %s93, 1
      %p97 = scmp.eq.s32.totalorder %s17, 1
      %p98 = scmp.ne.s32.totalorder %s93, %s95
      %p99 = scmp.eq.s32.totalorder %s17, 0
      %p100 = por %p98, %p99
      %p101 = scmp.ne.s32.totalorder %s93, %s95
      %p102 = scmp.eq.s32.totalorder %s22, 1
      %p103 = por %p101, %p102
      %p104 = scmp.ne.s32.totalorder %s95, %s96
      %p105 = scmp.eq.s32.totalorder %s22, 0
      %p106 = por %p104, %p105
      %p107 = scmp.ne.s32.totalorder %s95, %s96
      %p108 = scmp.eq.s32.totalorder %s23, 1
      %p109 = por %p107, %p108
      %p111 = scmp.ne.s32.totalorder %s96, %s110
      %p112 = scmp.eq.s32.totalorder %s23, 0
      %p113 = por %p111, %p112
      %s114 = ssub.s32 %s17, %s24
      %p115 = scmp.eq.s32.totalorder %s114, 0
      %s117 = sadd.s32 %s116, 1
      %s118 = scalar_select %p115, %s116, %s117
      %p121 = pneg %p115
      %p122 = scmp.eq.s32.totalorder %s17, 1
      %p123 = por %p121, %p122
      %p124 = scmp.ne.s32.totalorder %s116, %s119
      %p125 = scmp.eq.s32.totalorder %s17, 0
      %p126 = por %p124, %p125
      %p127 = scmp.ne.s32.totalorder %s116, %s119
      %p128 = scmp.eq.s32.totalorder %s22, 1
      %p129 = por %p127, %p128
      %p130 = scmp.ne.s32.totalorder %s119, %s120
      %p131 = scmp.eq.s32.totalorder %s22, 0
      %p132 = por %p130, %p131
      %p133 = scmp.ne.s32.totalorder %s119, %s120
      %p134 = scmp.eq.s32.totalorder %s23, 1
      %p135 = por %p133, %p134
      %p137 = scmp.ne.s32.totalorder %s120, %s136
      %p138 = scmp.eq.s32.totalorder %s23, 0
      %p139 = por %p137, %p138
      %p140 = scmp.le.s32.totalorder 1, %s17
      %p141 = scmp.lt.s32.totalorder %s17, 3
      %p142 = pnand %p140, %p141
      %p143 = pneg %p142
      // Predicated region
      $region9: #{tpu_custom_call.1} parent=5 // pred_check
        _
      $region10: #{tpu_custom_call.1} parent=5 // pred_check_branch
        %145 = sbr.rel (%p142) target = $region12
      $region11: #{tpu_custom_call.1} parent=5 // pred_region
        %s146 = ssub.s32 %s17, 1
        // Predicated region
        $region13: #{tpu_custom_call.1} parent=11 // pred_check
          %p147 = pneg %p64
        $region14: #{tpu_custom_call.1} parent=11 // pred_check_branch
          %149 = sbr.rel (%p147) target = $region16
        $region15: #{tpu_custom_call.1} parent=11 // pred_region
          _
        $region16: #{tpu_custom_call.1} parent=11 // pred_fallthru
          _
        // Predicated region
        $region17: #{tpu_custom_call.1} parent=11 // pred_check
          %p150 = pneg %p85
        $region18: #{tpu_custom_call.1} parent=11 // pred_check_branch
          %152 = sbr.rel (%p150) target = $region20
        $region19: #{tpu_custom_call.1} parent=11 // pred_region
          _
        $region20: #{tpu_custom_call.1} parent=11 // pred_fallthru
          _
        // Predicated region
        $region21: #{tpu_custom_call.1} parent=11 // pred_check
          %p153 = pneg %p106
        $region22: #{tpu_custom_call.1} parent=11 // pred_check_branch
          %155 = sbr.rel (%p153) target = $region24
        $region23: #{tpu_custom_call.1} parent=11 // pred_region
          %s157 = ssub.s32 16, 16
          %158 = vsyncadd [#allocation7], %s157
          %s160 = sshll.u32 %s3, 4
          %s161 = int_to_ptr.vmem [resolvable:$true] %s160
          %163 = dma.vmem_to_smem %s161, 16, [#allocation8], [#allocation7]
        $region24: #{tpu_custom_call.1} parent=11 // pred_fallthru
          _
      $region12: #{tpu_custom_call.1} parent=5 // pred_fallthru
        _
      %p164 = scmp.lt.s32.totalorder %s17, 2
      // Predicated region
      $region25: #{tpu_custom_call.1} parent=5 // pred_check
        %p165 = pneg %p164
      $region26: #{tpu_custom_call.1} parent=5 // pred_check_branch
        %167 = sbr.rel (%p165) target = $region28
      $region27: #{tpu_custom_call.1} parent=5 // pred_region
        // Predicated region
        $region29: #{tpu_custom_call.1} parent=27 // pred_check
          %p168 = pneg %p37
        $region30: #{tpu_custom_call.1} parent=27 // pred_check_branch
          %170 = sbr.rel (%p168) target = $region32
        $region31: #{tpu_custom_call.1} parent=27 // pred_region
          %s171 = sand.u32 %s27, 1
          %s172 = scalar_lea.sflag [#allocation5], %s171
          %s173 = sand.u32 %s27, 1
          %s174 = smul.addr %s173, 256
          %s175 = scalar_lea.vmem [#allocation4], %s174
          %s177 = ssub.s32 4096, 4096
          %178 = vsyncadd %s172, %s177
          %s179 = smul.addr %s17, 32
          %s180 = smul.addr %s179, 128
          %s181 = scalar_lea.hbm %s0, %s180
          %s182 = sshll.u32 %s175, 4
          %s183 = int_to_ptr.vmem [resolvable:$true] %s182
          %188 = dma.hbm_to_vmem [thread:$0]  %s181, 4096, %s183, %s172, 128, 128, 8
        $region32: #{tpu_custom_call.1} parent=27 // pred_fallthru
          _
      $region28: #{tpu_custom_call.1} parent=5 // pred_fallthru
        _
      %p189 = scmp.le.s32.totalorder 1, %s17
      %p190 = scmp.lt.s32.totalorder %s17, 3
      %p191 = pnand %p189, %p190
      %p192 = pneg %p191
      // Predicated region
      $region33: #{tpu_custom_call.1} parent=5 // pred_check
        _
      $region34: #{tpu_custom_call.1} parent=5 // pred_check_branch
        %194 = sbr.rel (%p191) target = $region36
      $region35: #{tpu_custom_call.1} parent=5 // pred_region
        %s195 = ssub.s32 %s17, 1
        %s196 = sand.u32 %s30, 1
        %s197 = scalar_lea.sflag [#allocation5], %s196
        %s198 = sand.u32 %s30, 1
        %s199 = smul.addr %s198, 256
        %s200 = scalar_lea.vmem [#allocation4], %s199
        // Predicated region
        $region37: #{tpu_custom_call.1} parent=35 // pred_check
          %p201 = pneg %p43
        $region38: #{tpu_custom_call.1} parent=35 // pred_check_branch
          %203 = sbr.rel (%p201) target = $region40
        $region39: #{tpu_custom_call.1} parent=35 // pred_region
          %204 = dma.done %s197, 4096
        $region40: #{tpu_custom_call.1} parent=35 // pred_fallthru
          _
        // Predicated region
        $region41: #{tpu_custom_call.1} parent=35 // pred_check
          %p205 = pneg %p106
        $region42: #{tpu_custom_call.1} parent=35 // pred_check_branch
          %207 = sbr.rel (%p205) target = $region44
        $region43: #{tpu_custom_call.1} parent=35 // pred_region
          %208 = dma.done [#allocation7], 16
        $region44: #{tpu_custom_call.1} parent=35 // pred_fallthru
          _
        %209 = sfence
        %s210 = sand.u32 %s30, 1
        %s211 = scalar_lea.sflag [#allocation5], %s210
        %s212 = sand.u32 %s30, 1
        %s213 = smul.addr %s212, 256
        %s214 = scalar_lea.vmem [#allocation4], %s213
        %p215 = pneg %p43
        %p216 = pneg %p40
        %p217 = pneg %p64
        %p218 = pneg %p61
        %p219 = pneg %p85
        %p220 = pneg %p82
        %p221 = pneg %p106
        %p222 = pneg %p103
        %p223 = pneg %p132
        %p224 = pneg %p129
        %s225 = sand.u32 %s119, 1
        %s226 = scalar_lea.sflag [#allocation6], %s225
        %s227 = sand.u32 %s119, 1
        %s228 = smul.addr %s227, 256
        %s229 = scalar_lea.vmem [#allocation9], %s228
        %s230 = smul.u32 0, 16
        %s231 = scalar_lea.vmem %s200, %s230 [#allocation4]
        %v232 = vld [vmem:[%s231] sm:$0xff]
        %v233 = vld [vmem:[%s231 + $0x8] sm:$0xff]
        %v234 = vld [vmem:[%s231 + $0x10] sm:$0xff]
        %v235 = vld [vmem:[%s231 + $0x18] sm:$0xff]
        %v236 = vld [vmem:[%s231 + $0x20] sm:$0xff]
        %v237 = vld [vmem:[%s231 + $0x28] sm:$0xff]
        %v238 = vld [vmem:[%s231 + $0x30] sm:$0xff]
        %v239 = vld [vmem:[%s231 + $0x38] sm:$0xff]
        %v240 = vld [vmem:[%s231 + $0x40] sm:$0xff]
        %v241 = vld [vmem:[%s231 + $0x48] sm:$0xff]
        %v242 = vld [vmem:[%s231 + $0x50] sm:$0xff]
        %v243 = vld [vmem:[%s231 + $0x58] sm:$0xff]
        %v244 = vld [vmem:[%s231 + $0x60] sm:$0xff]
        %v245 = vld [vmem:[%s231 + $0x68] sm:$0xff]
        %v246 = vld [vmem:[%s231 + $0x70] sm:$0xff]
        %v247 = vld [vmem:[%s231 + $0x78] sm:$0xff]
        %v248 = vmax.f32 %v232, %v236
        %v249 = vmax.f32 %v233, %v237
        %v250 = vmax.f32 %v234, %v238
        %v251 = vmax.f32 %v235, %v239
        %v252 = vmax.f32 %v248, %v240
        %v253 = vmax.f32 %v249, %v241
        %v254 = vmax.f32 %v250, %v242
        %v255 = vmax.f32 %v251, %v243
        %v256 = vmax.f32 %v252, %v244
        %v257 = vmax.f32 %v253, %v245
        %v258 = vmax.f32 %v254, %v246
        %v259 = vmax.f32 %v255, %v247
        %v260 = vmax.f32 %v256, %v257
        %v261 = vmax.f32 %v258, %v259
        %v262 = vmax.f32 %v260, %v261
        %v263 = vrot.slane %v262, 4
        %v264 = vmax.f32 %v262, %v263
        %v265 = vrot.slane %v264, 2
        %v266 = vmax.f32 %v264, %v265
        %v267 = vrot.slane %v266, 1
        %v268 = vmax.f32 %v266, %v267
        %v269 = vadd.f32 %v232, %v233
        %v270 = vadd.f32 %v269, %v234
        %v271 = vadd.f32 %v270, %v235
        %v272 = vadd.f32 %v271, %v236
        %v273 = vadd.f32 %v272, %v237
        %v274 = vadd.f32 %v273, %v238
        %v275 = vadd.f32 %v274, %v239
        %v276 = vadd.f32 %v275, %v240
        %v277 = vadd.f32 %v276, %v241
        %v278 = vadd.f32 %v277, %v242
        %v279 = vadd.f32 %v278, %v243
        %v280 = vadd.f32 %v279, %v244
        %v281 = vadd.f32 %v280, %v245
        %v282 = vadd.f32 %v281, %v246
        %v283 = vadd.f32 %v282, %v247
        %v284 = vrot.slane %v283, 4
        %v285 = vadd.f32 %v283, %v284
        %v286 = vrot.slane %v285, 2
        %v287 = vadd.f32 %v285, %v286
        %v288 = vrot.slane %v287, 1
        %v289 = vadd.f32 %v287, %v288
        %v290 = vadd.f32 %v289, 0.0
        %s291 = smul.u32 8, 16
        %s292 = scalar_lea.vmem %s200, %s291 [#allocation4]
        %v293 = vld [vmem:[%s292] sm:$0xff]
        %v294 = vld [vmem:[%s292 + $0x8] sm:$0xff]
        %v295 = vld [vmem:[%s292 + $0x10] sm:$0xff]
        %v296 = vld [vmem:[%s292 + $0x18] sm:$0xff]
        %v297 = vld [vmem:[%s292 + $0x20] sm:$0xff]
        %v298 = vld [vmem:[%s292 + $0x28] sm:$0xff]
        %v299 = vld [vmem:[%s292 + $0x30] sm:$0xff]
        %v300 = vld [vmem:[%s292 + $0x38] sm:$0xff]
        %v301 = vld [vmem:[%s292 + $0x40] sm:$0xff]
        %v302 = vld [vmem:[%s292 + $0x48] sm:$0xff]
        %v303 = vld [vmem:[%s292 + $0x50] sm:$0xff]
        %v304 = vld [vmem:[%s292 + $0x58] sm:$0xff]
        %v305 = vld [vmem:[%s292 + $0x60] sm:$0xff]
        %v306 = vld [vmem:[%s292 + $0x68] sm:$0xff]
        %v307 = vld [vmem:[%s292 + $0x70] sm:$0xff]
        %v308 = vld [vmem:[%s292 + $0x78] sm:$0xff]
        %v309 = vmax.f32 %v293, %v297
        %v310 = vmax.f32 %v294, %v298
        %v311 = vmax.f32 %v295, %v299
        %v312 = vmax.f32 %v296, %v300
        %v313 = vmax.f32 %v309, %v301
        %v314 = vmax.f32 %v310, %v302
        %v315 = vmax.f32 %v311, %v303
        %v316 = vmax.f32 %v312, %v304
        %v317 = vmax.f32 %v313, %v305
        %v318 = vmax.f32 %v314, %v306
        %v319 = vmax.f32 %v315, %v307
        %v320 = vmax.f32 %v316, %v308
        %v321 = vmax.f32 %v317, %v318
        %v322 = vmax.f32 %v319, %v320
        %v323 = vmax.f32 %v321, %v322
        %v324 = vrot.slane %v323, 4
        %v325 = vmax.f32 %v323, %v324
        %v326 = vrot.slane %v325, 2
        %v327 = vmax.f32 %v325, %v326
        %v328 = vrot.slane %v327, 1
        %v329 = vmax.f32 %v327, %v328
        %v330 = vmax.f32 %v268, %v329
        %v331 = vadd.f32 %v293, %v294
        %v332 = vadd.f32 %v331, %v295
        %v333 = vadd.f32 %v332, %v296
        %v334 = vadd.f32 %v333, %v297
        %v335 = vadd.f32 %v334, %v298
        %v336 = vadd.f32 %v335, %v299
        %v337 = vadd.f32 %v336, %v300
        %v338 = vadd.f32 %v337, %v301
        %v339 = vadd.f32 %v338, %v302
        %v340 = vadd.f32 %v339, %v303
        %v341 = vadd.f32 %v340, %v304
        %v342 = vadd.f32 %v341, %v305
        %v343 = vadd.f32 %v342, %v306
        %v344 = vadd.f32 %v343, %v307
        %v345 = vadd.f32 %v344, %v308
        %v346 = vrot.slane %v345, 4
        %v347 = vadd.f32 %v345, %v346
        %v348 = vrot.slane %v347, 2
        %v349 = vadd.f32 %v347, %v348
        %v350 = vrot.slane %v349, 1
        %v351 = vadd.f32 %v349, %v350
        %v352 = vadd.f32 %v290, %v351
        %v353 = vmul.f32 %v352, 0.00390625
        %vm354 = vcmask 1040384
        %v355 = vsel %vm354, %v330, %v353
        %v356 = vld [vmem:[%s1] sm:$0xff]
        %v357 = vld [vmem:[%s1 + $0x8] sm:$0xff]
        %v358 = vld [vmem:[%s1 + $0x10] sm:$0xff]
        %v359 = vld [vmem:[%s1 + $0x18] sm:$0xff]
        %v360 = vld [vmem:[%s1 + $0x20] sm:$0xff]
        %v361 = vld [vmem:[%s1 + $0x28] sm:$0xff]
        %v362 = vld [vmem:[%s1 + $0x30] sm:$0xff]
        %v363 = vld [vmem:[%s1 + $0x38] sm:$0xff]
        %v364 = vld [vmem:[%s1 + $0x40] sm:$0xff]
        %v365 = vld [vmem:[%s1 + $0x48] sm:$0xff]
        %v366 = vld [vmem:[%s1 + $0x50] sm:$0xff]
        %v367 = vld [vmem:[%s1 + $0x58] sm:$0xff]
        %v368 = vld [vmem:[%s1 + $0x60] sm:$0xff]
        %v369 = vld [vmem:[%s1 + $0x68] sm:$0xff]
        %v370 = vld [vmem:[%s1 + $0x70] sm:$0xff]
        %v371 = vld [vmem:[%s1 + $0x78] sm:$0xff]
        %372 = vmatprep.subr.mxu0 0.0
        %373 = vmatpush1.msra.mxu0 %v356
        %374 = vmatprep.subr.mxu0 0.0
        %375 = vmatpush1.msra.mxu0 %v357
        %376 = vmatprep.subr.mxu0 0.0
        %377 = vmatpush1.msra.mxu0 %v358
        %378 = vmatprep.subr.mxu0 0.0
        %379 = vmatpush1.msra.mxu0 %v359
        %380 = vmatprep.subr.mxu0 0.0
        %381 = vmatpush1.msra.mxu0 %v360
        %382 = vmatprep.subr.mxu0 0.0
        %383 = vmatpush1.msra.mxu0 %v361
        %384 = vmatprep.subr.mxu0 0.0
        %385 = vmatpush1.msra.mxu0 %v362
        %386 = vmatprep.subr.mxu0 0.0
        %387 = vmatpush1.msra.mxu0 %v363
        %388 = vmatprep.subr.mxu0 0.0
        %389 = vmatpush1.msra.mxu0 %v364
        %390 = vmatprep.subr.mxu0 0.0
        %391 = vmatpush1.msra.mxu0 %v365
        %392 = vmatprep.subr.mxu0 0.0
        %393 = vmatpush1.msra.mxu0 %v366
        %394 = vmatprep.subr.mxu0 0.0
        %395 = vmatpush1.msra.mxu0 %v367
        %396 = vmatprep.subr.mxu0 0.0
        %397 = vmatpush1.msra.mxu0 %v368
        %398 = vmatprep.subr.mxu0 0.0
        %399 = vmatpush1.msra.mxu0 %v369
        %400 = vmatprep.subr.mxu0 0.0
        %401 = vmatpush1.msra.mxu0 %v370
        %402 = vmatprep.subr.mxu0 0.0
        %403 = vmatpush1.msra.mxu0 %v371
        %404 = vmatprep.subr.mxu0 0.0
        %405 = vmatpush1.msra.mxu0 0.0
        %406 = vmatprep.subr.mxu0 0.0
        %407 = vmatpush1.msra.mxu0 0.0
        %408 = vmatprep.subr.mxu0 0.0
        %409 = vmatpush1.msra.mxu0 0.0
        %410 = vmatprep.subr.mxu0 0.0
        %411 = vmatpush1.msra.mxu0 0.0
        %412 = vmatprep.subr.mxu0 0.0
        %413 = vmatpush1.msra.mxu0 0.0
        %414 = vmatprep.subr.mxu0 0.0
        %415 = vmatpush1.msra.mxu0 0.0
        %416 = vmatprep.subr.mxu0 0.0
        %417 = vmatpush1.msra.mxu0 0.0
        %418 = vmatprep.subr.mxu0 0.0
        %419 = vmatpush1.msra.mxu0 0.0
        %420 = vmatprep.subr.mxu0 0.0
        %421 = vmatpush1.msra.mxu0 0.0
        %422 = vmatprep.subr.mxu0 0.0
        %423 = vmatpush1.msra.mxu0 0.0
        %424 = vmatprep.subr.mxu0 0.0
        %425 = vmatpush1.msra.mxu0 0.0
        %426 = vmatprep.subr.mxu0 0.0
        %427 = vmatpush1.msra.mxu0 0.0
        %428 = vmatprep.subr.mxu0 0.0
        %429 = vmatpush1.msra.mxu0 0.0
        %430 = vmatprep.subr.mxu0 0.0
        %431 = vmatpush1.msra.mxu0 0.0
        %432 = vmatprep.subr.mxu0 0.0
        %433 = vmatpush1.msra.mxu0 0.0
        %434 = vmatprep.subr.mxu0 0.0
        %435 = vmatpush1.msra.mxu0 0.0
        %436 = vmatprep.mubr.f32.mxu0 0.0
        %437 = vmatmul.mubr.f32.gmra.mrb[0].mxu0 %v355
        %v438 = vpop.f32.mrb[0].mxu0
        %v439 = vadd.f32 0.0, %v438
        %v440 = vpop.f32.mrb[0].mxu0
        %441 = vdwg.mxu0
        %v442 = vmax.f32 %v439, 0.0
        %v443 = vld [vmem:[%s2] sm:$0xff]
        %vm444 = vcmask 64512
        %v446 = vsel %vm444, %v442, 0
        %448 = vmatprep.subr.mxu0 0.0
        %449 = vmatpush1.msra.mxu0 %v443
        %450 = vmatprep.subr.mxu0 0.0
        %451 = vmatpush1.msra.mxu0 0.0
        %452 = vmatprep.subr.mxu0 0.0
        %453 = vmatpush1.msra.mxu0 0.0
        %454 = vmatprep.subr.mxu0 0.0
        %455 = vmatpush1.msra.mxu0 0.0
        %456 = vmatprep.subr.mxu0 0.0
        %457 = vmatpush1.msra.mxu0 0.0
        %458 = vmatprep.subr.mxu0 0.0
        %459 = vmatpush1.msra.mxu0 0.0
        %460 = vmatprep.subr.mxu0 0.0
        %461 = vmatpush1.msra.mxu0 0.0
        %462 = vmatprep.subr.mxu0 0.0
        %463 = vmatpush1.msra.mxu0 0.0
        %464 = vmatprep.subr.mxu0 0.0
        %465 = vmatpush1.msra.mxu0 0.0
        %466 = vmatprep.subr.mxu0 0.0
        %467 = vmatpush1.msra.mxu0 0.0
        %468 = vmatprep.subr.mxu0 0.0
        %469 = vmatpush1.msra.mxu0 0.0
        %470 = vmatprep.subr.mxu0 0.0
        %471 = vmatpush1.msra.mxu0 0.0
        %472 = vmatprep.subr.mxu0 0.0
        %473 = vmatpush1.msra.mxu0 0.0
        %474 = vmatprep.subr.mxu0 0.0
        %475 = vmatpush1.msra.mxu0 0.0
        %476 = vmatprep.subr.mxu0 0.0
        %477 = vmatpush1.msra.mxu0 0.0
        %478 = vmatprep.subr.mxu0 0.0
        %479 = vmatpush1.msra.mxu0 0.0
        %480 = vmatprep.subr.mxu0 0.0
        %481 = vmatpush1.msra.mxu0 0.0
        %482 = vmatprep.subr.mxu0 0.0
        %483 = vmatpush1.msra.mxu0 0.0
        %484 = vmatprep.subr.mxu0 0.0
        %485 = vmatpush1.msra.mxu0 0.0
        %486 = vmatprep.subr.mxu0 0.0
        %487 = vmatpush1.msra.mxu0 0.0
        %488 = vmatprep.subr.mxu0 0.0
        %489 = vmatpush1.msra.mxu0 0.0
        %490 = vmatprep.subr.mxu0 0.0
        %491 = vmatpush1.msra.mxu0 0.0
        %492 = vmatprep.subr.mxu0 0.0
        %493 = vmatpush1.msra.mxu0 0.0
        %494 = vmatprep.subr.mxu0 0.0
        %495 = vmatpush1.msra.mxu0 0.0
        %496 = vmatprep.subr.mxu0 0.0
        %497 = vmatpush1.msra.mxu0 0.0
        %498 = vmatprep.subr.mxu0 0.0
        %499 = vmatpush1.msra.mxu0 0.0
        %500 = vmatprep.subr.mxu0 0.0
        %501 = vmatpush1.msra.mxu0 0.0
        %502 = vmatprep.subr.mxu0 0.0
        %503 = vmatpush1.msra.mxu0 0.0
        %504 = vmatprep.subr.mxu0 0.0
        %505 = vmatpush1.msra.mxu0 0.0
        %506 = vmatprep.subr.mxu0 0.0
        %507 = vmatpush1.msra.mxu0 0.0
        %508 = vmatprep.subr.mxu0 0.0
        %509 = vmatpush1.msra.mxu0 0.0
        %510 = vmatprep.subr.mxu0 0.0
        %511 = vmatpush1.msra.mxu0 0.0
        %512 = vmatprep.mubr.f32.mxu0 0.0
        %513 = vmatmul.mubr.f32.gmra.mrb[0].mxu0 %v446
        %v514 = vpop.f32.mrb[0].mxu0
        %v515 = vadd.f32 0.0, %v514
        %v516 = vpop.f32.mrb[0].mxu0
        %517 = vdwg.mxu0
        %v519 = vrot.slane %v515, 1
        %v521 = vadd.f32 %v515, %v519
        %v522 = vmax.f32 %v521, -60.0
        %v523 = vsub.f32 0.0, %v522
        %v524 = vmul.f32 %v523, 1.442695
        %v525 = vpow.pop %v524
        %v526 = vadd.f32 %v525, 1.0
        %v527 = vrcp.pop %v526
        %v528 = vmul.f32 %v526, %v527
        %v529 = vsub.f32 2.0, %v528
        %v530 = vmul.f32 %v527, %v529
        %v531 = vlaneseq
        %v532 = vshrl.u32 %v531, 7
        %v533 = vsub.s32 0, %v532
        %v534 = vrot.slane %v530, %v533
        %v535 = vmul.f32 %v232, %v534
        %v536 = vmul.f32 %v233, %v534
        %v537 = vmul.f32 %v234, %v534
        %v538 = vmul.f32 %v235, %v534
        %v539 = vmul.f32 %v236, %v534
        %v540 = vmul.f32 %v237, %v534
        %v541 = vmul.f32 %v238, %v534
        %v542 = vmul.f32 %v239, %v534
        %v543 = vmul.f32 %v240, %v534
        %v544 = vmul.f32 %v241, %v534
        %v545 = vmul.f32 %v242, %v534
        %v546 = vmul.f32 %v243, %v534
        %v547 = vmul.f32 %v244, %v534
        %v548 = vmul.f32 %v245, %v534
        %v549 = vmul.f32 %v246, %v534
        %v550 = vmul.f32 %v247, %v534
        %551 = vmax.xlane.f32.xlu0 %v535
        %v552 = vpop.xlane.xlu0 %551
        %553 = vmax.xlane.f32.xlu0 %v536
        %v554 = vpop.xlane.xlu0 %553
        %555 = vmax.xlane.f32.xlu0 %v537
        %v556 = vpop.xlane.xlu0 %555
        %557 = vmax.xlane.f32.xlu0 %v538
        %v558 = vpop.xlane.xlu0 %557
        %559 = vmax.xlane.f32.xlu0 %v539
        %v560 = vpop.xlane.xlu0 %559
        %561 = vmax.xlane.f32.xlu0 %v540
        %v562 = vpop.xlane.xlu0 %561
        %563 = vmax.xlane.f32.xlu0 %v541
        %v564 = vpop.xlane.xlu0 %563
        %565 = vmax.xlane.f32.xlu0 %v542
        %v566 = vpop.xlane.xlu0 %565
        %567 = vmax.xlane.f32.xlu0 %v543
        %v568 = vpop.xlane.xlu0 %567
        %569 = vmax.xlane.f32.xlu0 %v544
        %v570 = vpop.xlane.xlu0 %569
        %571 = vmax.xlane.f32.xlu0 %v545
        %v572 = vpop.xlane.xlu0 %571
        %573 = vmax.xlane.f32.xlu0 %v546
        %v574 = vpop.xlane.xlu0 %573
        %575 = vmax.xlane.f32.xlu0 %v547
        %v576 = vpop.xlane.xlu0 %575
        %577 = vmax.xlane.f32.xlu0 %v548
        %v578 = vpop.xlane.xlu0 %577
        %579 = vmax.xlane.f32.xlu0 %v549
        %v580 = vpop.xlane.xlu0 %579
        %581 = vmax.xlane.f32.xlu0 %v550
        %v582 = vpop.xlane.xlu0 %581
        %v599 = vlaneseq
        %v600 = vand.u32 %v599, 127
        %v601 = vlaneseq
        %v602 = vshrl.u32 %v601, 7
        %v603 = vsub.s32 %v600, %v602
        %v604 = vrot.slane %v552, %v603
        %v605 = vadd.s32 %v600, 4294967288
        %v606 = vlaneseq
        %v607 = vshrl.u32 %v606, 7
        %v608 = vsub.s32 %v605, %v607
        %v609 = vrot.slane %v554, %v608
        %vm610 = vcmask 130112
        %v611 = vsel %vm610, %v609, %v604
        %v612 = vlaneseq
        %v613 = vshrl.u32 %v612, 7
        %v614 = vsub.s32 %v600, %v613
        %v615 = vrot.slane %v556, %v614
        %v616 = vlaneseq
        %v617 = vshrl.u32 %v616, 7
        %v618 = vsub.s32 %v605, %v617
        %v619 = vrot.slane %v558, %v618
        %v620 = vsel %vm610, %v619, %v615
        %v621 = vlaneseq
        %v622 = vshrl.u32 %v621, 7
        %v623 = vsub.s32 %v600, %v622
        %v624 = vrot.slane %v560, %v623
        %v625 = vlaneseq
        %v626 = vshrl.u32 %v625, 7
        %v627 = vsub.s32 %v605, %v626
        %v628 = vrot.slane %v562, %v627
        %v629 = vsel %vm610, %v628, %v624
        %v630 = vlaneseq
        %v631 = vshrl.u32 %v630, 7
        %v632 = vsub.s32 %v600, %v631
        %v633 = vrot.slane %v564, %v632
        %v634 = vlaneseq
        %v635 = vshrl.u32 %v634, 7
        %v636 = vsub.s32 %v605, %v635
        %v637 = vrot.slane %v566, %v636
        %v638 = vsel %vm610, %v637, %v633
        %v639 = vlaneseq
        %v640 = vshrl.u32 %v639, 7
        %v641 = vsub.s32 %v600, %v640
        %v642 = vrot.slane %v568, %v641
        %v643 = vlaneseq
        %v644 = vshrl.u32 %v643, 7
        %v645 = vsub.s32 %v605, %v644
        %v646 = vrot.slane %v570, %v645
        %v647 = vsel %vm610, %v646, %v642
        %v648 = vlaneseq
        %v649 = vshrl.u32 %v648, 7
        %v650 = vsub.s32 %v600, %v649
        %v651 = vrot.slane %v572, %v650
        %v652 = vlaneseq
        %v653 = vshrl.u32 %v652, 7
        %v654 = vsub.s32 %v605, %v653
        %v655 = vrot.slane %v574, %v654
        %v656 = vsel %vm610, %v655, %v651
        %v657 = vlaneseq
        %v658 = vshrl.u32 %v657, 7
        %v659 = vsub.s32 %v600, %v658
        %v660 = vrot.slane %v576, %v659
        %v661 = vlaneseq
        %v662 = vshrl.u32 %v661, 7
        %v663 = vsub.s32 %v605, %v662
        %v664 = vrot.slane %v578, %v663
        %v665 = vsel %vm610, %v664, %v660
        %v666 = vlaneseq
        %v667 = vshrl.u32 %v666, 7
        %v668 = vsub.s32 %v600, %v667
        %v669 = vrot.slane %v580, %v668
        %v670 = vlaneseq
        %v671 = vshrl.u32 %v670, 7
        %v672 = vsub.s32 %v605, %v671
        %v673 = vrot.slane %v582, %v672
        %v674 = vsel %vm610, %v673, %v669
        %vm675 = vcmask 1041409
        %v676 = vsel %vm675, %v620, %v611
        %vm677 = vcmask 1042434
        %v678 = vsel %vm677, %v629, %v676
        %vm679 = vcmask 1043459
        %v680 = vsel %vm679, %v638, %v678
        %vm681 = vcmask 1044484
        %v682 = vsel %vm681, %v647, %v680
        %vm683 = vcmask 1045509
        %v684 = vsel %vm683, %v656, %v682
        %vm685 = vcmask 1046534
        %v686 = vsel %vm685, %v665, %v684
        %vm687 = vcmask 1047559
        %v688 = vsel %vm687, %v674, %v686
        %vm690 = vcmask 130048
        %691 = vst.msk [vmem:[#allocation2] sm:$0xff] %vm690, %v688
        %692 = vadd.xlane.f32.xlu0 %v535
        %v693 = vpop.xlane.xlu0 %692
        %694 = vadd.xlane.f32.xlu0 %v536
        %v695 = vpop.xlane.xlu0 %694
        %696 = vadd.xlane.f32.xlu0 %v537
        %v697 = vpop.xlane.xlu0 %696
        %698 = vadd.xlane.f32.xlu0 %v538
        %v699 = vpop.xlane.xlu0 %698
        %700 = vadd.xlane.f32.xlu0 %v539
        %v701 = vpop.xlane.xlu0 %700
        %702 = vadd.xlane.f32.xlu0 %v540
        %v703 = vpop.xlane.xlu0 %702
        %704 = vadd.xlane.f32.xlu0 %v541
        %v705 = vpop.xlane.xlu0 %704
        %706 = vadd.xlane.f32.xlu0 %v542
        %v707 = vpop.xlane.xlu0 %706
        %708 = vadd.xlane.f32.xlu0 %v543
        %v709 = vpop.xlane.xlu0 %708
        %710 = vadd.xlane.f32.xlu0 %v544
        %v711 = vpop.xlane.xlu0 %710
        %712 = vadd.xlane.f32.xlu0 %v545
        %v713 = vpop.xlane.xlu0 %712
        %714 = vadd.xlane.f32.xlu0 %v546
        %v715 = vpop.xlane.xlu0 %714
        %716 = vadd.xlane.f32.xlu0 %v547
        %v717 = vpop.xlane.xlu0 %716
        %718 = vadd.xlane.f32.xlu0 %v548
        %v719 = vpop.xlane.xlu0 %718
        %720 = vadd.xlane.f32.xlu0 %v549
        %v721 = vpop.xlane.xlu0 %720
        %722 = vadd.xlane.f32.xlu0 %v550
        %v723 = vpop.xlane.xlu0 %722
        %v724 = vmul.f32 %v693, 0.0078125
        %v725 = vmul.f32 %v695, 0.0078125
        %v726 = vmul.f32 %v697, 0.0078125
        %v727 = vmul.f32 %v699, 0.0078125
        %v728 = vmul.f32 %v701, 0.0078125
        %v729 = vmul.f32 %v703, 0.0078125
        %v730 = vmul.f32 %v705, 0.0078125
        %v731 = vmul.f32 %v707, 0.0078125
        %v732 = vmul.f32 %v709, 0.0078125
        %v733 = vmul.f32 %v711, 0.0078125
        %v734 = vmul.f32 %v713, 0.0078125
        %v735 = vmul.f32 %v715, 0.0078125
        %v736 = vmul.f32 %v717, 0.0078125
        %v737 = vmul.f32 %v719, 0.0078125
        %v738 = vmul.f32 %v721, 0.0078125
        %v739 = vmul.f32 %v723, 0.0078125
        %v756 = vlaneseq
        %v757 = vshrl.u32 %v756, 7
        %v758 = vsub.s32 %v600, %v757
        %v759 = vrot.slane %v724, %v758
        %v760 = vlaneseq
        %v761 = vshrl.u32 %v760, 7
        %v762 = vsub.s32 %v605, %v761
        %v763 = vrot.slane %v725, %v762
        %v764 = vsel %vm610, %v763, %v759
        %v765 = vlaneseq
        %v766 = vshrl.u32 %v765, 7
        %v767 = vsub.s32 %v600, %v766
        %v768 = vrot.slane %v726, %v767
        %v769 = vlaneseq
        %v770 = vshrl.u32 %v769, 7
        %v771 = vsub.s32 %v605, %v770
        %v772 = vrot.slane %v727, %v771
        %v773 = vsel %vm610, %v772, %v768
        %v774 = vlaneseq
        %v775 = vshrl.u32 %v774, 7
        %v776 = vsub.s32 %v600, %v775
        %v777 = vrot.slane %v728, %v776
        %v778 = vlaneseq
        %v779 = vshrl.u32 %v778, 7
        %v780 = vsub.s32 %v605, %v779
        %v781 = vrot.slane %v729, %v780
        %v782 = vsel %vm610, %v781, %v777
        %v783 = vlaneseq
        %v784 = vshrl.u32 %v783, 7
        %v785 = vsub.s32 %v600, %v784
        %v786 = vrot.slane %v730, %v785
        %v787 = vlaneseq
        %v788 = vshrl.u32 %v787, 7
        %v789 = vsub.s32 %v605, %v788
        %v790 = vrot.slane %v731, %v789
        %v791 = vsel %vm610, %v790, %v786
        %v792 = vlaneseq
        %v793 = vshrl.u32 %v792, 7
        %v794 = vsub.s32 %v600, %v793
        %v795 = vrot.slane %v732, %v794
        %v796 = vlaneseq
        %v797 = vshrl.u32 %v796, 7
        %v798 = vsub.s32 %v605, %v797
        %v799 = vrot.slane %v733, %v798
        %v800 = vsel %vm610, %v799, %v795
        %v801 = vlaneseq
        %v802 = vshrl.u32 %v801, 7
        %v803 = vsub.s32 %v600, %v802
        %v804 = vrot.slane %v734, %v803
        %v805 = vlaneseq
        %v806 = vshrl.u32 %v805, 7
        %v807 = vsub.s32 %v605, %v806
        %v808 = vrot.slane %v735, %v807
        %v809 = vsel %vm610, %v808, %v804
        %v810 = vlaneseq
        %v811 = vshrl.u32 %v810, 7
        %v812 = vsub.s32 %v600, %v811
        %v813 = vrot.slane %v736, %v812
        %v814 = vlaneseq
        %v815 = vshrl.u32 %v814, 7
        %v816 = vsub.s32 %v605, %v815
        %v817 = vrot.slane %v737, %v816
        %v818 = vsel %vm610, %v817, %v813
        %v819 = vlaneseq
        %v820 = vshrl.u32 %v819, 7
        %v821 = vsub.s32 %v600, %v820
        %v822 = vrot.slane %v738, %v821
        %v823 = vlaneseq
        %v824 = vshrl.u32 %v823, 7
        %v825 = vsub.s32 %v605, %v824
        %v826 = vrot.slane %v739, %v825
        %v827 = vsel %vm610, %v826, %v822
        %v828 = vsel %vm675, %v773, %v764
        %v829 = vsel %vm677, %v782, %v828
        %v830 = vsel %vm679, %v791, %v829
        %v831 = vsel %vm681, %v800, %v830
        %v832 = vsel %vm683, %v809, %v831
        %v833 = vsel %vm685, %v818, %v832
        %v834 = vsel %vm687, %v827, %v833
        %s836 = sadd.s32 0, 16
        %s837 = scalar_lea.vmem [#allocation2], %s836
        %838 = vst.msk [vmem:[%s837] sm:$0xff] %vm690, %v834
        %v839 = vld [vmem:[%s292] sm:$0xff]
        %v840 = vld [vmem:[%s292 + $0x8] sm:$0xff]
        %v841 = vld [vmem:[%s292 + $0x10] sm:$0xff]
        %v842 = vld [vmem:[%s292 + $0x18] sm:$0xff]
        %v843 = vld [vmem:[%s292 + $0x20] sm:$0xff]
        %v844 = vld [vmem:[%s292 + $0x28] sm:$0xff]
        %v845 = vld [vmem:[%s292 + $0x30] sm:$0xff]
        %v846 = vld [vmem:[%s292 + $0x38] sm:$0xff]
        %v847 = vld [vmem:[%s292 + $0x40] sm:$0xff]
        %v848 = vld [vmem:[%s292 + $0x48] sm:$0xff]
        %v849 = vld [vmem:[%s292 + $0x50] sm:$0xff]
        %v850 = vld [vmem:[%s292 + $0x58] sm:$0xff]
        %v851 = vld [vmem:[%s292 + $0x60] sm:$0xff]
        %v852 = vld [vmem:[%s292 + $0x68] sm:$0xff]
        %v853 = vld [vmem:[%s292 + $0x70] sm:$0xff]
        %v854 = vld [vmem:[%s292 + $0x78] sm:$0xff]
        %v855 = vmul.f32 %v839, %v534
        %v856 = vmul.f32 %v840, %v534
        %v857 = vmul.f32 %v841, %v534
        %v858 = vmul.f32 %v842, %v534
        %v859 = vmul.f32 %v843, %v534
        %v860 = vmul.f32 %v844, %v534
        %v861 = vmul.f32 %v845, %v534
        %v862 = vmul.f32 %v846, %v534
        %v863 = vmul.f32 %v847, %v534
        %v864 = vmul.f32 %v848, %v534
        %v865 = vmul.f32 %v849, %v534
        %v866 = vmul.f32 %v850, %v534
        %v867 = vmul.f32 %v851, %v534
        %v868 = vmul.f32 %v852, %v534
        %v869 = vmul.f32 %v853, %v534
        %v870 = vmul.f32 %v854, %v534
        %871 = vmax.xlane.f32.xlu0 %v855
        %v872 = vpop.xlane.xlu0 %871
        %873 = vmax.xlane.f32.xlu0 %v856
        %v874 = vpop.xlane.xlu0 %873
        %875 = vmax.xlane.f32.xlu0 %v857
        %v876 = vpop.xlane.xlu0 %875
        %877 = vmax.xlane.f32.xlu0 %v858
        %v878 = vpop.xlane.xlu0 %877
        %879 = vmax.xlane.f32.xlu0 %v859
        %v880 = vpop.xlane.xlu0 %879
        %881 = vmax.xlane.f32.xlu0 %v860
        %v882 = vpop.xlane.xlu0 %881
        %883 = vmax.xlane.f32.xlu0 %v861
        %v884 = vpop.xlane.xlu0 %883
        %885 = vmax.xlane.f32.xlu0 %v862
        %v886 = vpop.xlane.xlu0 %885
        %887 = vmax.xlane.f32.xlu0 %v863
        %v888 = vpop.xlane.xlu0 %887
        %889 = vmax.xlane.f32.xlu0 %v864
        %v890 = vpop.xlane.xlu0 %889
        %891 = vmax.xlane.f32.xlu0 %v865
        %v892 = vpop.xlane.xlu0 %891
        %893 = vmax.xlane.f32.xlu0 %v866
        %v894 = vpop.xlane.xlu0 %893
        %895 = vmax.xlane.f32.xlu0 %v867
        %v896 = vpop.xlane.xlu0 %895
        %897 = vmax.xlane.f32.xlu0 %v868
        %v898 = vpop.xlane.xlu0 %897
        %899 = vmax.xlane.f32.xlu0 %v869
        %v900 = vpop.xlane.xlu0 %899
        %901 = vmax.xlane.f32.xlu0 %v870
        %v902 = vpop.xlane.xlu0 %901
        %v919 = vlaneseq
        %v920 = vshrl.u32 %v919, 7
        %v921 = vsub.s32 %v600, %v920
        %v922 = vrot.slane %v872, %v921
        %v923 = vlaneseq
        %v924 = vshrl.u32 %v923, 7
        %v925 = vsub.s32 %v605, %v924
        %v926 = vrot.slane %v874, %v925
        %v927 = vsel %vm610, %v926, %v922
        %v928 = vlaneseq
        %v929 = vshrl.u32 %v928, 7
        %v930 = vsub.s32 %v600, %v929
        %v931 = vrot.slane %v876, %v930
        %v932 = vlaneseq
        %v933 = vshrl.u32 %v932, 7
        %v934 = vsub.s32 %v605, %v933
        %v935 = vrot.slane %v878, %v934
        %v936 = vsel %vm610, %v935, %v931
        %v937 = vlaneseq
        %v938 = vshrl.u32 %v937, 7
        %v939 = vsub.s32 %v600, %v938
        %v940 = vrot.slane %v880, %v939
        %v941 = vlaneseq
        %v942 = vshrl.u32 %v941, 7
        %v943 = vsub.s32 %v605, %v942
        %v944 = vrot.slane %v882, %v943
        %v945 = vsel %vm610, %v944, %v940
        %v946 = vlaneseq
        %v947 = vshrl.u32 %v946, 7
        %v948 = vsub.s32 %v600, %v947
        %v949 = vrot.slane %v884, %v948
        %v950 = vlaneseq
        %v951 = vshrl.u32 %v950, 7
        %v952 = vsub.s32 %v605, %v951
        %v953 = vrot.slane %v886, %v952
        %v954 = vsel %vm610, %v953, %v949
        %v955 = vlaneseq
        %v956 = vshrl.u32 %v955, 7
        %v957 = vsub.s32 %v600, %v956
        %v958 = vrot.slane %v888, %v957
        %v959 = vlaneseq
        %v960 = vshrl.u32 %v959, 7
        %v961 = vsub.s32 %v605, %v960
        %v962 = vrot.slane %v890, %v961
        %v963 = vsel %vm610, %v962, %v958
        %v964 = vlaneseq
        %v965 = vshrl.u32 %v964, 7
        %v966 = vsub.s32 %v600, %v965
        %v967 = vrot.slane %v892, %v966
        %v968 = vlaneseq
        %v969 = vshrl.u32 %v968, 7
        %v970 = vsub.s32 %v605, %v969
        %v971 = vrot.slane %v894, %v970
        %v972 = vsel %vm610, %v971, %v967
        %v973 = vlaneseq
        %v974 = vshrl.u32 %v973, 7
        %v975 = vsub.s32 %v600, %v974
        %v976 = vrot.slane %v896, %v975
        %v977 = vlaneseq
        %v978 = vshrl.u32 %v977, 7
        %v979 = vsub.s32 %v605, %v978
        %v980 = vrot.slane %v898, %v979
        %v981 = vsel %vm610, %v980, %v976
        %v982 = vlaneseq
        %v983 = vshrl.u32 %v982, 7
        %v984 = vsub.s32 %v600, %v983
        %v985 = vrot.slane %v900, %v984
        %v986 = vlaneseq
        %v987 = vshrl.u32 %v986, 7
        %v988 = vsub.s32 %v605, %v987
        %v989 = vrot.slane %v902, %v988
        %v990 = vsel %vm610, %v989, %v985
        %v991 = vsel %vm675, %v936, %v927
        %v992 = vsel %vm677, %v945, %v991
        %v993 = vsel %vm679, %v954, %v992
        %v994 = vsel %vm681, %v963, %v993
        %v995 = vsel %vm683, %v972, %v994
        %v996 = vsel %vm685, %v981, %v995
        %v997 = vsel %vm687, %v990, %v996
        %s999 = scalar_lea.vmem [#allocation2], 8
        %1000 = vst.msk [vmem:[%s999] sm:$0xff] %vm690, %v997
        %1001 = vadd.xlane.f32.xlu0 %v855
        %v1002 = vpop.xlane.xlu0 %1001
        %1003 = vadd.xlane.f32.xlu0 %v856
        %v1004 = vpop.xlane.xlu0 %1003
        %1005 = vadd.xlane.f32.xlu0 %v857
        %v1006 = vpop.xlane.xlu0 %1005
        %1007 = vadd.xlane.f32.xlu0 %v858
        %v1008 = vpop.xlane.xlu0 %1007
        %1009 = vadd.xlane.f32.xlu0 %v859
        %v1010 = vpop.xlane.xlu0 %1009
        %1011 = vadd.xlane.f32.xlu0 %v860
        %v1012 = vpop.xlane.xlu0 %1011
        %1013 = vadd.xlane.f32.xlu0 %v861
        %v1014 = vpop.xlane.xlu0 %1013
        %1015 = vadd.xlane.f32.xlu0 %v862
        %v1016 = vpop.xlane.xlu0 %1015
        %1017 = vadd.xlane.f32.xlu0 %v863
        %v1018 = vpop.xlane.xlu0 %1017
        %1019 = vadd.xlane.f32.xlu0 %v864
        %v1020 = vpop.xlane.xlu0 %1019
        %1021 = vadd.xlane.f32.xlu0 %v865
        %v1022 = vpop.xlane.xlu0 %1021
        %1023 = vadd.xlane.f32.xlu0 %v866
        %v1024 = vpop.xlane.xlu0 %1023
        %1025 = vadd.xlane.f32.xlu0 %v867
        %v1026 = vpop.xlane.xlu0 %1025
        %1027 = vadd.xlane.f32.xlu0 %v868
        %v1028 = vpop.xlane.xlu0 %1027
        %1029 = vadd.xlane.f32.xlu0 %v869
        %v1030 = vpop.xlane.xlu0 %1029
        %1031 = vadd.xlane.f32.xlu0 %v870
        %v1032 = vpop.xlane.xlu0 %1031
        %v1033 = vmul.f32 %v1002, 0.0078125
        %v1034 = vmul.f32 %v1004, 0.0078125
        %v1035 = vmul.f32 %v1006, 0.0078125
        %v1036 = vmul.f32 %v1008, 0.0078125
        %v1037 = vmul.f32 %v1010, 0.0078125
        %v1038 = vmul.f32 %v1012, 0.0078125
        %v1039 = vmul.f32 %v1014, 0.0078125
        %v1040 = vmul.f32 %v1016, 0.0078125
        %v1041 = vmul.f32 %v1018, 0.0078125
        %v1042 = vmul.f32 %v1020, 0.0078125
        %v1043 = vmul.f32 %v1022, 0.0078125
        %v1044 = vmul.f32 %v1024, 0.0078125
        %v1045 = vmul.f32 %v1026, 0.0078125
        %v1046 = vmul.f32 %v1028, 0.0078125
        %v1047 = vmul.f32 %v1030, 0.0078125
        %v1048 = vmul.f32 %v1032, 0.0078125
        %v1065 = vlaneseq
        %v1066 = vshrl.u32 %v1065, 7
        %v1067 = vsub.s32 %v600, %v1066
        %v1068 = vrot.slane %v1033, %v1067
        %v1069 = vlaneseq
        %v1070 = vshrl.u32 %v1069, 7
        %v1071 = vsub.s32 %v605, %v1070
        %v1072 = vrot.slane %v1034, %v1071
        %v1073 = vsel %vm610, %v1072, %v1068
        %v1074 = vlaneseq
        %v1075 = vshrl.u32 %v1074, 7
        %v1076 = vsub.s32 %v600, %v1075
        %v1077 = vrot.slane %v1035, %v1076
        %v1078 = vlaneseq
        %v1079 = vshrl.u32 %v1078, 7
        %v1080 = vsub.s32 %v605, %v1079
        %v1081 = vrot.slane %v1036, %v1080
        %v1082 = vsel %vm610, %v1081, %v1077
        %v1083 = vlaneseq
        %v1084 = vshrl.u32 %v1083, 7
        %v1085 = vsub.s32 %v600, %v1084
        %v1086 = vrot.slane %v1037, %v1085
        %v1087 = vlaneseq
        %v1088 = vshrl.u32 %v1087, 7
        %v1089 = vsub.s32 %v605, %v1088
        %v1090 = vrot.slane %v1038, %v1089
        %v1091 = vsel %vm610, %v1090, %v1086
        %v1092 = vlaneseq
        %v1093 = vshrl.u32 %v1092, 7
        %v1094 = vsub.s32 %v600, %v1093
        %v1095 = vrot.slane %v1039, %v1094
        %v1096 = vlaneseq
        %v1097 = vshrl.u32 %v1096, 7
        %v1098 = vsub.s32 %v605, %v1097
        %v1099 = vrot.slane %v1040, %v1098
        %v1100 = vsel %vm610, %v1099, %v1095
        %v1101 = vlaneseq
        %v1102 = vshrl.u32 %v1101, 7
        %v1103 = vsub.s32 %v600, %v1102
        %v1104 = vrot.slane %v1041, %v1103
        %v1105 = vlaneseq
        %v1106 = vshrl.u32 %v1105, 7
        %v1107 = vsub.s32 %v605, %v1106
        %v1108 = vrot.slane %v1042, %v1107
        %v1109 = vsel %vm610, %v1108, %v1104
        %v1110 = vlaneseq
        %v1111 = vshrl.u32 %v1110, 7
        %v1112 = vsub.s32 %v600, %v1111
        %v1113 = vrot.slane %v1043, %v1112
        %v1114 = vlaneseq
        %v1115 = vshrl.u32 %v1114, 7
        %v1116 = vsub.s32 %v605, %v1115
        %v1117 = vrot.slane %v1044, %v1116
        %v1118 = vsel %vm610, %v1117, %v1113
        %v1119 = vlaneseq
        %v1120 = vshrl.u32 %v1119, 7
        %v1121 = vsub.s32 %v600, %v1120
        %v1122 = vrot.slane %v1045, %v1121
        %v1123 = vlaneseq
        %v1124 = vshrl.u32 %v1123, 7
        %v1125 = vsub.s32 %v605, %v1124
        %v1126 = vrot.slane %v1046, %v1125
        %v1127 = vsel %vm610, %v1126, %v1122
        %v1128 = vlaneseq
        %v1129 = vshrl.u32 %v1128, 7
        %v1130 = vsub.s32 %v600, %v1129
        %v1131 = vrot.slane %v1047, %v1130
        %v1132 = vlaneseq
        %v1133 = vshrl.u32 %v1132, 7
        %v1134 = vsub.s32 %v605, %v1133
        %v1135 = vrot.slane %v1048, %v1134
        %v1136 = vsel %vm610, %v1135, %v1131
        %v1137 = vsel %vm675, %v1082, %v1073
        %v1138 = vsel %vm677, %v1091, %v1137
        %v1139 = vsel %vm679, %v1100, %v1138
        %v1140 = vsel %vm681, %v1109, %v1139
        %v1141 = vsel %vm683, %v1118, %v1140
        %v1142 = vsel %vm685, %v1127, %v1141
        %v1143 = vsel %vm687, %v1136, %v1142
        %s1145 = sadd.s32 8, 16
        %s1146 = scalar_lea.vmem [#allocation2], %s1145
        %1147 = vst.msk [vmem:[%s1146] sm:$0xff] %vm690, %v1143
        %v1148 = vld [vmem:[#allocation2] sm:$0xff]
        %v1149 = vld [vmem:[#allocation2 + $0x8] sm:$0xff]
        %vm1152 = vcmask 1042432
        %v1153 = vrot.slane %v1148, 5
        %v1154 = vrot.slane %v1149, 5
        %v1155 = vsel %vm1152, %v1153, %v1154
        %v1158 = vsel %vm1152, 0.0, %v1153
        %v1159 = vsel %vm1152, %v1154, 0.0
        %1162 = vrot.lane.b32.xlu0 %v1158, 3
        %v1163 = vpop.permute.xlu0 %1162
        %1164 = vrot.lane.b32.xlu0 %v1155, 3
        %v1165 = vpop.permute.xlu0 %1164
        %1166 = vrot.lane.b32.xlu0 %v1159, 3
        %v1167 = vpop.permute.xlu0 %1166
        %vm1171 = vcmask 23552
        %v1172 = vsel %vm1171, 0.0, %v1163
        %v1173 = vsel %vm1171, 0.0, %v1165
        %v1174 = vsel %vm1171, 0.0, %v1167
        %vm1175 = vcmask 154624
        %v1176 = vsel %vm1175, %v1172, 0.0
        %v1177 = vsel %vm1175, %v1173, 0.0
        %v1178 = vsel %vm1175, %v1174, 0.0
        %s1179 = scalar_lea.vmem [#allocation2], 16
        %v1180 = vld [vmem:[%s1179] sm:$0xff]
        %v1181 = vld [vmem:[%s1179 + $0x8] sm:$0xff]
        %v1184 = vrot.slane %v1180, 5
        %v1185 = vrot.slane %v1181, 5
        %v1186 = vsel %vm1152, %v1184, %v1185
        %v1189 = vsel %vm1152, 0.0, %v1184
        %v1190 = vsel %vm1152, %v1185, 0.0
        %1193 = vrot.lane.b32.xlu0 %v1189, 3
        %v1194 = vpop.permute.xlu0 %1193
        %1195 = vrot.lane.b32.xlu0 %v1186, 3
        %v1196 = vpop.permute.xlu0 %1195
        %1197 = vrot.lane.b32.xlu0 %v1190, 3
        %v1198 = vpop.permute.xlu0 %1197
        %v1202 = vsel %vm1171, 0.0, %v1194
        %v1203 = vsel %vm1171, 0.0, %v1196
        %v1204 = vsel %vm1171, 0.0, %v1198
        %v1205 = vsel %vm1175, %v1202, 0.0
        %v1206 = vsel %vm1175, %v1203, 0.0
        %v1207 = vsel %vm1175, %v1204, 0.0
        %s1208 = sld [smem:[#allocation8]]
        %s1209 = sld [smem:[#allocation8 + $0x31]]
        %v1210 = vstv %s1208
        %v1211 = vmul.f32 %v1210, %v1176
        %v1212 = vmul.f32 %v1210, %v1177
        %v1213 = vadd.f32 %v1211, 0.0
        %v1214 = vadd.f32 %v1212, 0.0
        %v1215 = vstv %s1209
        %v1216 = vmul.f32 %v1215, %v1205
        %v1217 = vmul.f32 %v1215, %v1206
        %v1218 = vadd.f32 %v1213, %v1216
        %v1219 = vadd.f32 %v1214, %v1217
        %s1220 = sld [smem:[#allocation8 + $0x1]]
        %s1221 = sld [smem:[#allocation8 + $0x32]]
        %v1222 = vstv %s1220
        %v1223 = vmul.f32 %v1222, %v1176
        %v1224 = vmul.f32 %v1222, %v1177
        %1227 = vrot.lane.b32.xlu0 %v1223, 127
        %v1228 = vpop.permute.xlu0 %1227
        %1229 = vrot.lane.b32.xlu0 %v1224, 127
        %v1230 = vpop.permute.xlu0 %1229
        %v1233 = vadd.f32 %v1218, %v1228
        %v1234 = vadd.f32 %v1219, %v1230
        %v1235 = vstv %s1221
        %v1236 = vmul.f32 %v1235, %v1205
        %v1237 = vmul.f32 %v1235, %v1206
        %1240 = vrot.lane.b32.xlu0 %v1236, 127
        %v1241 = vpop.permute.xlu0 %1240
        %1242 = vrot.lane.b32.xlu0 %v1237, 127
        %v1243 = vpop.permute.xlu0 %1242
        %v1246 = vadd.f32 %v1233, %v1241
        %v1247 = vadd.f32 %v1234, %v1243
        %s1248 = sld [smem:[#allocation8 + $0x2]]
        %s1249 = sld [smem:[#allocation8 + $0x33]]
        %v1250 = vstv %s1248
        %v1251 = vmul.f32 %v1250, %v1176
        %v1252 = vmul.f32 %v1250, %v1177
        %1255 = vrot.lane.b32.xlu0 %v1251, 126
        %v1256 = vpop.permute.xlu0 %1255
        %1257 = vrot.lane.b32.xlu0 %v1252, 126
        %v1258 = vpop.permute.xlu0 %1257
        %v1261 = vadd.f32 %v1246, %v1256
        %v1262 = vadd.f32 %v1247, %v1258
        %v1263 = vstv %s1249
        %v1264 = vmul.f32 %v1263, %v1205
        %v1265 = vmul.f32 %v1263, %v1206
        %1268 = vrot.lane.b32.xlu0 %v1264, 126
        %v1269 = vpop.permute.xlu0 %1268
        %1270 = vrot.lane.b32.xlu0 %v1265, 126
        %v1271 = vpop.permute.xlu0 %1270
        %v1274 = vadd.f32 %v1261, %v1269
        %v1275 = vadd.f32 %v1262, %v1271
        %s1276 = sld [smem:[#allocation8 + $0x3]]
        %s1277 = sld [smem:[#allocation8 + $0x34]]
        %v1278 = vstv %s1276
        %v1279 = vmul.f32 %v1278, %v1176
        %v1280 = vmul.f32 %v1278, %v1177
        %1283 = vrot.lane.b32.xlu0 %v1279, 125
        %v1284 = vpop.permute.xlu0 %1283
        %1285 = vrot.lane.b32.xlu0 %v1280, 125
        %v1286 = vpop.permute.xlu0 %1285
        %v1289 = vadd.f32 %v1274, %v1284
        %v1290 = vadd.f32 %v1275, %v1286
        %v1291 = vstv %s1277
        %v1292 = vmul.f32 %v1291, %v1205
        %v1293 = vmul.f32 %v1291, %v1206
        %1296 = vrot.lane.b32.xlu0 %v1292, 125
        %v1297 = vpop.permute.xlu0 %1296
        %1298 = vrot.lane.b32.xlu0 %v1293, 125
        %v1299 = vpop.permute.xlu0 %1298
        %v1302 = vadd.f32 %v1289, %v1297
        %v1303 = vadd.f32 %v1290, %v1299
        %s1304 = sld [smem:[#allocation8 + $0x4]]
        %s1305 = sld [smem:[#allocation8 + $0x35]]
        %v1306 = vstv %s1304
        %v1307 = vmul.f32 %v1306, %v1176
        %v1308 = vmul.f32 %v1306, %v1177
        %1311 = vrot.lane.b32.xlu0 %v1307, 124
        %v1312 = vpop.permute.xlu0 %1311
        %1313 = vrot.lane.b32.xlu0 %v1308, 124
        %v1314 = vpop.permute.xlu0 %1313
        %v1317 = vadd.f32 %v1302, %v1312
        %v1318 = vadd.f32 %v1303, %v1314
        %v1319 = vstv %s1305
        %v1320 = vmul.f32 %v1319, %v1205
        %v1321 = vmul.f32 %v1319, %v1206
        %1324 = vrot.lane.b32.xlu0 %v1320, 124
        %v1325 = vpop.permute.xlu0 %1324
        %1326 = vrot.lane.b32.xlu0 %v1321, 124
        %v1327 = vpop.permute.xlu0 %1326
        %v1330 = vadd.f32 %v1317, %v1325
        %v1331 = vadd.f32 %v1318, %v1327
        %s1332 = sld [smem:[#allocation8 + $0x5]]
        %s1333 = sld [smem:[#allocation8 + $0x36]]
        %v1334 = vstv %s1332
        %v1335 = vmul.f32 %v1334, %v1176
        %v1336 = vmul.f32 %v1334, %v1177
        %1339 = vrot.lane.b32.xlu0 %v1335, 123
        %v1340 = vpop.permute.xlu0 %1339
        %1341 = vrot.lane.b32.xlu0 %v1336, 123
        %v1342 = vpop.permute.xlu0 %1341
        %v1345 = vadd.f32 %v1330, %v1340
        %v1346 = vadd.f32 %v1331, %v1342
        %v1347 = vstv %s1333
        %v1348 = vmul.f32 %v1347, %v1205
        %v1349 = vmul.f32 %v1347, %v1206
        %1352 = vrot.lane.b32.xlu0 %v1348, 123
        %v1353 = vpop.permute.xlu0 %1352
        %1354 = vrot.lane.b32.xlu0 %v1349, 123
        %v1355 = vpop.permute.xlu0 %1354
        %v1358 = vadd.f32 %v1345, %v1353
        %v1359 = vadd.f32 %v1346, %v1355
        %s1360 = sld [smem:[#allocation8 + $0x6]]
        %s1361 = sld [smem:[#allocation8 + $0x37]]
        %v1362 = vstv %s1360
        %v1363 = vmul.f32 %v1362, %v1176
        %v1364 = vmul.f32 %v1362, %v1177
        %1367 = vrot.lane.b32.xlu0 %v1363, 122
        %v1368 = vpop.permute.xlu0 %1367
        %1369 = vrot.lane.b32.xlu0 %v1364, 122
        %v1370 = vpop.permute.xlu0 %1369
        %v1373 = vadd.f32 %v1358, %v1368
        %v1374 = vadd.f32 %v1359, %v1370
        %v1375 = vstv %s1361
        %v1376 = vmul.f32 %v1375, %v1205
        %v1377 = vmul.f32 %v1375, %v1206
        %1380 = vrot.lane.b32.xlu0 %v1376, 122
        %v1381 = vpop.permute.xlu0 %1380
        %1382 = vrot.lane.b32.xlu0 %v1377, 122
        %v1383 = vpop.permute.xlu0 %1382
        %v1386 = vadd.f32 %v1373, %v1381
        %v1387 = vadd.f32 %v1374, %v1383
        %s1388 = sld [smem:[#allocation8 + $0x7]]
        %s1389 = sld [smem:[#allocation8 + $0x38]]
        %v1390 = vstv %s1388
        %v1391 = vmul.f32 %v1390, %v1176
        %v1392 = vmul.f32 %v1390, %v1177
        %v1393 = vmul.f32 %v1390, %v1178
        %vm1397 = vcmask 1046528
        %v1398 = vrot.slane %v1391, 1
        %v1399 = vrot.slane %v1392, 1
        %v1400 = vsel %vm1397, %v1398, %v1399
        %v1401 = vrot.slane %v1393, 1
        %v1402 = vsel %vm1397, %v1399, %v1401
        %v1405 = vadd.f32 %v1386, %v1400
        %v1406 = vadd.f32 %v1387, %v1402
        %v1407 = vstv %s1389
        %v1408 = vmul.f32 %v1407, %v1205
        %v1409 = vmul.f32 %v1407, %v1206
        %v1410 = vmul.f32 %v1407, %v1207
        %v1414 = vrot.slane %v1408, 1
        %v1415 = vrot.slane %v1409, 1
        %v1416 = vsel %vm1397, %v1414, %v1415
        %v1417 = vrot.slane %v1410, 1
        %v1418 = vsel %vm1397, %v1415, %v1417
        %v1421 = vadd.f32 %v1405, %v1416
        %v1422 = vadd.f32 %v1406, %v1418
        %s1423 = sld [smem:[#allocation8 + $0x8]]
        %s1424 = sld [smem:[#allocation8 + $0x39]]
        %v1425 = vstv %s1423
        %v1426 = vmul.f32 %v1425, %v1176
        %v1427 = vmul.f32 %v1425, %v1177
        %v1428 = vmul.f32 %v1425, %v1178
        %v1432 = vrot.slane %v1426, 1
        %v1433 = vrot.slane %v1427, 1
        %v1434 = vsel %vm1397, %v1432, %v1433
        %v1435 = vrot.slane %v1428, 1
        %v1436 = vsel %vm1397, %v1433, %v1435
        %1437 = vrot.lane.b32.xlu0 %v1434, 127
        %v1438 = vpop.permute.xlu0 %1437
        %1439 = vrot.lane.b32.xlu0 %v1436, 127
        %v1440 = vpop.permute.xlu0 %1439
        %v1443 = vadd.f32 %v1421, %v1438
        %v1444 = vadd.f32 %v1422, %v1440
        %v1445 = vstv %s1424
        %v1446 = vmul.f32 %v1445, %v1205
        %v1447 = vmul.f32 %v1445, %v1206
        %v1448 = vmul.f32 %v1445, %v1207
        %v1452 = vrot.slane %v1446, 1
        %v1453 = vrot.slane %v1447, 1
        %v1454 = vsel %vm1397, %v1452, %v1453
        %v1455 = vrot.slane %v1448, 1
        %v1456 = vsel %vm1397, %v1453, %v1455
        %1457 = vrot.lane.b32.xlu0 %v1454, 127
        %v1458 = vpop.permute.xlu0 %1457
        %1459 = vrot.lane.b32.xlu0 %v1456, 127
        %v1460 = vpop.permute.xlu0 %1459
        %v1463 = vadd.f32 %v1443, %v1458
        %v1464 = vadd.f32 %v1444, %v1460
        %s1465 = sld [smem:[#allocation8 + $0x9]]
        %s1466 = sld [smem:[#allocation8 + $0x3a]]
        %v1467 = vstv %s1465
        %v1468 = vmul.f32 %v1467, %v1176
        %v1469 = vmul.f32 %v1467, %v1177
        %v1470 = vmul.f32 %v1467, %v1178
        %v1474 = vrot.slane %v1468, 1
        %v1475 = vrot.slane %v1469, 1
        %v1476 = vsel %vm1397, %v1474, %v1475
        %v1477 = vrot.slane %v1470, 1
        %v1478 = vsel %vm1397, %v1475, %v1477
        %1479 = vrot.lane.b32.xlu0 %v1476, 126
        %v1480 = vpop.permute.xlu0 %1479
        %1481 = vrot.lane.b32.xlu0 %v1478, 126
        %v1482 = vpop.permute.xlu0 %1481
        %v1485 = vadd.f32 %v1463, %v1480
        %v1486 = vadd.f32 %v1464, %v1482
        %v1487 = vstv %s1466
        %v1488 = vmul.f32 %v1487, %v1205
        %v1489 = vmul.f32 %v1487, %v1206
        %v1490 = vmul.f32 %v1487, %v1207
        %v1494 = vrot.slane %v1488, 1
        %v1495 = vrot.slane %v1489, 1
        %v1496 = vsel %vm1397, %v1494, %v1495
        %v1497 = vrot.slane %v1490, 1
        %v1498 = vsel %vm1397, %v1495, %v1497
        %1499 = vrot.lane.b32.xlu0 %v1496, 126
        %v1500 = vpop.permute.xlu0 %1499
        %1501 = vrot.lane.b32.xlu0 %v1498, 126
        %v1502 = vpop.permute.xlu0 %1501
        %v1505 = vadd.f32 %v1485, %v1500
        %v1506 = vadd.f32 %v1486, %v1502
        %s1507 = sld [smem:[#allocation8 + $0xa]]
        %s1508 = sld [smem:[#allocation8 + $0x3b]]
        %v1509 = vstv %s1507
        %v1510 = vmul.f32 %v1509, %v1176
        %v1511 = vmul.f32 %v1509, %v1177
        %v1512 = vmul.f32 %v1509, %v1178
        %v1516 = vrot.slane %v1510, 1
        %v1517 = vrot.slane %v1511, 1
        %v1518 = vsel %vm1397, %v1516, %v1517
        %v1519 = vrot.slane %v1512, 1
        %v1520 = vsel %vm1397, %v1517, %v1519
        %1521 = vrot.lane.b32.xlu0 %v1518, 125
        %v1522 = vpop.permute.xlu0 %1521
        %1523 = vrot.lane.b32.xlu0 %v1520, 125
        %v1524 = vpop.permute.xlu0 %1523
        %v1527 = vadd.f32 %v1505, %v1522
        %v1528 = vadd.f32 %v1506, %v1524
        %v1529 = vstv %s1508
        %v1530 = vmul.f32 %v1529, %v1205
        %v1531 = vmul.f32 %v1529, %v1206
        %v1532 = vmul.f32 %v1529, %v1207
        %v1536 = vrot.slane %v1530, 1
        %v1537 = vrot.slane %v1531, 1
        %v1538 = vsel %vm1397, %v1536, %v1537
        %v1539 = vrot.slane %v1532, 1
        %v1540 = vsel %vm1397, %v1537, %v1539
        %1541 = vrot.lane.b32.xlu0 %v1538, 125
        %v1542 = vpop.permute.xlu0 %1541
        %1543 = vrot.lane.b32.xlu0 %v1540, 125
        %v1544 = vpop.permute.xlu0 %1543
        %v1547 = vadd.f32 %v1527, %v1542
        %v1548 = vadd.f32 %v1528, %v1544
        %s1549 = sld [smem:[#allocation8 + $0xb]]
        %s1550 = sld [smem:[#allocation8 + $0x3c]]
        %v1551 = vstv %s1549
        %v1552 = vmul.f32 %v1551, %v1176
        %v1553 = vmul.f32 %v1551, %v1177
        %v1554 = vmul.f32 %v1551, %v1178
        %v1558 = vrot.slane %v1552, 1
        %v1559 = vrot.slane %v1553, 1
        %v1560 = vsel %vm1397, %v1558, %v1559
        %v1561 = vrot.slane %v1554, 1
        %v1562 = vsel %vm1397, %v1559, %v1561
        %1563 = vrot.lane.b32.xlu0 %v1560, 124
        %v1564 = vpop.permute.xlu0 %1563
        %1565 = vrot.lane.b32.xlu0 %v1562, 124
        %v1566 = vpop.permute.xlu0 %1565
        %v1569 = vadd.f32 %v1547, %v1564
        %v1570 = vadd.f32 %v1548, %v1566
        %v1571 = vstv %s1550
        %v1572 = vmul.f32 %v1571, %v1205
        %v1573 = vmul.f32 %v1571, %v1206
        %v1574 = vmul.f32 %v1571, %v1207
        %v1578 = vrot.slane %v1572, 1
        %v1579 = vrot.slane %v1573, 1
        %v1580 = vsel %vm1397, %v1578, %v1579
        %v1581 = vrot.slane %v1574, 1
        %v1582 = vsel %vm1397, %v1579, %v1581
        %1583 = vrot.lane.b32.xlu0 %v1580, 124
        %v1584 = vpop.permute.xlu0 %1583
        %1585 = vrot.lane.b32.xlu0 %v1582, 124
        %v1586 = vpop.permute.xlu0 %1585
        %v1589 = vadd.f32 %v1569, %v1584
        %v1590 = vadd.f32 %v1570, %v1586
        %s1591 = sld [smem:[#allocation8 + $0xc]]
        %s1592 = sld [smem:[#allocation8 + $0x3d]]
        %v1593 = vstv %s1591
        %v1594 = vmul.f32 %v1593, %v1176
        %v1595 = vmul.f32 %v1593, %v1177
        %v1596 = vmul.f32 %v1593, %v1178
        %v1600 = vrot.slane %v1594, 1
        %v1601 = vrot.slane %v1595, 1
        %v1602 = vsel %vm1397, %v1600, %v1601
        %v1603 = vrot.slane %v1596, 1
        %v1604 = vsel %vm1397, %v1601, %v1603
        %1605 = vrot.lane.b32.xlu0 %v1602, 123
        %v1606 = vpop.permute.xlu0 %1605
        %1607 = vrot.lane.b32.xlu0 %v1604, 123
        %v1608 = vpop.permute.xlu0 %1607
        %v1611 = vadd.f32 %v1589, %v1606
        %v1612 = vadd.f32 %v1590, %v1608
        %v1613 = vstv %s1592
        %v1614 = vmul.f32 %v1613, %v1205
        %v1615 = vmul.f32 %v1613, %v1206
        %v1616 = vmul.f32 %v1613, %v1207
        %v1620 = vrot.slane %v1614, 1
        %v1621 = vrot.slane %v1615, 1
        %v1622 = vsel %vm1397, %v1620, %v1621
        %v1623 = vrot.slane %v1616, 1
        %v1624 = vsel %vm1397, %v1621, %v1623
        %1625 = vrot.lane.b32.xlu0 %v1622, 123
        %v1626 = vpop.permute.xlu0 %1625
        %1627 = vrot.lane.b32.xlu0 %v1624, 123
        %v1628 = vpop.permute.xlu0 %1627
        %v1631 = vadd.f32 %v1611, %v1626
        %v1632 = vadd.f32 %v1612, %v1628
        %s1633 = sld [smem:[#allocation8 + $0xd]]
        %s1634 = sld [smem:[#allocation8 + $0x3e]]
        %v1635 = vstv %s1633
        %v1636 = vmul.f32 %v1635, %v1176
        %v1637 = vmul.f32 %v1635, %v1177
        %v1638 = vmul.f32 %v1635, %v1178
        %v1642 = vrot.slane %v1636, 1
        %v1643 = vrot.slane %v1637, 1
        %v1644 = vsel %vm1397, %v1642, %v1643
        %v1645 = vrot.slane %v1638, 1
        %v1646 = vsel %vm1397, %v1643, %v1645
        %1647 = vrot.lane.b32.xlu0 %v1644, 122
        %v1648 = vpop.permute.xlu0 %1647
        %1649 = vrot.lane.b32.xlu0 %v1646, 122
        %v1650 = vpop.permute.xlu0 %1649
        %v1653 = vadd.f32 %v1631, %v1648
        %v1654 = vadd.f32 %v1632, %v1650
        %v1655 = vstv %s1634
        %v1656 = vmul.f32 %v1655, %v1205
        %v1657 = vmul.f32 %v1655, %v1206
        %v1658 = vmul.f32 %v1655, %v1207
        %v1662 = vrot.slane %v1656, 1
        %v1663 = vrot.slane %v1657, 1
        %v1664 = vsel %vm1397, %v1662, %v1663
        %v1665 = vrot.slane %v1658, 1
        %v1666 = vsel %vm1397, %v1663, %v1665
        %1667 = vrot.lane.b32.xlu0 %v1664, 122
        %v1668 = vpop.permute.xlu0 %1667
        %1669 = vrot.lane.b32.xlu0 %v1666, 122
        %v1670 = vpop.permute.xlu0 %1669
        %v1673 = vadd.f32 %v1653, %v1668
        %v1674 = vadd.f32 %v1654, %v1670
        %s1675 = sld [smem:[#allocation8 + $0xe]]
        %s1676 = sld [smem:[#allocation8 + $0x3f]]
        %v1677 = vstv %s1675
        %v1678 = vmul.f32 %v1677, %v1176
        %v1679 = vmul.f32 %v1677, %v1177
        %v1680 = vmul.f32 %v1677, %v1178
        %vm1684 = vcmask 1045504
        %v1685 = vrot.slane %v1678, 2
        %v1686 = vrot.slane %v1679, 2
        %v1687 = vsel %vm1684, %v1685, %v1686
        %v1688 = vrot.slane %v1680, 2
        %v1689 = vsel %vm1684, %v1686, %v1688
        %v1692 = vadd.f32 %v1673, %v1687
        %v1693 = vadd.f32 %v1674, %v1689
        %v1694 = vstv %s1676
        %v1695 = vmul.f32 %v1694, %v1205
        %v1696 = vmul.f32 %v1694, %v1206
        %v1697 = vmul.f32 %v1694, %v1207
        %v1701 = vrot.slane %v1695, 2
        %v1702 = vrot.slane %v1696, 2
        %v1703 = vsel %vm1684, %v1701, %v1702
        %v1704 = vrot.slane %v1697, 2
        %v1705 = vsel %vm1684, %v1702, %v1704
        %v1708 = vadd.f32 %v1692, %v1703
        %v1709 = vadd.f32 %v1693, %v1705
        %s1710 = sld [smem:[#allocation8 + $0xf]]
        %s1711 = sld [smem:[#allocation8 + $0x40]]
        %v1712 = vstv %s1710
        %v1713 = vmul.f32 %v1712, %v1176
        %v1714 = vmul.f32 %v1712, %v1177
        %v1715 = vmul.f32 %v1712, %v1178
        %v1719 = vrot.slane %v1713, 2
        %v1720 = vrot.slane %v1714, 2
        %v1721 = vsel %vm1684, %v1719, %v1720
        %v1722 = vrot.slane %v1715, 2
        %v1723 = vsel %vm1684, %v1720, %v1722
        %1724 = vrot.lane.b32.xlu0 %v1721, 127
        %v1725 = vpop.permute.xlu0 %1724
        %1726 = vrot.lane.b32.xlu0 %v1723, 127
        %v1727 = vpop.permute.xlu0 %1726
        %v1730 = vadd.f32 %v1708, %v1725
        %v1731 = vadd.f32 %v1709, %v1727
        %v1732 = vstv %s1711
        %v1733 = vmul.f32 %v1732, %v1205
        %v1734 = vmul.f32 %v1732, %v1206
        %v1735 = vmul.f32 %v1732, %v1207
        %v1739 = vrot.slane %v1733, 2
        %v1740 = vrot.slane %v1734, 2
        %v1741 = vsel %vm1684, %v1739, %v1740
        %v1742 = vrot.slane %v1735, 2
        %v1743 = vsel %vm1684, %v1740, %v1742
        %1744 = vrot.lane.b32.xlu0 %v1741, 127
        %v1745 = vpop.permute.xlu0 %1744
        %1746 = vrot.lane.b32.xlu0 %v1743, 127
        %v1747 = vpop.permute.xlu0 %1746
        %v1750 = vadd.f32 %v1730, %v1745
        %v1751 = vadd.f32 %v1731, %v1747
        %s1752 = sld [smem:[#allocation8 + $0x10]]
        %s1753 = sld [smem:[#allocation8 + $0x41]]
        %v1754 = vstv %s1752
        %v1755 = vmul.f32 %v1754, %v1176
        %v1756 = vmul.f32 %v1754, %v1177
        %v1757 = vmul.f32 %v1754, %v1178
        %v1761 = vrot.slane %v1755, 2
        %v1762 = vrot.slane %v1756, 2
        %v1763 = vsel %vm1684, %v1761, %v1762
        %v1764 = vrot.slane %v1757, 2
        %v1765 = vsel %vm1684, %v1762, %v1764
        %1766 = vrot.lane.b32.xlu0 %v1763, 126
        %v1767 = vpop.permute.xlu0 %1766
        %1768 = vrot.lane.b32.xlu0 %v1765, 126
        %v1769 = vpop.permute.xlu0 %1768
        %v1772 = vadd.f32 %v1750, %v1767
        %v1773 = vadd.f32 %v1751, %v1769
        %v1774 = vstv %s1753
        %v1775 = vmul.f32 %v1774, %v1205
        %v1776 = vmul.f32 %v1774, %v1206
        %v1777 = vmul.f32 %v1774, %v1207
        %v1781 = vrot.slane %v1775, 2
        %v1782 = vrot.slane %v1776, 2
        %v1783 = vsel %vm1684, %v1781, %v1782
        %v1784 = vrot.slane %v1777, 2
        %v1785 = vsel %vm1684, %v1782, %v1784
        %1786 = vrot.lane.b32.xlu0 %v1783, 126
        %v1787 = vpop.permute.xlu0 %1786
        %1788 = vrot.lane.b32.xlu0 %v1785, 126
        %v1789 = vpop.permute.xlu0 %1788
        %v1792 = vadd.f32 %v1772, %v1787
        %v1793 = vadd.f32 %v1773, %v1789
        %s1794 = sld [smem:[#allocation8 + $0x11]]
        %s1795 = sld [smem:[#allocation8 + $0x42]]
        %v1796 = vstv %s1794
        %v1797 = vmul.f32 %v1796, %v1176
        %v1798 = vmul.f32 %v1796, %v1177
        %v1799 = vmul.f32 %v1796, %v1178
        %v1803 = vrot.slane %v1797, 2
        %v1804 = vrot.slane %v1798, 2
        %v1805 = vsel %vm1684, %v1803, %v1804
        %v1806 = vrot.slane %v1799, 2
        %v1807 = vsel %vm1684, %v1804, %v1806
        %1808 = vrot.lane.b32.xlu0 %v1805, 125
        %v1809 = vpop.permute.xlu0 %1808
        %1810 = vrot.lane.b32.xlu0 %v1807, 125
        %v1811 = vpop.permute.xlu0 %1810
        %v1814 = vadd.f32 %v1792, %v1809
        %v1815 = vadd.f32 %v1793, %v1811
        %v1816 = vstv %s1795
        %v1817 = vmul.f32 %v1816, %v1205
        %v1818 = vmul.f32 %v1816, %v1206
        %v1819 = vmul.f32 %v1816, %v1207
        %v1823 = vrot.slane %v1817, 2
        %v1824 = vrot.slane %v1818, 2
        %v1825 = vsel %vm1684, %v1823, %v1824
        %v1826 = vrot.slane %v1819, 2
        %v1827 = vsel %vm1684, %v1824, %v1826
        %1828 = vrot.lane.b32.xlu0 %v1825, 125
        %v1829 = vpop.permute.xlu0 %1828
        %1830 = vrot.lane.b32.xlu0 %v1827, 125
        %v1831 = vpop.permute.xlu0 %1830
        %v1834 = vadd.f32 %v1814, %v1829
        %v1835 = vadd.f32 %v1815, %v1831
        %s1836 = sld [smem:[#allocation8 + $0x12]]
        %s1837 = sld [smem:[#allocation8 + $0x43]]
        %v1838 = vstv %s1836
        %v1839 = vmul.f32 %v1838, %v1176
        %v1840 = vmul.f32 %v1838, %v1177
        %v1841 = vmul.f32 %v1838, %v1178
        %v1845 = vrot.slane %v1839, 2
        %v1846 = vrot.slane %v1840, 2
        %v1847 = vsel %vm1684, %v1845, %v1846
        %v1848 = vrot.slane %v1841, 2
        %v1849 = vsel %vm1684, %v1846, %v1848
        %1850 = vrot.lane.b32.xlu0 %v1847, 124
        %v1851 = vpop.permute.xlu0 %1850
        %1852 = vrot.lane.b32.xlu0 %v1849, 124
        %v1853 = vpop.permute.xlu0 %1852
        %v1856 = vadd.f32 %v1834, %v1851
        %v1857 = vadd.f32 %v1835, %v1853
        %v1858 = vstv %s1837
        %v1859 = vmul.f32 %v1858, %v1205
        %v1860 = vmul.f32 %v1858, %v1206
        %v1861 = vmul.f32 %v1858, %v1207
        %v1865 = vrot.slane %v1859, 2
        %v1866 = vrot.slane %v1860, 2
        %v1867 = vsel %vm1684, %v1865, %v1866
        %v1868 = vrot.slane %v1861, 2
        %v1869 = vsel %vm1684, %v1866, %v1868
        %1870 = vrot.lane.b32.xlu0 %v1867, 124
        %v1871 = vpop.permute.xlu0 %1870
        %1872 = vrot.lane.b32.xlu0 %v1869, 124
        %v1873 = vpop.permute.xlu0 %1872
        %v1876 = vadd.f32 %v1856, %v1871
        %v1877 = vadd.f32 %v1857, %v1873
        %s1878 = sld [smem:[#allocation8 + $0x13]]
        %s1879 = sld [smem:[#allocation8 + $0x44]]
        %v1880 = vstv %s1878
        %v1881 = vmul.f32 %v1880, %v1176
        %v1882 = vmul.f32 %v1880, %v1177
        %v1883 = vmul.f32 %v1880, %v1178
        %v1887 = vrot.slane %v1881, 2
        %v1888 = vrot.slane %v1882, 2
        %v1889 = vsel %vm1684, %v1887, %v1888
        %v1890 = vrot.slane %v1883, 2
        %v1891 = vsel %vm1684, %v1888, %v1890
        %1892 = vrot.lane.b32.xlu0 %v1889, 123
        %v1893 = vpop.permute.xlu0 %1892
        %1894 = vrot.lane.b32.xlu0 %v1891, 123
        %v1895 = vpop.permute.xlu0 %1894
        %v1898 = vadd.f32 %v1876, %v1893
        %v1899 = vadd.f32 %v1877, %v1895
        %v1900 = vstv %s1879
        %v1901 = vmul.f32 %v1900, %v1205
        %v1902 = vmul.f32 %v1900, %v1206
        %v1903 = vmul.f32 %v1900, %v1207
        %v1907 = vrot.slane %v1901, 2
        %v1908 = vrot.slane %v1902, 2
        %v1909 = vsel %vm1684, %v1907, %v1908
        %v1910 = vrot.slane %v1903, 2
        %v1911 = vsel %vm1684, %v1908, %v1910
        %1912 = vrot.lane.b32.xlu0 %v1909, 123
        %v1913 = vpop.permute.xlu0 %1912
        %1914 = vrot.lane.b32.xlu0 %v1911, 123
        %v1915 = vpop.permute.xlu0 %1914
        %v1918 = vadd.f32 %v1898, %v1913
        %v1919 = vadd.f32 %v1899, %v1915
        %s1920 = sld [smem:[#allocation8 + $0x14]]
        %s1921 = sld [smem:[#allocation8 + $0x45]]
        %v1922 = vstv %s1920
        %v1923 = vmul.f32 %v1922, %v1176
        %v1924 = vmul.f32 %v1922, %v1177
        %v1925 = vmul.f32 %v1922, %v1178
        %v1929 = vrot.slane %v1923, 2
        %v1930 = vrot.slane %v1924, 2
        %v1931 = vsel %vm1684, %v1929, %v1930
        %v1932 = vrot.slane %v1925, 2
        %v1933 = vsel %vm1684, %v1930, %v1932
        %1934 = vrot.lane.b32.xlu0 %v1931, 122
        %v1935 = vpop.permute.xlu0 %1934
        %1936 = vrot.lane.b32.xlu0 %v1933, 122
        %v1937 = vpop.permute.xlu0 %1936
        %v1940 = vadd.f32 %v1918, %v1935
        %v1941 = vadd.f32 %v1919, %v1937
        %v1942 = vstv %s1921
        %v1943 = vmul.f32 %v1942, %v1205
        %v1944 = vmul.f32 %v1942, %v1206
        %v1945 = vmul.f32 %v1942, %v1207
        %v1949 = vrot.slane %v1943, 2
        %v1950 = vrot.slane %v1944, 2
        %v1951 = vsel %vm1684, %v1949, %v1950
        %v1952 = vrot.slane %v1945, 2
        %v1953 = vsel %vm1684, %v1950, %v1952
        %1954 = vrot.lane.b32.xlu0 %v1951, 122
        %v1955 = vpop.permute.xlu0 %1954
        %1956 = vrot.lane.b32.xlu0 %v1953, 122
        %v1957 = vpop.permute.xlu0 %1956
        %v1960 = vadd.f32 %v1940, %v1955
        %v1961 = vadd.f32 %v1941, %v1957
        %s1962 = sld [smem:[#allocation8 + $0x15]]
        %s1963 = sld [smem:[#allocation8 + $0x46]]
        %v1964 = vstv %s1962
        %v1965 = vmul.f32 %v1964, %v1176
        %v1966 = vmul.f32 %v1964, %v1177
        %v1967 = vmul.f32 %v1964, %v1178
        %vm1971 = vcmask 1044480
        %v1972 = vrot.slane %v1965, 3
        %v1973 = vrot.slane %v1966, 3
        %v1974 = vsel %vm1971, %v1972, %v1973
        %v1975 = vrot.slane %v1967, 3
        %v1976 = vsel %vm1971, %v1973, %v1975
        %v1979 = vadd.f32 %v1960, %v1974
        %v1980 = vadd.f32 %v1961, %v1976
        %v1981 = vstv %s1963
        %v1982 = vmul.f32 %v1981, %v1205
        %v1983 = vmul.f32 %v1981, %v1206
        %v1984 = vmul.f32 %v1981, %v1207
        %v1988 = vrot.slane %v1982, 3
        %v1989 = vrot.slane %v1983, 3
        %v1990 = vsel %vm1971, %v1988, %v1989
        %v1991 = vrot.slane %v1984, 3
        %v1992 = vsel %vm1971, %v1989, %v1991
        %v1995 = vadd.f32 %v1979, %v1990
        %v1996 = vadd.f32 %v1980, %v1992
        %s1997 = sld [smem:[#allocation8 + $0x16]]
        %s1998 = sld [smem:[#allocation8 + $0x47]]
        %v1999 = vstv %s1997
        %v2000 = vmul.f32 %v1999, %v1176
        %v2001 = vmul.f32 %v1999, %v1177
        %v2002 = vmul.f32 %v1999, %v1178
        %v2006 = vrot.slane %v2000, 3
        %v2007 = vrot.slane %v2001, 3
        %v2008 = vsel %vm1971, %v2006, %v2007
        %v2009 = vrot.slane %v2002, 3
        %v2010 = vsel %vm1971, %v2007, %v2009
        %2011 = vrot.lane.b32.xlu0 %v2008, 127
        %v2012 = vpop.permute.xlu0 %2011
        %2013 = vrot.lane.b32.xlu0 %v2010, 127
        %v2014 = vpop.permute.xlu0 %2013
        %v2017 = vadd.f32 %v1995, %v2012
        %v2018 = vadd.f32 %v1996, %v2014
        %v2019 = vstv %s1998
        %v2020 = vmul.f32 %v2019, %v1205
        %v2021 = vmul.f32 %v2019, %v1206
        %v2022 = vmul.f32 %v2019, %v1207
        %v2026 = vrot.slane %v2020, 3
        %v2027 = vrot.slane %v2021, 3
        %v2028 = vsel %vm1971, %v2026, %v2027
        %v2029 = vrot.slane %v2022, 3
        %v2030 = vsel %vm1971, %v2027, %v2029
        %2031 = vrot.lane.b32.xlu0 %v2028, 127
        %v2032 = vpop.permute.xlu0 %2031
        %2033 = vrot.lane.b32.xlu0 %v2030, 127
        %v2034 = vpop.permute.xlu0 %2033
        %v2037 = vadd.f32 %v2017, %v2032
        %v2038 = vadd.f32 %v2018, %v2034
        %s2039 = sld [smem:[#allocation8 + $0x17]]
        %s2040 = sld [smem:[#allocation8 + $0x48]]
        %v2041 = vstv %s2039
        %v2042 = vmul.f32 %v2041, %v1176
        %v2043 = vmul.f32 %v2041, %v1177
        %v2044 = vmul.f32 %v2041, %v1178
        %v2048 = vrot.slane %v2042, 3
        %v2049 = vrot.slane %v2043, 3
        %v2050 = vsel %vm1971, %v2048, %v2049
        %v2051 = vrot.slane %v2044, 3
        %v2052 = vsel %vm1971, %v2049, %v2051
        %2053 = vrot.lane.b32.xlu0 %v2050, 126
        %v2054 = vpop.permute.xlu0 %2053
        %2055 = vrot.lane.b32.xlu0 %v2052, 126
        %v2056 = vpop.permute.xlu0 %2055
        %v2059 = vadd.f32 %v2037, %v2054
        %v2060 = vadd.f32 %v2038, %v2056
        %v2061 = vstv %s2040
        %v2062 = vmul.f32 %v2061, %v1205
        %v2063 = vmul.f32 %v2061, %v1206
        %v2064 = vmul.f32 %v2061, %v1207
        %v2068 = vrot.slane %v2062, 3
        %v2069 = vrot.slane %v2063, 3
        %v2070 = vsel %vm1971, %v2068, %v2069
        %v2071 = vrot.slane %v2064, 3
        %v2072 = vsel %vm1971, %v2069, %v2071
        %2073 = vrot.lane.b32.xlu0 %v2070, 126
        %v2074 = vpop.permute.xlu0 %2073
        %2075 = vrot.lane.b32.xlu0 %v2072, 126
        %v2076 = vpop.permute.xlu0 %2075
        %v2079 = vadd.f32 %v2059, %v2074
        %v2080 = vadd.f32 %v2060, %v2076
        %s2081 = sld [smem:[#allocation8 + $0x18]]
        %s2082 = sld [smem:[#allocation8 + $0x49]]
        %v2083 = vstv %s2081
        %v2084 = vmul.f32 %v2083, %v1176
        %v2085 = vmul.f32 %v2083, %v1177
        %v2086 = vmul.f32 %v2083, %v1178
        %v2090 = vrot.slane %v2084, 3
        %v2091 = vrot.slane %v2085, 3
        %v2092 = vsel %vm1971, %v2090, %v2091
        %v2093 = vrot.slane %v2086, 3
        %v2094 = vsel %vm1971, %v2091, %v2093
        %2095 = vrot.lane.b32.xlu0 %v2092, 125
        %v2096 = vpop.permute.xlu0 %2095
        %2097 = vrot.lane.b32.xlu0 %v2094, 125
        %v2098 = vpop.permute.xlu0 %2097
        %v2101 = vadd.f32 %v2079, %v2096
        %v2102 = vadd.f32 %v2080, %v2098
        %v2103 = vstv %s2082
        %v2104 = vmul.f32 %v2103, %v1205
        %v2105 = vmul.f32 %v2103, %v1206
        %v2106 = vmul.f32 %v2103, %v1207
        %v2110 = vrot.slane %v2104, 3
        %v2111 = vrot.slane %v2105, 3
        %v2112 = vsel %vm1971, %v2110, %v2111
        %v2113 = vrot.slane %v2106, 3
        %v2114 = vsel %vm1971, %v2111, %v2113
        %2115 = vrot.lane.b32.xlu0 %v2112, 125
        %v2116 = vpop.permute.xlu0 %2115
        %2117 = vrot.lane.b32.xlu0 %v2114, 125
        %v2118 = vpop.permute.xlu0 %2117
        %v2121 = vadd.f32 %v2101, %v2116
        %v2122 = vadd.f32 %v2102, %v2118
        %s2123 = sld [smem:[#allocation8 + $0x19]]
        %s2124 = sld [smem:[#allocation8 + $0x4a]]
        %v2125 = vstv %s2123
        %v2126 = vmul.f32 %v2125, %v1176
        %v2127 = vmul.f32 %v2125, %v1177
        %v2128 = vmul.f32 %v2125, %v1178
        %v2132 = vrot.slane %v2126, 3
        %v2133 = vrot.slane %v2127, 3
        %v2134 = vsel %vm1971, %v2132, %v2133
        %v2135 = vrot.slane %v2128, 3
        %v2136 = vsel %vm1971, %v2133, %v2135
        %2137 = vrot.lane.b32.xlu0 %v2134, 124
        %v2138 = vpop.permute.xlu0 %2137
        %2139 = vrot.lane.b32.xlu0 %v2136, 124
        %v2140 = vpop.permute.xlu0 %2139
        %v2143 = vadd.f32 %v2121, %v2138
        %v2144 = vadd.f32 %v2122, %v2140
        %v2145 = vstv %s2124
        %v2146 = vmul.f32 %v2145, %v1205
        %v2147 = vmul.f32 %v2145, %v1206
        %v2148 = vmul.f32 %v2145, %v1207
        %v2152 = vrot.slane %v2146, 3
        %v2153 = vrot.slane %v2147, 3
        %v2154 = vsel %vm1971, %v2152, %v2153
        %v2155 = vrot.slane %v2148, 3
        %v2156 = vsel %vm1971, %v2153, %v2155
        %2157 = vrot.lane.b32.xlu0 %v2154, 124
        %v2158 = vpop.permute.xlu0 %2157
        %2159 = vrot.lane.b32.xlu0 %v2156, 124
        %v2160 = vpop.permute.xlu0 %2159
        %v2163 = vadd.f32 %v2143, %v2158
        %v2164 = vadd.f32 %v2144, %v2160
        %s2165 = sld [smem:[#allocation8 + $0x1a]]
        %s2166 = sld [smem:[#allocation8 + $0x4b]]
        %v2167 = vstv %s2165
        %v2168 = vmul.f32 %v2167, %v1176
        %v2169 = vmul.f32 %v2167, %v1177
        %v2170 = vmul.f32 %v2167, %v1178
        %v2174 = vrot.slane %v2168, 3
        %v2175 = vrot.slane %v2169, 3
        %v2176 = vsel %vm1971, %v2174, %v2175
        %v2177 = vrot.slane %v2170, 3
        %v2178 = vsel %vm1971, %v2175, %v2177
        %2179 = vrot.lane.b32.xlu0 %v2176, 123
        %v2180 = vpop.permute.xlu0 %2179
        %2181 = vrot.lane.b32.xlu0 %v2178, 123
        %v2182 = vpop.permute.xlu0 %2181
        %v2185 = vadd.f32 %v2163, %v2180
        %v2186 = vadd.f32 %v2164, %v2182
        %v2187 = vstv %s2166
        %v2188 = vmul.f32 %v2187, %v1205
        %v2189 = vmul.f32 %v2187, %v1206
        %v2190 = vmul.f32 %v2187, %v1207
        %v2194 = vrot.slane %v2188, 3
        %v2195 = vrot.slane %v2189, 3
        %v2196 = vsel %vm1971, %v2194, %v2195
        %v2197 = vrot.slane %v2190, 3
        %v2198 = vsel %vm1971, %v2195, %v2197
        %2199 = vrot.lane.b32.xlu0 %v2196, 123
        %v2200 = vpop.permute.xlu0 %2199
        %2201 = vrot.lane.b32.xlu0 %v2198, 123
        %v2202 = vpop.permute.xlu0 %2201
        %v2205 = vadd.f32 %v2185, %v2200
        %v2206 = vadd.f32 %v2186, %v2202
        %s2207 = sld [smem:[#allocation8 + $0x1b]]
        %s2208 = sld [smem:[#allocation8 + $0x4c]]
        %v2209 = vstv %s2207
        %v2210 = vmul.f32 %v2209, %v1176
        %v2211 = vmul.f32 %v2209, %v1177
        %v2212 = vmul.f32 %v2209, %v1178
        %v2216 = vrot.slane %v2210, 3
        %v2217 = vrot.slane %v2211, 3
        %v2218 = vsel %vm1971, %v2216, %v2217
        %v2219 = vrot.slane %v2212, 3
        %v2220 = vsel %vm1971, %v2217, %v2219
        %2221 = vrot.lane.b32.xlu0 %v2218, 122
        %v2222 = vpop.permute.xlu0 %2221
        %2223 = vrot.lane.b32.xlu0 %v2220, 122
        %v2224 = vpop.permute.xlu0 %2223
        %v2227 = vadd.f32 %v2205, %v2222
        %v2228 = vadd.f32 %v2206, %v2224
        %v2229 = vstv %s2208
        %v2230 = vmul.f32 %v2229, %v1205
        %v2231 = vmul.f32 %v2229, %v1206
        %v2232 = vmul.f32 %v2229, %v1207
        %v2236 = vrot.slane %v2230, 3
        %v2237 = vrot.slane %v2231, 3
        %v2238 = vsel %vm1971, %v2236, %v2237
        %v2239 = vrot.slane %v2232, 3
        %v2240 = vsel %vm1971, %v2237, %v2239
        %2241 = vrot.lane.b32.xlu0 %v2238, 122
        %v2242 = vpop.permute.xlu0 %2241
        %2243 = vrot.lane.b32.xlu0 %v2240, 122
        %v2244 = vpop.permute.xlu0 %2243
        %v2247 = vadd.f32 %v2227, %v2242
        %v2248 = vadd.f32 %v2228, %v2244
        %s2249 = sld [smem:[#allocation8 + $0x1c]]
        %s2250 = sld [smem:[#allocation8 + $0x4d]]
        %v2251 = vstv %s2249
        %v2252 = vmul.f32 %v2251, %v1176
        %v2253 = vmul.f32 %v2251, %v1177
        %v2254 = vmul.f32 %v2251, %v1178
        %vm2258 = vcmask 1043456
        %v2259 = vrot.slane %v2252, 4
        %v2260 = vrot.slane %v2253, 4
        %v2261 = vsel %vm2258, %v2259, %v2260
        %v2262 = vrot.slane %v2254, 4
        %v2263 = vsel %vm2258, %v2260, %v2262
        %v2266 = vadd.f32 %v2247, %v2261
        %v2267 = vadd.f32 %v2248, %v2263
        %v2268 = vstv %s2250
        %v2269 = vmul.f32 %v2268, %v1205
        %v2270 = vmul.f32 %v2268, %v1206
        %v2271 = vmul.f32 %v2268, %v1207
        %v2275 = vrot.slane %v2269, 4
        %v2276 = vrot.slane %v2270, 4
        %v2277 = vsel %vm2258, %v2275, %v2276
        %v2278 = vrot.slane %v2271, 4
        %v2279 = vsel %vm2258, %v2276, %v2278
        %v2282 = vadd.f32 %v2266, %v2277
        %v2283 = vadd.f32 %v2267, %v2279
        %s2284 = sld [smem:[#allocation8 + $0x1d]]
        %s2285 = sld [smem:[#allocation8 + $0x4e]]
        %v2286 = vstv %s2284
        %v2287 = vmul.f32 %v2286, %v1176
        %v2288 = vmul.f32 %v2286, %v1177
        %v2289 = vmul.f32 %v2286, %v1178
        %v2293 = vrot.slane %v2287, 4
        %v2294 = vrot.slane %v2288, 4
        %v2295 = vsel %vm2258, %v2293, %v2294
        %v2296 = vrot.slane %v2289, 4
        %v2297 = vsel %vm2258, %v2294, %v2296
        %2298 = vrot.lane.b32.xlu0 %v2295, 127
        %v2299 = vpop.permute.xlu0 %2298
        %2300 = vrot.lane.b32.xlu0 %v2297, 127
        %v2301 = vpop.permute.xlu0 %2300
        %v2304 = vadd.f32 %v2282, %v2299
        %v2305 = vadd.f32 %v2283, %v2301
        %v2306 = vstv %s2285
        %v2307 = vmul.f32 %v2306, %v1205
        %v2308 = vmul.f32 %v2306, %v1206
        %v2309 = vmul.f32 %v2306, %v1207
        %v2313 = vrot.slane %v2307, 4
        %v2314 = vrot.slane %v2308, 4
        %v2315 = vsel %vm2258, %v2313, %v2314
        %v2316 = vrot.slane %v2309, 4
        %v2317 = vsel %vm2258, %v2314, %v2316
        %2318 = vrot.lane.b32.xlu0 %v2315, 127
        %v2319 = vpop.permute.xlu0 %2318
        %2320 = vrot.lane.b32.xlu0 %v2317, 127
        %v2321 = vpop.permute.xlu0 %2320
        %v2324 = vadd.f32 %v2304, %v2319
        %v2325 = vadd.f32 %v2305, %v2321
        %s2326 = sld [smem:[#allocation8 + $0x1e]]
        %s2327 = sld [smem:[#allocation8 + $0x4f]]
        %v2328 = vstv %s2326
        %v2329 = vmul.f32 %v2328, %v1176
        %v2330 = vmul.f32 %v2328, %v1177
        %v2331 = vmul.f32 %v2328, %v1178
        %v2335 = vrot.slane %v2329, 4
        %v2336 = vrot.slane %v2330, 4
        %v2337 = vsel %vm2258, %v2335, %v2336
        %v2338 = vrot.slane %v2331, 4
        %v2339 = vsel %vm2258, %v2336, %v2338
        %2340 = vrot.lane.b32.xlu0 %v2337, 126
        %v2341 = vpop.permute.xlu0 %2340
        %2342 = vrot.lane.b32.xlu0 %v2339, 126
        %v2343 = vpop.permute.xlu0 %2342
        %v2346 = vadd.f32 %v2324, %v2341
        %v2347 = vadd.f32 %v2325, %v2343
        %v2348 = vstv %s2327
        %v2349 = vmul.f32 %v2348, %v1205
        %v2350 = vmul.f32 %v2348, %v1206
        %v2351 = vmul.f32 %v2348, %v1207
        %v2355 = vrot.slane %v2349, 4
        %v2356 = vrot.slane %v2350, 4
        %v2357 = vsel %vm2258, %v2355, %v2356
        %v2358 = vrot.slane %v2351, 4
        %v2359 = vsel %vm2258, %v2356, %v2358
        %2360 = vrot.lane.b32.xlu0 %v2357, 126
        %v2361 = vpop.permute.xlu0 %2360
        %2362 = vrot.lane.b32.xlu0 %v2359, 126
        %v2363 = vpop.permute.xlu0 %2362
        %v2366 = vadd.f32 %v2346, %v2361
        %v2367 = vadd.f32 %v2347, %v2363
        %s2368 = sld [smem:[#allocation8 + $0x1f]]
        %s2369 = sld [smem:[#allocation8 + $0x50]]
        %v2370 = vstv %s2368
        %v2371 = vmul.f32 %v2370, %v1176
        %v2372 = vmul.f32 %v2370, %v1177
        %v2373 = vmul.f32 %v2370, %v1178
        %v2377 = vrot.slane %v2371, 4
        %v2378 = vrot.slane %v2372, 4
        %v2379 = vsel %vm2258, %v2377, %v2378
        %v2380 = vrot.slane %v2373, 4
        %v2381 = vsel %vm2258, %v2378, %v2380
        %2382 = vrot.lane.b32.xlu0 %v2379, 125
        %v2383 = vpop.permute.xlu0 %2382
        %2384 = vrot.lane.b32.xlu0 %v2381, 125
        %v2385 = vpop.permute.xlu0 %2384
        %v2388 = vadd.f32 %v2366, %v2383
        %v2389 = vadd.f32 %v2367, %v2385
        %v2390 = vstv %s2369
        %v2391 = vmul.f32 %v2390, %v1205
        %v2392 = vmul.f32 %v2390, %v1206
        %v2393 = vmul.f32 %v2390, %v1207
        %v2397 = vrot.slane %v2391, 4
        %v2398 = vrot.slane %v2392, 4
        %v2399 = vsel %vm2258, %v2397, %v2398
        %v2400 = vrot.slane %v2393, 4
        %v2401 = vsel %vm2258, %v2398, %v2400
        %2402 = vrot.lane.b32.xlu0 %v2399, 125
        %v2403 = vpop.permute.xlu0 %2402
        %2404 = vrot.lane.b32.xlu0 %v2401, 125
        %v2405 = vpop.permute.xlu0 %2404
        %v2408 = vadd.f32 %v2388, %v2403
        %v2409 = vadd.f32 %v2389, %v2405
        %s2410 = sld [smem:[#allocation8 + $0x20]]
        %s2411 = sld [smem:[#allocation8 + $0x51]]
        %v2412 = vstv %s2410
        %v2413 = vmul.f32 %v2412, %v1176
        %v2414 = vmul.f32 %v2412, %v1177
        %v2415 = vmul.f32 %v2412, %v1178
        %v2419 = vrot.slane %v2413, 4
        %v2420 = vrot.slane %v2414, 4
        %v2421 = vsel %vm2258, %v2419, %v2420
        %v2422 = vrot.slane %v2415, 4
        %v2423 = vsel %vm2258, %v2420, %v2422
        %2424 = vrot.lane.b32.xlu0 %v2421, 124
        %v2425 = vpop.permute.xlu0 %2424
        %2426 = vrot.lane.b32.xlu0 %v2423, 124
        %v2427 = vpop.permute.xlu0 %2426
        %v2430 = vadd.f32 %v2408, %v2425
        %v2431 = vadd.f32 %v2409, %v2427
        %v2432 = vstv %s2411
        %v2433 = vmul.f32 %v2432, %v1205
        %v2434 = vmul.f32 %v2432, %v1206
        %v2435 = vmul.f32 %v2432, %v1207
        %v2439 = vrot.slane %v2433, 4
        %v2440 = vrot.slane %v2434, 4
        %v2441 = vsel %vm2258, %v2439, %v2440
        %v2442 = vrot.slane %v2435, 4
        %v2443 = vsel %vm2258, %v2440, %v2442
        %2444 = vrot.lane.b32.xlu0 %v2441, 124
        %v2445 = vpop.permute.xlu0 %2444
        %2446 = vrot.lane.b32.xlu0 %v2443, 124
        %v2447 = vpop.permute.xlu0 %2446
        %v2450 = vadd.f32 %v2430, %v2445
        %v2451 = vadd.f32 %v2431, %v2447
        %s2452 = sld [smem:[#allocation8 + $0x21]]
        %s2453 = sld [smem:[#allocation8 + $0x52]]
        %v2454 = vstv %s2452
        %v2455 = vmul.f32 %v2454, %v1176
        %v2456 = vmul.f32 %v2454, %v1177
        %v2457 = vmul.f32 %v2454, %v1178
        %v2461 = vrot.slane %v2455, 4
        %v2462 = vrot.slane %v2456, 4
        %v2463 = vsel %vm2258, %v2461, %v2462
        %v2464 = vrot.slane %v2457, 4
        %v2465 = vsel %vm2258, %v2462, %v2464
        %2466 = vrot.lane.b32.xlu0 %v2463, 123
        %v2467 = vpop.permute.xlu0 %2466
        %2468 = vrot.lane.b32.xlu0 %v2465, 123
        %v2469 = vpop.permute.xlu0 %2468
        %v2472 = vadd.f32 %v2450, %v2467
        %v2473 = vadd.f32 %v2451, %v2469
        %v2474 = vstv %s2453
        %v2475 = vmul.f32 %v2474, %v1205
        %v2476 = vmul.f32 %v2474, %v1206
        %v2477 = vmul.f32 %v2474, %v1207
        %v2481 = vrot.slane %v2475, 4
        %v2482 = vrot.slane %v2476, 4
        %v2483 = vsel %vm2258, %v2481, %v2482
        %v2484 = vrot.slane %v2477, 4
        %v2485 = vsel %vm2258, %v2482, %v2484
        %2486 = vrot.lane.b32.xlu0 %v2483, 123
        %v2487 = vpop.permute.xlu0 %2486
        %2488 = vrot.lane.b32.xlu0 %v2485, 123
        %v2489 = vpop.permute.xlu0 %2488
        %v2492 = vadd.f32 %v2472, %v2487
        %v2493 = vadd.f32 %v2473, %v2489
        %s2494 = sld [smem:[#allocation8 + $0x22]]
        %s2495 = sld [smem:[#allocation8 + $0x53]]
        %v2496 = vstv %s2494
        %v2497 = vmul.f32 %v2496, %v1176
        %v2498 = vmul.f32 %v2496, %v1177
        %v2499 = vmul.f32 %v2496, %v1178
        %v2503 = vrot.slane %v2497, 4
        %v2504 = vrot.slane %v2498, 4
        %v2505 = vsel %vm2258, %v2503, %v2504
        %v2506 = vrot.slane %v2499, 4
        %v2507 = vsel %vm2258, %v2504, %v2506
        %2508 = vrot.lane.b32.xlu0 %v2505, 122
        %v2509 = vpop.permute.xlu0 %2508
        %2510 = vrot.lane.b32.xlu0 %v2507, 122
        %v2511 = vpop.permute.xlu0 %2510
        %v2514 = vadd.f32 %v2492, %v2509
        %v2515 = vadd.f32 %v2493, %v2511
        %v2516 = vstv %s2495
        %v2517 = vmul.f32 %v2516, %v1205
        %v2518 = vmul.f32 %v2516, %v1206
        %v2519 = vmul.f32 %v2516, %v1207
        %v2523 = vrot.slane %v2517, 4
        %v2524 = vrot.slane %v2518, 4
        %v2525 = vsel %vm2258, %v2523, %v2524
        %v2526 = vrot.slane %v2519, 4
        %v2527 = vsel %vm2258, %v2524, %v2526
        %2528 = vrot.lane.b32.xlu0 %v2525, 122
        %v2529 = vpop.permute.xlu0 %2528
        %2530 = vrot.lane.b32.xlu0 %v2527, 122
        %v2531 = vpop.permute.xlu0 %2530
        %v2534 = vadd.f32 %v2514, %v2529
        %v2535 = vadd.f32 %v2515, %v2531
        %s2536 = sld [smem:[#allocation8 + $0x23]]
        %s2537 = sld [smem:[#allocation8 + $0x54]]
        %v2538 = vstv %s2536
        %v2539 = vmul.f32 %v2538, %v1176
        %v2540 = vmul.f32 %v2538, %v1177
        %v2541 = vmul.f32 %v2538, %v1178
        %v2545 = vrot.slane %v2539, 5
        %v2546 = vrot.slane %v2540, 5
        %v2547 = vsel %vm1152, %v2545, %v2546
        %v2548 = vrot.slane %v2541, 5
        %v2549 = vsel %vm1152, %v2546, %v2548
        %v2552 = vadd.f32 %v2534, %v2547
        %v2553 = vadd.f32 %v2535, %v2549
        %v2554 = vstv %s2537
        %v2555 = vmul.f32 %v2554, %v1205
        %v2556 = vmul.f32 %v2554, %v1206
        %v2557 = vmul.f32 %v2554, %v1207
        %v2561 = vrot.slane %v2555, 5
        %v2562 = vrot.slane %v2556, 5
        %v2563 = vsel %vm1152, %v2561, %v2562
        %v2564 = vrot.slane %v2557, 5
        %v2565 = vsel %vm1152, %v2562, %v2564
        %v2568 = vadd.f32 %v2552, %v2563
        %v2569 = vadd.f32 %v2553, %v2565
        %s2570 = sld [smem:[#allocation8 + $0x24]]
        %s2571 = sld [smem:[#allocation8 + $0x55]]
        %v2572 = vstv %s2570
        %v2573 = vmul.f32 %v2572, %v1176
        %v2574 = vmul.f32 %v2572, %v1177
        %v2575 = vmul.f32 %v2572, %v1178
        %v2579 = vrot.slane %v2573, 5
        %v2580 = vrot.slane %v2574, 5
        %v2581 = vsel %vm1152, %v2579, %v2580
        %v2582 = vrot.slane %v2575, 5
        %v2583 = vsel %vm1152, %v2580, %v2582
        %2584 = vrot.lane.b32.xlu0 %v2581, 127
        %v2585 = vpop.permute.xlu0 %2584
        %2586 = vrot.lane.b32.xlu0 %v2583, 127
        %v2587 = vpop.permute.xlu0 %2586
        %v2590 = vadd.f32 %v2568, %v2585
        %v2591 = vadd.f32 %v2569, %v2587
        %v2592 = vstv %s2571
        %v2593 = vmul.f32 %v2592, %v1205
        %v2594 = vmul.f32 %v2592, %v1206
        %v2595 = vmul.f32 %v2592, %v1207
        %v2599 = vrot.slane %v2593, 5
        %v2600 = vrot.slane %v2594, 5
        %v2601 = vsel %vm1152, %v2599, %v2600
        %v2602 = vrot.slane %v2595, 5
        %v2603 = vsel %vm1152, %v2600, %v2602
        %2604 = vrot.lane.b32.xlu0 %v2601, 127
        %v2605 = vpop.permute.xlu0 %2604
        %2606 = vrot.lane.b32.xlu0 %v2603, 127
        %v2607 = vpop.permute.xlu0 %2606
        %v2610 = vadd.f32 %v2590, %v2605
        %v2611 = vadd.f32 %v2591, %v2607
        %s2612 = sld [smem:[#allocation8 + $0x25]]
        %s2613 = sld [smem:[#allocation8 + $0x56]]
        %v2614 = vstv %s2612
        %v2615 = vmul.f32 %v2614, %v1176
        %v2616 = vmul.f32 %v2614, %v1177
        %v2617 = vmul.f32 %v2614, %v1178
        %v2621 = vrot.slane %v2615, 5
        %v2622 = vrot.slane %v2616, 5
        %v2623 = vsel %vm1152, %v2621, %v2622
        %v2624 = vrot.slane %v2617, 5
        %v2625 = vsel %vm1152, %v2622, %v2624
        %2626 = vrot.lane.b32.xlu0 %v2623, 126
        %v2627 = vpop.permute.xlu0 %2626
        %2628 = vrot.lane.b32.xlu0 %v2625, 126
        %v2629 = vpop.permute.xlu0 %2628
        %v2632 = vadd.f32 %v2610, %v2627
        %v2633 = vadd.f32 %v2611, %v2629
        %v2634 = vstv %s2613
        %v2635 = vmul.f32 %v2634, %v1205
        %v2636 = vmul.f32 %v2634, %v1206
        %v2637 = vmul.f32 %v2634, %v1207
        %v2641 = vrot.slane %v2635, 5
        %v2642 = vrot.slane %v2636, 5
        %v2643 = vsel %vm1152, %v2641, %v2642
        %v2644 = vrot.slane %v2637, 5
        %v2645 = vsel %vm1152, %v2642, %v2644
        %2646 = vrot.lane.b32.xlu0 %v2643, 126
        %v2647 = vpop.permute.xlu0 %2646
        %2648 = vrot.lane.b32.xlu0 %v2645, 126
        %v2649 = vpop.permute.xlu0 %2648
        %v2652 = vadd.f32 %v2632, %v2647
        %v2653 = vadd.f32 %v2633, %v2649
        %s2654 = sld [smem:[#allocation8 + $0x26]]
        %s2655 = sld [smem:[#allocation8 + $0x57]]
        %v2656 = vstv %s2654
        %v2657 = vmul.f32 %v2656, %v1176
        %v2658 = vmul.f32 %v2656, %v1177
        %v2659 = vmul.f32 %v2656, %v1178
        %v2663 = vrot.slane %v2657, 5
        %v2664 = vrot.slane %v2658, 5
        %v2665 = vsel %vm1152, %v2663, %v2664
        %v2666 = vrot.slane %v2659, 5
        %v2667 = vsel %vm1152, %v2664, %v2666
        %2668 = vrot.lane.b32.xlu0 %v2665, 125
        %v2669 = vpop.permute.xlu0 %2668
        %2670 = vrot.lane.b32.xlu0 %v2667, 125
        %v2671 = vpop.permute.xlu0 %2670
        %v2674 = vadd.f32 %v2652, %v2669
        %v2675 = vadd.f32 %v2653, %v2671
        %v2676 = vstv %s2655
        %v2677 = vmul.f32 %v2676, %v1205
        %v2678 = vmul.f32 %v2676, %v1206
        %v2679 = vmul.f32 %v2676, %v1207
        %v2683 = vrot.slane %v2677, 5
        %v2684 = vrot.slane %v2678, 5
        %v2685 = vsel %vm1152, %v2683, %v2684
        %v2686 = vrot.slane %v2679, 5
        %v2687 = vsel %vm1152, %v2684, %v2686
        %2688 = vrot.lane.b32.xlu0 %v2685, 125
        %v2689 = vpop.permute.xlu0 %2688
        %2690 = vrot.lane.b32.xlu0 %v2687, 125
        %v2691 = vpop.permute.xlu0 %2690
        %v2694 = vadd.f32 %v2674, %v2689
        %v2695 = vadd.f32 %v2675, %v2691
        %s2696 = sld [smem:[#allocation8 + $0x27]]
        %s2697 = sld [smem:[#allocation8 + $0x58]]
        %v2698 = vstv %s2696
        %v2699 = vmul.f32 %v2698, %v1176
        %v2700 = vmul.f32 %v2698, %v1177
        %v2701 = vmul.f32 %v2698, %v1178
        %v2705 = vrot.slane %v2699, 5
        %v2706 = vrot.slane %v2700, 5
        %v2707 = vsel %vm1152, %v2705, %v2706
        %v2708 = vrot.slane %v2701, 5
        %v2709 = vsel %vm1152, %v2706, %v2708
        %2710 = vrot.lane.b32.xlu0 %v2707, 124
        %v2711 = vpop.permute.xlu0 %2710
        %2712 = vrot.lane.b32.xlu0 %v2709, 124
        %v2713 = vpop.permute.xlu0 %2712
        %v2716 = vadd.f32 %v2694, %v2711
        %v2717 = vadd.f32 %v2695, %v2713
        %v2718 = vstv %s2697
        %v2719 = vmul.f32 %v2718, %v1205
        %v2720 = vmul.f32 %v2718, %v1206
        %v2721 = vmul.f32 %v2718, %v1207
        %v2725 = vrot.slane %v2719, 5
        %v2726 = vrot.slane %v2720, 5
        %v2727 = vsel %vm1152, %v2725, %v2726
        %v2728 = vrot.slane %v2721, 5
        %v2729 = vsel %vm1152, %v2726, %v2728
        %2730 = vrot.lane.b32.xlu0 %v2727, 124
        %v2731 = vpop.permute.xlu0 %2730
        %2732 = vrot.lane.b32.xlu0 %v2729, 124
        %v2733 = vpop.permute.xlu0 %2732
        %v2736 = vadd.f32 %v2716, %v2731
        %v2737 = vadd.f32 %v2717, %v2733
        %s2738 = sld [smem:[#allocation8 + $0x28]]
        %s2739 = sld [smem:[#allocation8 + $0x59]]
        %v2740 = vstv %s2738
        %v2741 = vmul.f32 %v2740, %v1176
        %v2742 = vmul.f32 %v2740, %v1177
        %v2743 = vmul.f32 %v2740, %v1178
        %v2747 = vrot.slane %v2741, 5
        %v2748 = vrot.slane %v2742, 5
        %v2749 = vsel %vm1152, %v2747, %v2748
        %v2750 = vrot.slane %v2743, 5
        %v2751 = vsel %vm1152, %v2748, %v2750
        %2752 = vrot.lane.b32.xlu0 %v2749, 123
        %v2753 = vpop.permute.xlu0 %2752
        %2754 = vrot.lane.b32.xlu0 %v2751, 123
        %v2755 = vpop.permute.xlu0 %2754
        %v2758 = vadd.f32 %v2736, %v2753
        %v2759 = vadd.f32 %v2737, %v2755
        %v2760 = vstv %s2739
        %v2761 = vmul.f32 %v2760, %v1205
        %v2762 = vmul.f32 %v2760, %v1206
        %v2763 = vmul.f32 %v2760, %v1207
        %v2767 = vrot.slane %v2761, 5
        %v2768 = vrot.slane %v2762, 5
        %v2769 = vsel %vm1152, %v2767, %v2768
        %v2770 = vrot.slane %v2763, 5
        %v2771 = vsel %vm1152, %v2768, %v2770
        %2772 = vrot.lane.b32.xlu0 %v2769, 123
        %v2773 = vpop.permute.xlu0 %2772
        %2774 = vrot.lane.b32.xlu0 %v2771, 123
        %v2775 = vpop.permute.xlu0 %2774
        %v2778 = vadd.f32 %v2758, %v2773
        %v2779 = vadd.f32 %v2759, %v2775
        %s2780 = sld [smem:[#allocation8 + $0x29]]
        %s2781 = sld [smem:[#allocation8 + $0x5a]]
        %v2782 = vstv %s2780
        %v2783 = vmul.f32 %v2782, %v1176
        %v2784 = vmul.f32 %v2782, %v1177
        %v2785 = vmul.f32 %v2782, %v1178
        %v2789 = vrot.slane %v2783, 5
        %v2790 = vrot.slane %v2784, 5
        %v2791 = vsel %vm1152, %v2789, %v2790
        %v2792 = vrot.slane %v2785, 5
        %v2793 = vsel %vm1152, %v2790, %v2792
        %2794 = vrot.lane.b32.xlu0 %v2791, 122
        %v2795 = vpop.permute.xlu0 %2794
        %2796 = vrot.lane.b32.xlu0 %v2793, 122
        %v2797 = vpop.permute.xlu0 %2796
        %v2800 = vadd.f32 %v2778, %v2795
        %v2801 = vadd.f32 %v2779, %v2797
        %v2802 = vstv %s2781
        %v2803 = vmul.f32 %v2802, %v1205
        %v2804 = vmul.f32 %v2802, %v1206
        %v2805 = vmul.f32 %v2802, %v1207
        %v2809 = vrot.slane %v2803, 5
        %v2810 = vrot.slane %v2804, 5
        %v2811 = vsel %vm1152, %v2809, %v2810
        %v2812 = vrot.slane %v2805, 5
        %v2813 = vsel %vm1152, %v2810, %v2812
        %2814 = vrot.lane.b32.xlu0 %v2811, 122
        %v2815 = vpop.permute.xlu0 %2814
        %2816 = vrot.lane.b32.xlu0 %v2813, 122
        %v2817 = vpop.permute.xlu0 %2816
        %v2820 = vadd.f32 %v2800, %v2815
        %v2821 = vadd.f32 %v2801, %v2817
        %s2822 = sld [smem:[#allocation8 + $0x2a]]
        %s2823 = sld [smem:[#allocation8 + $0x5b]]
        %v2824 = vstv %s2822
        %v2825 = vmul.f32 %v2824, %v1176
        %v2826 = vmul.f32 %v2824, %v1177
        %v2827 = vmul.f32 %v2824, %v1178
        %vm2831 = vcmask 1041408
        %v2832 = vrot.slane %v2825, 6
        %v2833 = vrot.slane %v2826, 6
        %v2834 = vsel %vm2831, %v2832, %v2833
        %v2835 = vrot.slane %v2827, 6
        %v2836 = vsel %vm2831, %v2833, %v2835
        %v2839 = vadd.f32 %v2820, %v2834
        %v2840 = vadd.f32 %v2821, %v2836
        %v2841 = vstv %s2823
        %v2842 = vmul.f32 %v2841, %v1205
        %v2843 = vmul.f32 %v2841, %v1206
        %v2844 = vmul.f32 %v2841, %v1207
        %v2848 = vrot.slane %v2842, 6
        %v2849 = vrot.slane %v2843, 6
        %v2850 = vsel %vm2831, %v2848, %v2849
        %v2851 = vrot.slane %v2844, 6
        %v2852 = vsel %vm2831, %v2849, %v2851
        %v2855 = vadd.f32 %v2839, %v2850
        %v2856 = vadd.f32 %v2840, %v2852
        %s2857 = sld [smem:[#allocation8 + $0x2b]]
        %s2858 = sld [smem:[#allocation8 + $0x5c]]
        %v2859 = vstv %s2857
        %v2860 = vmul.f32 %v2859, %v1176
        %v2861 = vmul.f32 %v2859, %v1177
        %v2862 = vmul.f32 %v2859, %v1178
        %v2866 = vrot.slane %v2860, 6
        %v2867 = vrot.slane %v2861, 6
        %v2868 = vsel %vm2831, %v2866, %v2867
        %v2869 = vrot.slane %v2862, 6
        %v2870 = vsel %vm2831, %v2867, %v2869
        %2871 = vrot.lane.b32.xlu0 %v2868, 127
        %v2872 = vpop.permute.xlu0 %2871
        %2873 = vrot.lane.b32.xlu0 %v2870, 127
        %v2874 = vpop.permute.xlu0 %2873
        %v2877 = vadd.f32 %v2855, %v2872
        %v2878 = vadd.f32 %v2856, %v2874
        %v2879 = vstv %s2858
        %v2880 = vmul.f32 %v2879, %v1205
        %v2881 = vmul.f32 %v2879, %v1206
        %v2882 = vmul.f32 %v2879, %v1207
        %v2886 = vrot.slane %v2880, 6
        %v2887 = vrot.slane %v2881, 6
        %v2888 = vsel %vm2831, %v2886, %v2887
        %v2889 = vrot.slane %v2882, 6
        %v2890 = vsel %vm2831, %v2887, %v2889
        %2891 = vrot.lane.b32.xlu0 %v2888, 127
        %v2892 = vpop.permute.xlu0 %2891
        %2893 = vrot.lane.b32.xlu0 %v2890, 127
        %v2894 = vpop.permute.xlu0 %2893
        %v2897 = vadd.f32 %v2877, %v2892
        %v2898 = vadd.f32 %v2878, %v2894
        %s2899 = sld [smem:[#allocation8 + $0x2c]]
        %s2900 = sld [smem:[#allocation8 + $0x5d]]
        %v2901 = vstv %s2899
        %v2902 = vmul.f32 %v2901, %v1176
        %v2903 = vmul.f32 %v2901, %v1177
        %v2904 = vmul.f32 %v2901, %v1178
        %v2908 = vrot.slane %v2902, 6
        %v2909 = vrot.slane %v2903, 6
        %v2910 = vsel %vm2831, %v2908, %v2909
        %v2911 = vrot.slane %v2904, 6
        %v2912 = vsel %vm2831, %v2909, %v2911
        %2913 = vrot.lane.b32.xlu0 %v2910, 126
        %v2914 = vpop.permute.xlu0 %2913
        %2915 = vrot.lane.b32.xlu0 %v2912, 126
        %v2916 = vpop.permute.xlu0 %2915
        %v2919 = vadd.f32 %v2897, %v2914
        %v2920 = vadd.f32 %v2898, %v2916
        %v2921 = vstv %s2900
        %v2922 = vmul.f32 %v2921, %v1205
        %v2923 = vmul.f32 %v2921, %v1206
        %v2924 = vmul.f32 %v2921, %v1207
        %v2928 = vrot.slane %v2922, 6
        %v2929 = vrot.slane %v2923, 6
        %v2930 = vsel %vm2831, %v2928, %v2929
        %v2931 = vrot.slane %v2924, 6
        %v2932 = vsel %vm2831, %v2929, %v2931
        %2933 = vrot.lane.b32.xlu0 %v2930, 126
        %v2934 = vpop.permute.xlu0 %2933
        %2935 = vrot.lane.b32.xlu0 %v2932, 126
        %v2936 = vpop.permute.xlu0 %2935
        %v2939 = vadd.f32 %v2919, %v2934
        %v2940 = vadd.f32 %v2920, %v2936
        %s2941 = sld [smem:[#allocation8 + $0x2d]]
        %s2942 = sld [smem:[#allocation8 + $0x5e]]
        %v2943 = vstv %s2941
        %v2944 = vmul.f32 %v2943, %v1176
        %v2945 = vmul.f32 %v2943, %v1177
        %v2946 = vmul.f32 %v2943, %v1178
        %v2950 = vrot.slane %v2944, 6
        %v2951 = vrot.slane %v2945, 6
        %v2952 = vsel %vm2831, %v2950, %v2951
        %v2953 = vrot.slane %v2946, 6
        %v2954 = vsel %vm2831, %v2951, %v2953
        %2955 = vrot.lane.b32.xlu0 %v2952, 125
        %v2956 = vpop.permute.xlu0 %2955
        %2957 = vrot.lane.b32.xlu0 %v2954, 125
        %v2958 = vpop.permute.xlu0 %2957
        %v2961 = vadd.f32 %v2939, %v2956
        %v2962 = vadd.f32 %v2940, %v2958
        %v2963 = vstv %s2942
        %v2964 = vmul.f32 %v2963, %v1205
        %v2965 = vmul.f32 %v2963, %v1206
        %v2966 = vmul.f32 %v2963, %v1207
        %v2970 = vrot.slane %v2964, 6
        %v2971 = vrot.slane %v2965, 6
        %v2972 = vsel %vm2831, %v2970, %v2971
        %v2973 = vrot.slane %v2966, 6
        %v2974 = vsel %vm2831, %v2971, %v2973
        %2975 = vrot.lane.b32.xlu0 %v2972, 125
        %v2976 = vpop.permute.xlu0 %2975
        %2977 = vrot.lane.b32.xlu0 %v2974, 125
        %v2978 = vpop.permute.xlu0 %2977
        %v2981 = vadd.f32 %v2961, %v2976
        %v2982 = vadd.f32 %v2962, %v2978
        %s2983 = sld [smem:[#allocation8 + $0x2e]]
        %s2984 = sld [smem:[#allocation8 + $0x5f]]
        %v2985 = vstv %s2983
        %v2986 = vmul.f32 %v2985, %v1176
        %v2987 = vmul.f32 %v2985, %v1177
        %v2988 = vmul.f32 %v2985, %v1178
        %v2992 = vrot.slane %v2986, 6
        %v2993 = vrot.slane %v2987, 6
        %v2994 = vsel %vm2831, %v2992, %v2993
        %v2995 = vrot.slane %v2988, 6
        %v2996 = vsel %vm2831, %v2993, %v2995
        %2997 = vrot.lane.b32.xlu0 %v2994, 124
        %v2998 = vpop.permute.xlu0 %2997
        %2999 = vrot.lane.b32.xlu0 %v2996, 124
        %v3000 = vpop.permute.xlu0 %2999
        %v3003 = vadd.f32 %v2981, %v2998
        %v3004 = vadd.f32 %v2982, %v3000
        %v3005 = vstv %s2984
        %v3006 = vmul.f32 %v3005, %v1205
        %v3007 = vmul.f32 %v3005, %v1206
        %v3008 = vmul.f32 %v3005, %v1207
        %v3012 = vrot.slane %v3006, 6
        %v3013 = vrot.slane %v3007, 6
        %v3014 = vsel %vm2831, %v3012, %v3013
        %v3015 = vrot.slane %v3008, 6
        %v3016 = vsel %vm2831, %v3013, %v3015
        %3017 = vrot.lane.b32.xlu0 %v3014, 124
        %v3018 = vpop.permute.xlu0 %3017
        %3019 = vrot.lane.b32.xlu0 %v3016, 124
        %v3020 = vpop.permute.xlu0 %3019
        %v3023 = vadd.f32 %v3003, %v3018
        %v3024 = vadd.f32 %v3004, %v3020
        %s3025 = sld [smem:[#allocation8 + $0x2f]]
        %s3026 = sld [smem:[#allocation8 + $0x60]]
        %v3027 = vstv %s3025
        %v3028 = vmul.f32 %v3027, %v1176
        %v3029 = vmul.f32 %v3027, %v1177
        %v3030 = vmul.f32 %v3027, %v1178
        %v3034 = vrot.slane %v3028, 6
        %v3035 = vrot.slane %v3029, 6
        %v3036 = vsel %vm2831, %v3034, %v3035
        %v3037 = vrot.slane %v3030, 6
        %v3038 = vsel %vm2831, %v3035, %v3037
        %3039 = vrot.lane.b32.xlu0 %v3036, 123
        %v3040 = vpop.permute.xlu0 %3039
        %3041 = vrot.lane.b32.xlu0 %v3038, 123
        %v3042 = vpop.permute.xlu0 %3041
        %v3045 = vadd.f32 %v3023, %v3040
        %v3046 = vadd.f32 %v3024, %v3042
        %v3047 = vstv %s3026
        %v3048 = vmul.f32 %v3047, %v1205
        %v3049 = vmul.f32 %v3047, %v1206
        %v3050 = vmul.f32 %v3047, %v1207
        %v3054 = vrot.slane %v3048, 6
        %v3055 = vrot.slane %v3049, 6
        %v3056 = vsel %vm2831, %v3054, %v3055
        %v3057 = vrot.slane %v3050, 6
        %v3058 = vsel %vm2831, %v3055, %v3057
        %3059 = vrot.lane.b32.xlu0 %v3056, 123
        %v3060 = vpop.permute.xlu0 %3059
        %3061 = vrot.lane.b32.xlu0 %v3058, 123
        %v3062 = vpop.permute.xlu0 %3061
        %v3065 = vadd.f32 %v3045, %v3060
        %v3066 = vadd.f32 %v3046, %v3062
        %s3067 = sld [smem:[#allocation8 + $0x30]]
        %s3068 = sld [smem:[#allocation8 + $0x61]]
        %v3069 = vstv %s3067
        %v3070 = vmul.f32 %v3069, %v1176
        %v3071 = vmul.f32 %v3069, %v1177
        %v3072 = vmul.f32 %v3069, %v1178
        %v3076 = vrot.slane %v3070, 6
        %v3077 = vrot.slane %v3071, 6
        %v3078 = vsel %vm2831, %v3076, %v3077
        %v3079 = vrot.slane %v3072, 6
        %v3080 = vsel %vm2831, %v3077, %v3079
        %3081 = vrot.lane.b32.xlu0 %v3078, 122
        %v3082 = vpop.permute.xlu0 %3081
        %3083 = vrot.lane.b32.xlu0 %v3080, 122
        %v3084 = vpop.permute.xlu0 %3083
        %v3087 = vadd.f32 %v3065, %v3082
        %v3088 = vadd.f32 %v3066, %v3084
        %v3089 = vstv %s3068
        %v3090 = vmul.f32 %v3089, %v1205
        %v3091 = vmul.f32 %v3089, %v1206
        %v3092 = vmul.f32 %v3089, %v1207
        %v3096 = vrot.slane %v3090, 6
        %v3097 = vrot.slane %v3091, 6
        %v3098 = vsel %vm2831, %v3096, %v3097
        %v3099 = vrot.slane %v3092, 6
        %v3100 = vsel %vm2831, %v3097, %v3099
        %3101 = vrot.lane.b32.xlu0 %v3098, 122
        %v3102 = vpop.permute.xlu0 %3101
        %3103 = vrot.lane.b32.xlu0 %v3100, 122
        %v3104 = vpop.permute.xlu0 %3103
        %v3107 = vadd.f32 %v3087, %v3102
        %v3108 = vadd.f32 %v3088, %v3104
        %v3109 = vmax.f32 %v3107, -60.0
        %v3110 = vmax.f32 %v3108, -60.0
        %v3111 = vsub.f32 0.0, %v3109
        %v3112 = vsub.f32 0.0, %v3110
        %v3113 = vmul.f32 %v3111, 1.442695
        %v3114 = vpow.pop %v3113
        %v3115 = vmul.f32 %v3112, 1.442695
        %v3116 = vpow.pop %v3115
        %v3117 = vadd.f32 %v3114, 1.0
        %v3118 = vadd.f32 %v3116, 1.0
        %v3119 = vrcp.pop %v3117
        %v3120 = vrcp.pop %v3118
        %v3121 = vmul.f32 %v3117, %v3119
        %v3122 = vmul.f32 %v3118, %v3120
        %v3123 = vsub.f32 2.0, %v3121
        %v3124 = vsub.f32 2.0, %v3122
        %v3125 = vmul.f32 %v3119, %v3123
        %v3126 = vmul.f32 %v3120, %v3124
        %3127 = vst.msk [vmem:[#allocation3] sm:$0xff] %vm690, %v3125
        %3128 = vst.msk [vmem:[#allocation3 + $0x8] sm:$0xff] %vm690, %v3126
        %v3129 = vld [vmem:[%s231] sm:$0xff]
        %v3130 = vld [vmem:[%s231 + $0x8] sm:$0xff]
        %v3131 = vld [vmem:[%s231 + $0x10] sm:$0xff]
        %v3132 = vld [vmem:[%s231 + $0x18] sm:$0xff]
        %v3133 = vld [vmem:[%s231 + $0x20] sm:$0xff]
        %v3134 = vld [vmem:[%s231 + $0x28] sm:$0xff]
        %v3135 = vld [vmem:[%s231 + $0x30] sm:$0xff]
        %v3136 = vld [vmem:[%s231 + $0x38] sm:$0xff]
        %v3137 = vld [vmem:[%s231 + $0x40] sm:$0xff]
        %v3138 = vld [vmem:[%s231 + $0x48] sm:$0xff]
        %v3139 = vld [vmem:[%s231 + $0x50] sm:$0xff]
        %v3140 = vld [vmem:[%s231 + $0x58] sm:$0xff]
        %v3141 = vld [vmem:[%s231 + $0x60] sm:$0xff]
        %v3142 = vld [vmem:[%s231 + $0x68] sm:$0xff]
        %v3143 = vld [vmem:[%s231 + $0x70] sm:$0xff]
        %v3144 = vld [vmem:[%s231 + $0x78] sm:$0xff]
        %v3145 = vld [vmem:[#allocation3] sm:$0xff]
        %v3146 = vlaneseq
        %v3147 = vshrl.u32 %v3146, 7
        %v3148 = vsub.s32 0, %v3147
        %v3149 = vrot.slane %v3145, %v3148
        %3151 = vbcast.lane.b32.xlu0 %v3149, 256
        %v3152 = vpop.permute.xlu0 %3151
        %s3154 = sor.u32 256, 8
        %3155 = vbcast.lane.b32.xlu0 %v3149, %s3154
        %v3156 = vpop.permute.xlu0 %3155
        %v3157 = vlaneseq
        %v3158 = vshrl.u32 %v3157, 7
        %v3159 = vsub.s32 1, %v3158
        %v3160 = vrot.slane %v3145, %v3159
        %3162 = vbcast.lane.b32.xlu0 %v3160, 256
        %v3163 = vpop.permute.xlu0 %3162
        %s3165 = sor.u32 256, 8
        %3166 = vbcast.lane.b32.xlu0 %v3160, %s3165
        %v3167 = vpop.permute.xlu0 %3166
        %v3168 = vlaneseq
        %v3169 = vshrl.u32 %v3168, 7
        %v3170 = vsub.s32 2, %v3169
        %v3171 = vrot.slane %v3145, %v3170
        %3173 = vbcast.lane.b32.xlu0 %v3171, 256
        %v3174 = vpop.permute.xlu0 %3173
        %s3176 = sor.u32 256, 8
        %3177 = vbcast.lane.b32.xlu0 %v3171, %s3176
        %v3178 = vpop.permute.xlu0 %3177
        %v3179 = vlaneseq
        %v3180 = vshrl.u32 %v3179, 7
        %v3181 = vsub.s32 3, %v3180
        %v3182 = vrot.slane %v3145, %v3181
        %3184 = vbcast.lane.b32.xlu0 %v3182, 256
        %v3185 = vpop.permute.xlu0 %3184
        %s3187 = sor.u32 256, 8
        %3188 = vbcast.lane.b32.xlu0 %v3182, %s3187
        %v3189 = vpop.permute.xlu0 %3188
        %v3190 = vlaneseq
        %v3191 = vshrl.u32 %v3190, 7
        %v3192 = vsub.s32 4, %v3191
        %v3193 = vrot.slane %v3145, %v3192
        %3195 = vbcast.lane.b32.xlu0 %v3193, 256
        %v3196 = vpop.permute.xlu0 %3195
        %s3198 = sor.u32 256, 8
        %3199 = vbcast.lane.b32.xlu0 %v3193, %s3198
        %v3200 = vpop.permute.xlu0 %3199
        %v3201 = vlaneseq
        %v3202 = vshrl.u32 %v3201, 7
        %v3203 = vsub.s32 5, %v3202
        %v3204 = vrot.slane %v3145, %v3203
        %3206 = vbcast.lane.b32.xlu0 %v3204, 256
        %v3207 = vpop.permute.xlu0 %3206
        %s3209 = sor.u32 256, 8
        %3210 = vbcast.lane.b32.xlu0 %v3204, %s3209
        %v3211 = vpop.permute.xlu0 %3210
        %v3212 = vlaneseq
        %v3213 = vshrl.u32 %v3212, 7
        %v3214 = vsub.s32 6, %v3213
        %v3215 = vrot.slane %v3145, %v3214
        %3217 = vbcast.lane.b32.xlu0 %v3215, 256
        %v3218 = vpop.permute.xlu0 %3217
        %s3220 = sor.u32 256, 8
        %3221 = vbcast.lane.b32.xlu0 %v3215, %s3220
        %v3222 = vpop.permute.xlu0 %3221
        %v3223 = vlaneseq
        %v3224 = vshrl.u32 %v3223, 7
        %v3225 = vsub.s32 7, %v3224
        %v3226 = vrot.slane %v3145, %v3225
        %3228 = vbcast.lane.b32.xlu0 %v3226, 256
        %v3229 = vpop.permute.xlu0 %3228
        %s3231 = sor.u32 256, 8
        %3232 = vbcast.lane.b32.xlu0 %v3226, %s3231
        %v3233 = vpop.permute.xlu0 %3232
        %v3234 = vmul.f32 %v3152, %v534
        %v3235 = vmul.f32 %v3156, %v534
        %v3236 = vmul.f32 %v3163, %v534
        %v3237 = vmul.f32 %v3167, %v534
        %v3238 = vmul.f32 %v3174, %v534
        %v3239 = vmul.f32 %v3178, %v534
        %v3240 = vmul.f32 %v3185, %v534
        %v3241 = vmul.f32 %v3189, %v534
        %v3242 = vmul.f32 %v3196, %v534
        %v3243 = vmul.f32 %v3200, %v534
        %v3244 = vmul.f32 %v3207, %v534
        %v3245 = vmul.f32 %v3211, %v534
        %v3246 = vmul.f32 %v3218, %v534
        %v3247 = vmul.f32 %v3222, %v534
        %v3248 = vmul.f32 %v3229, %v534
        %v3249 = vmul.f32 %v3233, %v534
        %v3250 = vadd.f32 %v3234, 1.0
        %v3251 = vadd.f32 %v3235, 1.0
        %v3252 = vadd.f32 %v3236, 1.0
        %v3253 = vadd.f32 %v3237, 1.0
        %v3254 = vadd.f32 %v3238, 1.0
        %v3255 = vadd.f32 %v3239, 1.0
        %v3256 = vadd.f32 %v3240, 1.0
        %v3257 = vadd.f32 %v3241, 1.0
        %v3258 = vadd.f32 %v3242, 1.0
        %v3259 = vadd.f32 %v3243, 1.0
        %v3260 = vadd.f32 %v3244, 1.0
        %v3261 = vadd.f32 %v3245, 1.0
        %v3262 = vadd.f32 %v3246, 1.0
        %v3263 = vadd.f32 %v3247, 1.0
        %v3264 = vadd.f32 %v3248, 1.0
        %v3265 = vadd.f32 %v3249, 1.0
        %v3266 = vmul.f32 %v3129, %v3250
        %v3267 = vmul.f32 %v3130, %v3251
        %v3268 = vmul.f32 %v3131, %v3252
        %v3269 = vmul.f32 %v3132, %v3253
        %v3270 = vmul.f32 %v3133, %v3254
        %v3271 = vmul.f32 %v3134, %v3255
        %v3272 = vmul.f32 %v3135, %v3256
        %v3273 = vmul.f32 %v3136, %v3257
        %v3274 = vmul.f32 %v3137, %v3258
        %v3275 = vmul.f32 %v3138, %v3259
        %v3276 = vmul.f32 %v3139, %v3260
        %v3277 = vmul.f32 %v3140, %v3261
        %v3278 = vmul.f32 %v3141, %v3262
        %v3279 = vmul.f32 %v3142, %v3263
        %v3280 = vmul.f32 %v3143, %v3264
        %v3281 = vmul.f32 %v3144, %v3265
        %s3282 = scalar_lea.vmem %s229, %s230 [#allocation9]
        %3283 = vst [vmem:[%s3282] sm:$0xff] %v3266
        %3284 = vst [vmem:[%s3282 + $0x8] sm:$0xff] %v3267
        %3285 = vst [vmem:[%s3282 + $0x10] sm:$0xff] %v3268
        %3286 = vst [vmem:[%s3282 + $0x18] sm:$0xff] %v3269
        %3287 = vst [vmem:[%s3282 + $0x20] sm:$0xff] %v3270
        %3288 = vst [vmem:[%s3282 + $0x28] sm:$0xff] %v3271
        %3289 = vst [vmem:[%s3282 + $0x30] sm:$0xff] %v3272
        %3290 = vst [vmem:[%s3282 + $0x38] sm:$0xff] %v3273
        %3291 = vst [vmem:[%s3282 + $0x40] sm:$0xff] %v3274
        %3292 = vst [vmem:[%s3282 + $0x48] sm:$0xff] %v3275
        %3293 = vst [vmem:[%s3282 + $0x50] sm:$0xff] %v3276
        %3294 = vst [vmem:[%s3282 + $0x58] sm:$0xff] %v3277
        %3295 = vst [vmem:[%s3282 + $0x60] sm:$0xff] %v3278
        %3296 = vst [vmem:[%s3282 + $0x68] sm:$0xff] %v3279
        %3297 = vst [vmem:[%s3282 + $0x70] sm:$0xff] %v3280
        %3298 = vst [vmem:[%s3282 + $0x78] sm:$0xff] %v3281
        %v3299 = vld [vmem:[%s292] sm:$0xff]
        %v3300 = vld [vmem:[%s292 + $0x8] sm:$0xff]
        %v3301 = vld [vmem:[%s292 + $0x10] sm:$0xff]
        %v3302 = vld [vmem:[%s292 + $0x18] sm:$0xff]
        %v3303 = vld [vmem:[%s292 + $0x20] sm:$0xff]
        %v3304 = vld [vmem:[%s292 + $0x28] sm:$0xff]
        %v3305 = vld [vmem:[%s292 + $0x30] sm:$0xff]
        %v3306 = vld [vmem:[%s292 + $0x38] sm:$0xff]
        %v3307 = vld [vmem:[%s292 + $0x40] sm:$0xff]
        %v3308 = vld [vmem:[%s292 + $0x48] sm:$0xff]
        %v3309 = vld [vmem:[%s292 + $0x50] sm:$0xff]
        %v3310 = vld [vmem:[%s292 + $0x58] sm:$0xff]
        %v3311 = vld [vmem:[%s292 + $0x60] sm:$0xff]
        %v3312 = vld [vmem:[%s292 + $0x68] sm:$0xff]
        %v3313 = vld [vmem:[%s292 + $0x70] sm:$0xff]
        %v3314 = vld [vmem:[%s292 + $0x78] sm:$0xff]
        %s3315 = scalar_lea.vmem [#allocation3], 8
        %v3316 = vld [vmem:[%s3315] sm:$0xff]
        %v3317 = vlaneseq
        %v3318 = vshrl.u32 %v3317, 7
        %v3319 = vsub.s32 0, %v3318
        %v3320 = vrot.slane %v3316, %v3319
        %3322 = vbcast.lane.b32.xlu0 %v3320, 256
        %v3323 = vpop.permute.xlu0 %3322
        %s3325 = sor.u32 256, 8
        %3326 = vbcast.lane.b32.xlu0 %v3320, %s3325
        %v3327 = vpop.permute.xlu0 %3326
        %v3328 = vlaneseq
        %v3329 = vshrl.u32 %v3328, 7
        %v3330 = vsub.s32 1, %v3329
        %v3331 = vrot.slane %v3316, %v3330
        %3333 = vbcast.lane.b32.xlu0 %v3331, 256
        %v3334 = vpop.permute.xlu0 %3333
        %s3336 = sor.u32 256, 8
        %3337 = vbcast.lane.b32.xlu0 %v3331, %s3336
        %v3338 = vpop.permute.xlu0 %3337
        %v3339 = vlaneseq
        %v3340 = vshrl.u32 %v3339, 7
        %v3341 = vsub.s32 2, %v3340
        %v3342 = vrot.slane %v3316, %v3341
        %3344 = vbcast.lane.b32.xlu0 %v3342, 256
        %v3345 = vpop.permute.xlu0 %3344
        %s3347 = sor.u32 256, 8
        %3348 = vbcast.lane.b32.xlu0 %v3342, %s3347
        %v3349 = vpop.permute.xlu0 %3348
        %v3350 = vlaneseq
        %v3351 = vshrl.u32 %v3350, 7
        %v3352 = vsub.s32 3, %v3351
        %v3353 = vrot.slane %v3316, %v3352
        %3355 = vbcast.lane.b32.xlu0 %v3353, 256
        %v3356 = vpop.permute.xlu0 %3355
        %s3358 = sor.u32 256, 8
        %3359 = vbcast.lane.b32.xlu0 %v3353, %s3358
        %v3360 = vpop.permute.xlu0 %3359
        %v3361 = vlaneseq
        %v3362 = vshrl.u32 %v3361, 7
        %v3363 = vsub.s32 4, %v3362
        %v3364 = vrot.slane %v3316, %v3363
        %3366 = vbcast.lane.b32.xlu0 %v3364, 256
        %v3367 = vpop.permute.xlu0 %3366
        %s3369 = sor.u32 256, 8
        %3370 = vbcast.lane.b32.xlu0 %v3364, %s3369
        %v3371 = vpop.permute.xlu0 %3370
        %v3372 = vlaneseq
        %v3373 = vshrl.u32 %v3372, 7
        %v3374 = vsub.s32 5, %v3373
        %v3375 = vrot.slane %v3316, %v3374
        %3377 = vbcast.lane.b32.xlu0 %v3375, 256
        %v3378 = vpop.permute.xlu0 %3377
        %s3380 = sor.u32 256, 8
        %3381 = vbcast.lane.b32.xlu0 %v3375, %s3380
        %v3382 = vpop.permute.xlu0 %3381
        %v3383 = vlaneseq
        %v3384 = vshrl.u32 %v3383, 7
        %v3385 = vsub.s32 6, %v3384
        %v3386 = vrot.slane %v3316, %v3385
        %3388 = vbcast.lane.b32.xlu0 %v3386, 256
        %v3389 = vpop.permute.xlu0 %3388
        %s3391 = sor.u32 256, 8
        %3392 = vbcast.lane.b32.xlu0 %v3386, %s3391
        %v3393 = vpop.permute.xlu0 %3392
        %v3394 = vlaneseq
        %v3395 = vshrl.u32 %v3394, 7
        %v3396 = vsub.s32 7, %v3395
        %v3397 = vrot.slane %v3316, %v3396
        %3399 = vbcast.lane.b32.xlu0 %v3397, 256
        %v3400 = vpop.permute.xlu0 %3399
        %s3402 = sor.u32 256, 8
        %3403 = vbcast.lane.b32.xlu0 %v3397, %s3402
        %v3404 = vpop.permute.xlu0 %3403
        %v3405 = vmul.f32 %v3323, %v534
        %v3406 = vmul.f32 %v3327, %v534
        %v3407 = vmul.f32 %v3334, %v534
        %v3408 = vmul.f32 %v3338, %v534
        %v3409 = vmul.f32 %v3345, %v534
        %v3410 = vmul.f32 %v3349, %v534
        %v3411 = vmul.f32 %v3356, %v534
        %v3412 = vmul.f32 %v3360, %v534
        %v3413 = vmul.f32 %v3367, %v534
        %v3414 = vmul.f32 %v3371, %v534
        %v3415 = vmul.f32 %v3378, %v534
        %v3416 = vmul.f32 %v3382, %v534
        %v3417 = vmul.f32 %v3389, %v534
        %v3418 = vmul.f32 %v3393, %v534
        %v3419 = vmul.f32 %v3400, %v534
        %v3420 = vmul.f32 %v3404, %v534
        %v3421 = vadd.f32 %v3405, 1.0
        %v3422 = vadd.f32 %v3406, 1.0
        %v3423 = vadd.f32 %v3407, 1.0
        %v3424 = vadd.f32 %v3408, 1.0
        %v3425 = vadd.f32 %v3409, 1.0
        %v3426 = vadd.f32 %v3410, 1.0
        %v3427 = vadd.f32 %v3411, 1.0
        %v3428 = vadd.f32 %v3412, 1.0
        %v3429 = vadd.f32 %v3413, 1.0
        %v3430 = vadd.f32 %v3414, 1.0
        %v3431 = vadd.f32 %v3415, 1.0
        %v3432 = vadd.f32 %v3416, 1.0
        %v3433 = vadd.f32 %v3417, 1.0
        %v3434 = vadd.f32 %v3418, 1.0
        %v3435 = vadd.f32 %v3419, 1.0
        %v3436 = vadd.f32 %v3420, 1.0
        %v3437 = vmul.f32 %v3299, %v3421
        %v3438 = vmul.f32 %v3300, %v3422
        %v3439 = vmul.f32 %v3301, %v3423
        %v3440 = vmul.f32 %v3302, %v3424
        %v3441 = vmul.f32 %v3303, %v3425
        %v3442 = vmul.f32 %v3304, %v3426
        %v3443 = vmul.f32 %v3305, %v3427
        %v3444 = vmul.f32 %v3306, %v3428
        %v3445 = vmul.f32 %v3307, %v3429
        %v3446 = vmul.f32 %v3308, %v3430
        %v3447 = vmul.f32 %v3309, %v3431
        %v3448 = vmul.f32 %v3310, %v3432
        %v3449 = vmul.f32 %v3311, %v3433
        %v3450 = vmul.f32 %v3312, %v3434
        %v3451 = vmul.f32 %v3313, %v3435
        %v3452 = vmul.f32 %v3314, %v3436
        %s3453 = scalar_lea.vmem %s229, %s291 [#allocation9]
        %3454 = vst [vmem:[%s3453] sm:$0xff] %v3437
        %3455 = vst [vmem:[%s3453 + $0x8] sm:$0xff] %v3438
        %3456 = vst [vmem:[%s3453 + $0x10] sm:$0xff] %v3439
        %3457 = vst [vmem:[%s3453 + $0x18] sm:$0xff] %v3440
        %3458 = vst [vmem:[%s3453 + $0x20] sm:$0xff] %v3441
        %3459 = vst [vmem:[%s3453 + $0x28] sm:$0xff] %v3442
        %3460 = vst [vmem:[%s3453 + $0x30] sm:$0xff] %v3443
        %3461 = vst [vmem:[%s3453 + $0x38] sm:$0xff] %v3444
        %3462 = vst [vmem:[%s3453 + $0x40] sm:$0xff] %v3445
        %3463 = vst [vmem:[%s3453 + $0x48] sm:$0xff] %v3446
        %3464 = vst [vmem:[%s3453 + $0x50] sm:$0xff] %v3447
        %3465 = vst [vmem:[%s3453 + $0x58] sm:$0xff] %v3448
        %3466 = vst [vmem:[%s3453 + $0x60] sm:$0xff] %v3449
        %3467 = vst [vmem:[%s3453 + $0x68] sm:$0xff] %v3450
        %3468 = vst [vmem:[%s3453 + $0x70] sm:$0xff] %v3451
        %3469 = vst [vmem:[%s3453 + $0x78] sm:$0xff] %v3452
        %s3470 = sand.u32 %s119, 1
        %s3471 = scalar_lea.sflag [#allocation6], %s3470
        %s3472 = sand.u32 %s119, 1
        %s3473 = smul.addr %s3472, 256
        %s3474 = scalar_lea.vmem [#allocation9], %s3473
        // Predicated region
        $region45: #{tpu_custom_call.1} parent=35 // pred_check
          %p3475 = pneg %p129
        $region46: #{tpu_custom_call.1} parent=35 // pred_check_branch
          %3477 = sbr.rel (%p3475) target = $region48
        $region47: #{tpu_custom_call.1} parent=35 // pred_region
          %s3479 = ssub.s32 4096, 4096
          %3480 = vsyncadd %s3471, %s3479
          %s3481 = smul.addr %s22, 32
          %s3482 = smul.addr %s3481, 128
          %s3483 = scalar_lea.hbm %s4, %s3482
          %s3484 = sshll.u32 %s3474, 4
          %s3485 = int_to_ptr.vmem [resolvable:$true] %s3484
          %3490 = dma.vmem_to_hbm [thread:$0]  %s3485, 4096, %s3483, %s3471, 128, 128, 8
        $region48: #{tpu_custom_call.1} parent=35 // pred_fallthru
          _
      $region36: #{tpu_custom_call.1} parent=5 // pred_fallthru
        _
      %p3491 = scmp.le.s32.totalorder 2, %s17
      // Predicated region
      $region49: #{tpu_custom_call.1} parent=5 // pred_check
        %p3492 = pneg %p3491
      $region50: #{tpu_custom_call.1} parent=5 // pred_check_branch
        %3494 = sbr.rel (%p3492) target = $region52
      $region51: #{tpu_custom_call.1} parent=5 // pred_region
        %s3495 = ssub.s32 %s17, 2
        // Predicated region
        $region53: #{tpu_custom_call.1} parent=51 // pred_check
          %p3496 = pneg %p135
        $region54: #{tpu_custom_call.1} parent=51 // pred_check_branch
          %3498 = sbr.rel (%p3496) target = $region56
        $region55: #{tpu_custom_call.1} parent=51 // pred_region
          %s3499 = sand.u32 %s120, 1
          %s3500 = scalar_lea.sflag [#allocation6], %s3499
          %s3501 = sand.u32 %s120, 1
          %s3502 = smul.addr %s3501, 256
          %s3503 = scalar_lea.vmem [#allocation9], %s3502
          %3504 = dma.done %s3500, 4096
        $region56: #{tpu_custom_call.1} parent=51 // pred_fallthru
          _
      $region52: #{tpu_custom_call.1} parent=5 // pred_fallthru
        _
    $region6: #{tpu_custom_call.1} parent=1 // loop_footer
      %s21 = sadd.s32 1, %s17
    $region7: #{tpu_custom_call.1} parent=1 // loop_footer_branch
      %16 = sbr.rel target = $region3
    $region8: #{tpu_custom_call.1} parent=1 // loop_exit
      _
    %3505 = vsyncpa [#allocation5], 1
    %s3506 = scalar_lea.sflag [#allocation5], 1
    %3507 = vsyncpa %s3506, 1
    %3508 = vsyncpa [#allocation6], 1
    %s3509 = scalar_lea.sflag [#allocation6], 1
    %3510 = vsyncpa %s3509, 1
    %3511 = vsyncpa [#allocation7], 1
    %s3512 = scalar_lea.sflag [#allocation7], 1
    %3513 = vsyncpa %s3512, 1

</llo_original>
